<compile_context>
chip_gen: v7x
topology: tpu7x:2x2x1
jax: 0.10.0
libtpu: 0.0.40
codegen_flags: <defaults>
</compile_context>

<pallas_src>
import functools

import jax
import jax.numpy as jnp
from jax.experimental import pallas as pl
from jax.experimental.pallas import tpu as pltpu

BP = 8      # padded batch rows   (one sublane tile)
HP = 128    # padded hidden lanes (one vreg width)
VP = 128    # padded vocab lanes
OW = 128    # output slab lane width


# ----------------------------------------------------------------------------
# helpers
# ----------------------------------------------------------------------------
def _const_spec(shape):
    zeros = (0,) * len(shape)
    return pl.BlockSpec(tuple(shape), lambda p, _z=zeros: _z)


def _dotf(a, b):
    """bf16 MXU matmul with f32 accumulation."""
    return jnp.dot(a.astype(jnp.bfloat16), b.astype(jnp.bfloat16),
                   preferred_element_type=jnp.float32)


def _segsum(x, steps):
    """x: (steps*BP, W) with rows ordered (t, b).  Per-batch sums -> (BP, W)."""
    acc = x[0:BP, :]
    for t in range(1, steps):
        acc = acc + x[t * BP:(t + 1) * BP, :]
    return acc


# ----------------------------------------------------------------------------
# fused kernel: program 0 = Confidence head, program 1 = VAE path
# ----------------------------------------------------------------------------
def _make_fused_kernel(B, Lm1, Tm1, V, layers):
    H3 = 3 * HP

    def nll_rows(logits, tok):
        # PyTorch Model.loss_fn: p = exp(x) / (sum exp(x) + 1e-6);
        # p[:, V-1] = 1; nll = -log(p[target]) — computed exactly via LSE.
        m = jnp.max(logits, axis=-1, keepdims=True)
        s = jnp.sum(jnp.exp(logits - m), axis=-1, keepdims=True)
        log_denom = m + jnp.log(s + 1e-6 * jnp.exp(-m))
        col = jax.lax.broadcasted_iota(jnp.int32, logits.shape, 1)
        x_t = jnp.sum(jnp.where(col == tok, logits, 0.0), axis=-1, keepdims=True)
        nll = log_denom - x_t
        return jnp.where(tok == V - 1, 0.0, nll)      # forced p[:, V-1] = 1

    def kernel(conf_x_ref, conf_tok_ref, conf_mask_ref, conf_w_ref, conf_b_ref,
               conf_pw_ref, conf_pb_ref,
               src_ref, dec_ref, lbl_ref, sdt_ref,
               gwi_ref, gwh_ref, gbi_ref, gbh_ref,
               lw_ref, lb_ref, pw_ref, pb_ref,
               out_ref,
               enc_scr, dec_scr, sd_scr):
        p = pl.program_id(0)
        cols = jax.lax.broadcasted_iota(jnp.int32, (BP, OW), 1)
        out_ref[...] = jnp.zeros_like(out_ref)

        # ------------------ program 0: Confidence(src) head -----------------
        @pl.when(p == 0)
        def _confidence():
            x = conf_x_ref[...]                                   # (Lm1*BP, HP)
            mean = _dotf(x, conf_w_ref[0]) + conf_b_ref[0]
            logv = _dotf(x, conf_w_ref[1]) + conf_b_ref[1]
            h = _dotf(mean, conf_w_ref[2]) + conf_b_ref[2]        # z = mean
            logits = _dotf(h, conf_pw_ref[...]) + conf_pb_ref[...]
            m = jnp.max(logits, axis=-1, keepdims=True)
            lse = m + jnp.log(jnp.sum(jnp.exp(logits - m), axis=-1, keepdims=True))
            ccol = jax.lax.broadcasted_iota(jnp.int32, logits.shape, 1)
            tok = conf_tok_ref[...]
            x_t = jnp.sum(jnp.where(ccol == tok, logits, 0.0),
                          axis=-1, keepdims=True)
            conf = lse - x_t                                      # -log softmax
            kl = -0.5 * jnp.sum(1.0 + logv - mean * mean - jnp.exp(logv),
                                axis=-1, keepdims=True)
            combined = conf + conf_mask_ref[...] * kl             # (Lm1*BP, 1)
            per_b = _segsum(combined, Lm1)                        # (BP, 1)
            out_ref[...] = jnp.where(cols == 0, per_b, 0.0)

        # --------------------------- program 1: VAE -------------------------
        @pl.when(p == 1)
        def _vae():
            def run_gru(layer_in, steps, h0, stack, out_scr):
                """layer_in: (steps*BP, HP) time-major; outputs -> out_scr."""
                h_last = h0
                for l in range(layers):
                    idx = stack * layers + l
                    wi = gwi_ref[idx]                             # (HP, 3HP) bf16
                    wh = gwh_ref[idx]
                    # hoisted input projection: one matmul over all steps
                    xg_all = _dotf(layer_in, wi) + gbi_ref[idx]   # (steps*BP, 3HP)
                    bh = jnp.broadcast_to(gbh_ref[idx], (BP, H3))  # hoisted bcast
                    h = h0  # TODO(synk): per-layer h0 slice for layer_rnn > 1
                    for t in range(steps):                        # unrolled
                        xg = xg_all[t * BP:(t + 1) * BP, :]       # tile aligned
                        hp = _dotf(h, wh) + bh
                        r = jax.nn.sigmoid(xg[:, 0:HP] + hp[:, 0:HP])
                        z = jax.nn.sigmoid(xg[:, HP:2 * HP] + hp[:, HP:2 * HP])
                        n = jnp.tanh(xg[:, 2 * HP:H3] + r * hp[:, 2 * HP:H3])
                        h = (1.0 - z) * n + z * h
                        out_scr[t * BP:(t + 1) * BP, :] = h
                    h_last = h
                    if l + 1 < layers:
                        layer_in = out_scr[...]
                return h_last

            src_x = src_ref[...]                                  # (2*BP, HP)
            h0 = jnp.zeros((BP, HP), jnp.float32)

            # encoder over the 2-token SD sequence
            h_enc = run_gru(src_x, 2, h0, 0, enc_scr)

            # VAE latent (z = mean, eps = 0)
            mean = _dotf(h_enc, lw_ref[0]) + lb_ref[0]
            logv = _dotf(h_enc, lw_ref[1]) + lb_ref[1]
            kl_b = -0.5 * jnp.sum(1.0 + logv - mean * mean - jnp.exp(logv),
                                  axis=-1, keepdims=True)         # (BP, 1)
            zh = _dotf(mean, lw_ref[2]) + lb_ref[2]               # (BP, HP)

            # decoder over trg[:, :-1] and sd decoder over the SD sequence
            run_gru(dec_ref[...], Tm1, zh, 1, dec_scr)
            run_gru(src_x, 2, zh, 2, sd_scr)

            # single batched projection + NLL per head
            dec_logits = _dotf(dec_scr[...], pw_ref[0]) + pb_ref[0]
            dec_nll = nll_rows(dec_logits, lbl_ref[...])          # (Tm1*BP, 1)
            nll_b = _segsum(dec_nll, Tm1)                         # (BP, 1)

            sd_logits = _dotf(sd_scr[...], pw_ref[1]) + pb_ref[1]
            sd_nll = 0.1 * nll_rows(sd_logits, sdt_ref[...])      # (2*BP, 1)
            sd_per_b = _segsum(sd_nll, 2)                         # (BP, 1)
            ridx = jax.lax.broadcasted_iota(jnp.int32, (BP, 1), 0)
            sd_total = jnp.sum(jnp.where(ridx < B, sd_per_b, 0.0),
                               axis=0, keepdims=True)             # (1, 1)
            sd_mean = sd_total * (1.0 / (2.0 * B))

            out_ref[...] = (jnp.where(cols == 0, nll_b, 0.0)
                            + jnp.where(cols == 1, kl_b, 0.0)
                            + jnp.where(cols == 2, sd_mean, 0.0))

    return kernel


# ----------------------------------------------------------------------------
# Forward pass of Model (CausalTAD)
# ----------------------------------------------------------------------------
def model_forward(params, src, trg, src_lengths, trg_lengths,
                  *, label_num, hidden_size, layer_rnn):
    B, L = src.shape
    T = trg.shape[1]
    Lm1, Tm1 = L - 1, T - 1
    V = label_num
    assert B <= BP and hidden_size <= HP and label_num <= VP
    assert Tm1 - 1 == Lm1, "Model.forward mask assumes trg = src plus BOS token"

    src = src.astype(jnp.int32)
    trg = trg.astype(jnp.int32)
    src_lengths = src_lengths.astype(jnp.int32)
    trg_lengths = trg_lengths.astype(jnp.int32)

    # -------- Model.forward token glue (unpadded) --------
    cond_trg = src[jnp.arange(B), src_lengths - 1][:, None]
    cond_src = src[:, 0][:, None]
    sd = jnp.concatenate([cond_src, cond_trg], axis=-1)           # (B, 2)
    label = trg[:, 1:]                                            # (B, Tm1)
    conf_tok = src[:, 1:]                                         # (B, Lm1)
    mask = (jnp.arange(Tm1 - 1)[None, :] <
            (trg_lengths[:, None] - 2)).astype(jnp.float32)       # (B, Lm1)

    # -------- pad batch to BP rows (token 0 / zero mask for pad rows) --------
    pad = ((0, BP - B), (0, 0))
    sd_p = jnp.pad(sd, pad)
    trg_p = jnp.pad(trg, pad)
    label_p = jnp.pad(label, pad)
    conf_tok_p = jnp.pad(conf_tok, pad)
    mask_p = jnp.pad(mask, pad)

    # -------- embedding gathers (XLA) + time-major flatten --------
    cp, vp = params['conf'], params['vae']
    conf_emb = jnp.take(cp['embedding'], conf_tok_p, axis=0)          # (BP,Lm1,HP)
    src_emb = jnp.take(params['road_embedding'], sd_p, axis=0)        # (BP,2,HP)
    dec_emb = jnp.take(params['road_embedding'], trg_p[:, :-1], axis=0)  # (BP,Tm1,HP)

    conf_x = jnp.transpose(conf_emb, (1, 0, 2)).reshape(Lm1 * BP, HP)
    src_x = jnp.transpose(src_emb, (1, 0, 2)).reshape(2 * BP, HP)
    dec_x = jnp.transpose(dec_emb, (1, 0, 2)).reshape(Tm1 * BP, HP)
    conf_tok_f = conf_tok_p.T.reshape(Lm1 * BP, 1)
    mask_f = mask_p.T.reshape(Lm1 * BP, 1)
    label_f = label_p.T.reshape(Tm1 * BP, 1)
    sd_f = sd_p.T.reshape(2 * BP, 1)

    inputs = [conf_x, conf_tok_f, mask_f, cp['w'], cp['b'], cp['w_proj'],
              cp['b_proj'],
              src_x, dec_x, label_f, sd_f,
              vp['gru_wi'], vp['gru_wh'], vp['gru_bi'], vp['gru_bh'],
              vp['lat_w'], vp['lat_b'], params['proj_w'], params['proj_b']]

    out = pl.pallas_call(
        _make_fused_kernel(B, Lm1, Tm1, V, layer_rnn),
        grid=(2,),
        in_specs=[_const_spec(tuple(x.shape)) for x in inputs],
        out_shape=jax.ShapeDtypeStruct((2 * BP, OW), jnp.float32),
        out_specs=pl.BlockSpec((BP, OW), lambda p: (p, 0)),
        scratch_shapes=[pltpu.VMEM((2 * BP, HP), jnp.float32),     # encoder outs
                        pltpu.VMEM((Tm1 * BP, HP), jnp.float32),   # decoder outs
                        pltpu.VMEM((2 * BP, HP), jnp.float32)],    # sd-dec outs
        compiler_params=pltpu.CompilerParams(
            dimension_semantics=("parallel",),
            vmem_limit_bytes=32 * 1024 * 1024),
    )(*inputs)

    conf_term = out[0:B, 0]            # confidence.sum + masked kl sum   (B,)
    nll_sum = out[BP:BP + B, 0]        # nll_loss.sum(dim=-1)             (B,)
    kl_loss = out[BP:BP + B, 1]        # kl_loss                          (B,)
    sd_mean = out[BP, 2]               # 0.1 * sd_nll_loss.mean()         ()
    return nll_sum, kl_loss, conf_term, sd_mean


# ----------------------------------------------------------------------------
# Deterministic synthetic parameters (pre-padded to HP/VP lanes)
# ----------------------------------------------------------------------------
def _pad2(x, rows, cols, fill=0.0):
    return jnp.pad(x, ((0, rows - x.shape[0]), (0, cols - x.shape[1])),
                   constant_values=fill)


def init_params(key, hidden_size, layer_rnn, label_num):
    H, V = hidden_size, label_num
    keys = iter(jax.random.split(key, 64))

    def w(shape, scale=0.1):
        return (scale * jax.random.normal(next(keys), shape)).astype(jnp.float32)

    def gru_mat():
        m = jnp.zeros((HP, 3 * HP), jnp.float32)
        for g in range(3):                              # gate order r | z | n
            m = m.at[:H, g * HP:g * HP + H].set(w((H, H)))
        return m

    def gru_bias():
        b = jnp.zeros((1, 3 * HP), jnp.float32)
        for g in range(3):
            b = b.at[:, g * HP:g * HP + H].set(w((1, H)))
        return b

    def proj_bias():                                    # pad lanes -> -1e30 (exp->0)
        return jnp.pad(w((1, V)), ((0, 0), (0, VP - V)), constant_values=-1e30)

    n = 3 * layer_rnn                                   # encoder|decoder|sd stacks
    conf = {
        'embedding': _pad2(w((V, H)), V, HP),
        'w': jnp.stack([_pad2(w((H, H)), HP, HP)
                        for _ in range(3)]).astype(jnp.bfloat16),  # mean|logv|l2h
        'b': jnp.stack([_pad2(w((1, H)), 1, HP) for _ in range(3)]),
        'w_proj': _pad2(w((H, V)), HP, VP).astype(jnp.bfloat16),
        'b_proj': proj_bias(),
    }
    vae = {
        'gru_wi': jnp.stack([gru_mat() for _ in range(n)]).astype(jnp.bfloat16),
        'gru_wh': jnp.stack([gru_mat() for _ in range(n)]).astype(jnp.bfloat16),
        'gru_bi': jnp.stack([gru_bias() for _ in range(n)]),
        'gru_bh': jnp.stack([gru_bias() for _ in range(n)]),
        'lat_w': jnp.stack([_pad2(w((H, H)), HP, HP)
                            for _ in range(3)]).astype(jnp.bfloat16),
        'lat_b': jnp.stack([_pad2(w((1, H)), 1, HP) for _ in range(3)]),
    }
    return {
        'conf': conf,
        'vae': vae,
        'road_embedding': _pad2(w((V, H)), V, HP),
        'proj_w': jnp.stack([_pad2(w((H, V)), HP, VP)
                             for _ in range(2)]).astype(jnp.bfloat16),  # proj|sd
        'proj_b': jnp.stack([proj_bias() for _ in range(2)]),
    }


# ----------------------------------------------------------------------------
if __name__ == "__main__":
    B, L, H, V, layer_rnn = 2, 8, 32, 16, 1
    T = L + 1                            # trg has one extra (BOS) token vs src

    key = jax.random.PRNGKey(0)
    kp, ks, kt = jax.random.split(key, 3)
    params = init_params(kp, H, layer_rnn, V)

    src = jax.random.randint(ks, (B, L), 0, V, dtype=jnp.int32)
    trg = jax.random.randint(kt, (B, T), 0, V, dtype=jnp.int32)
    src_lengths = jnp.full((B,), L, dtype=jnp.int32)
    trg_lengths = jnp.full((B,), T, dtype=jnp.int32)

    fwd = jax.jit(functools.partial(model_forward, label_num=V,
                                    hidden_size=H, layer_rnn=layer_rnn))
    outs = jax.block_until_ready(fwd(params, src, trg, src_lengths, trg_lengths))

    nll_sum, kl_loss, conf_sum, sd_mean = outs
    assert nll_sum.shape == (B,) and kl_loss.shape == (B,) and conf_sum.shape == (B,)
    assert sd_mean.shape == ()
    assert all(bool(jnp.all(jnp.isfinite(o))) for o in outs)
    print("KERNEL_OK")
</pallas_src>

<mosaic_0001>
module attributes {stable_mosaic.version = 11 : i64} {
  func.func @kernel(%arg0: i32, %arg1: memref<56x128xf32, #tpu.memory_space<vmem>>, %arg2: memref<56x1xi32, #tpu.memory_space<vmem>>, %arg3: memref<56x1xf32, #tpu.memory_space<vmem>>, %arg4: memref<3x128x128xbf16, #tpu.memory_space<vmem>>, %arg5: memref<3x1x128xf32, #tpu.memory_space<vmem>>, %arg6: memref<128x128xbf16, #tpu.memory_space<vmem>>, %arg7: memref<1x128xf32, #tpu.memory_space<vmem>>, %arg8: memref<16x128xf32, #tpu.memory_space<vmem>>, %arg9: memref<64x128xf32, #tpu.memory_space<vmem>>, %arg10: memref<64x1xi32, #tpu.memory_space<vmem>>, %arg11: memref<16x1xi32, #tpu.memory_space<vmem>>, %arg12: memref<3x128x384xbf16, #tpu.memory_space<vmem>>, %arg13: memref<3x128x384xbf16, #tpu.memory_space<vmem>>, %arg14: memref<3x1x384xf32, #tpu.memory_space<vmem>>, %arg15: memref<3x1x384xf32, #tpu.memory_space<vmem>>, %arg16: memref<3x128x128xbf16, #tpu.memory_space<vmem>>, %arg17: memref<3x1x128xf32, #tpu.memory_space<vmem>>, %arg18: memref<2x128x128xbf16, #tpu.memory_space<vmem>>, %arg19: memref<2x1x128xf32, #tpu.memory_space<vmem>>, %arg20: memref<8x128xf32, #tpu.memory_space<vmem>>, %arg21: memref<16x128xf32, #tpu.memory_space<vmem>>, %arg22: memref<64x128xf32, #tpu.memory_space<vmem>>, %arg23: memref<16x128xf32, #tpu.memory_space<vmem>>) attributes {dimension_semantics = [#tpu.dimension_semantics<parallel>], iteration_bounds = array<i64: 2>, scalar_prefetch = 0 : i64, scratch_operands = 3 : i64, tpu.core_type = #tpu.core_type<tc>, window_params = [{pipeline_mode = #tpu.pipeline_mode<synchronous>, transform_indices = @transform_0, window_bounds = array<i64: 56, 128>}, {pipeline_mode = #tpu.pipeline_mode<synchronous>, transform_indices = @transform_1, window_bounds = array<i64: 56, 1>}, {pipeline_mode = #tpu.pipeline_mode<synchronous>, transform_indices = @transform_2, window_bounds = array<i64: 56, 1>}, {pipeline_mode = #tpu.pipeline_mode<synchronous>, transform_indices = @transform_3, window_bounds = array<i64: 3, 128, 128>}, {pipeline_mode = #tpu.pipeline_mode<synchronous>, transform_indices = @transform_4, window_bounds = array<i64: 3, 1, 128>}, {pipeline_mode = #tpu.pipeline_mode<synchronous>, transform_indices = @transform_5, window_bounds = array<i64: 128, 128>}, {pipeline_mode = #tpu.pipeline_mode<synchronous>, transform_indices = @transform_6, window_bounds = array<i64: 1, 128>}, {pipeline_mode = #tpu.pipeline_mode<synchronous>, transform_indices = @transform_7, window_bounds = array<i64: 16, 128>}, {pipeline_mode = #tpu.pipeline_mode<synchronous>, transform_indices = @transform_8, window_bounds = array<i64: 64, 128>}, {pipeline_mode = #tpu.pipeline_mode<synchronous>, transform_indices = @transform_9, window_bounds = array<i64: 64, 1>}, {pipeline_mode = #tpu.pipeline_mode<synchronous>, transform_indices = @transform_10, window_bounds = array<i64: 16, 1>}, {pipeline_mode = #tpu.pipeline_mode<synchronous>, transform_indices = @transform_11, window_bounds = array<i64: 3, 128, 384>}, {pipeline_mode = #tpu.pipeline_mode<synchronous>, transform_indices = @transform_12, window_bounds = array<i64: 3, 128, 384>}, {pipeline_mode = #tpu.pipeline_mode<synchronous>, transform_indices = @transform_13, window_bounds = array<i64: 3, 1, 384>}, {pipeline_mode = #tpu.pipeline_mode<synchronous>, transform_indices = @transform_14, window_bounds = array<i64: 3, 1, 384>}, {pipeline_mode = #tpu.pipeline_mode<synchronous>, transform_indices = @transform_15, window_bounds = array<i64: 3, 128, 128>}, {pipeline_mode = #tpu.pipeline_mode<synchronous>, transform_indices = @transform_16, window_bounds = array<i64: 3, 1, 128>}, {pipeline_mode = #tpu.pipeline_mode<synchronous>, transform_indices = @transform_17, window_bounds = array<i64: 2, 128, 128>}, {pipeline_mode = #tpu.pipeline_mode<synchronous>, transform_indices = @transform_18, window_bounds = array<i64: 2, 1, 128>}, {transform_indices = @transform_19, window_bounds = array<i64: 8, 128>}]} {
    %0 = tpu.iota {dimensions = array<i32: 1>} : vector<8x128xi32>
    %cst = arith.constant 0.000000e+00 : f32
    %1 = vector.broadcast %cst : f32 to vector<8x128xf32>
    %c0 = arith.constant 0 : index
    %c0_0 = arith.constant 0 : index
    %2 = vector.load %arg20[%c0, %c0_0] : memref<8x128xf32, #tpu.memory_space<vmem>>, vector<8x128xf32>
    tpu.vector_store %arg20[%c0, %c0_0], %1 {strides = array<i32>} : memref<8x128xf32, #tpu.memory_space<vmem>>, vector<8x128xf32>,
    %c0_i32 = arith.constant 0 : i32
    %3 = arith.cmpi eq, %arg0, %c0_i32 : i32
    %4 = arith.extui %3 : i1 to i32
    %c0_i32_1 = arith.constant 0 : i32
    %5 = arith.cmpi ne, %4, %c0_i32_1 : i32
    scf.if %5 {
      %c0_3 = arith.constant 0 : index
      %c0_4 = arith.constant 0 : index
      %9 = vector.load %arg1[%c0_3, %c0_4] : memref<56x128xf32, #tpu.memory_space<vmem>>, vector<56x128xf32>
      %c0_5 = arith.constant 0 : index
      %c0_6 = arith.constant 0 : index
      %c0_7 = arith.constant 0 : index
      %10 = vector.load %arg4[%c0_5, %c0_6, %c0_7] : memref<3x128x128xbf16, #tpu.memory_space<vmem>>, vector<1x128x128xbf16>
      %11 = vector.shape_cast %10 : vector<1x128x128xbf16> to vector<128x128xbf16>
      %12 = arith.truncf %9 : vector<56x128xf32> to vector<56x128xbf16>
      %cst_8 = arith.constant dense<0.000000e+00> : vector<56x128xf32>
      %13 = tpu.matmul %12, %11, %cst_8 {dimension_numbers = #tpu.dot_dimension_numbers<[1], [0], [0], [1], [0, 0, 1, 1], [], []>} : vector<56x128xbf16>, vector<128x128xbf16>, vector<56x128xf32> -> vector<56x128xf32>
      %c0_9 = arith.constant 0 : index
      %c0_10 = arith.constant 0 : index
      %c0_11 = arith.constant 0 : index
      %14 = vector.load %arg5[%c0_9, %c0_10, %c0_11] : memref<3x1x128xf32, #tpu.memory_space<vmem>>, vector<1x1x128xf32>
      %15 = vector.shape_cast %14 : vector<1x1x128xf32> to vector<1x128xf32>
      %16 = vector.broadcast %15 : vector<1x128xf32> to vector<56x128xf32>
      %17 = arith.addf %13, %16 : vector<56x128xf32>
      %c1 = arith.constant 1 : index
      %c0_12 = arith.constant 0 : index
      %c0_13 = arith.constant 0 : index
      %18 = vector.load %arg4[%c1, %c0_12, %c0_13] : memref<3x128x128xbf16, #tpu.memory_space<vmem>>, vector<1x128x128xbf16>
      %19 = vector.shape_cast %18 : vector<1x128x128xbf16> to vector<128x128xbf16>
      %20 = arith.truncf %9 : vector<56x128xf32> to vector<56x128xbf16>
      %cst_14 = arith.constant dense<0.000000e+00> : vector<56x128xf32>
      %21 = tpu.matmul %20, %19, %cst_14 {dimension_numbers = #tpu.dot_dimension_numbers<[1], [0], [0], [1], [0, 0, 1, 1], [], []>} : vector<56x128xbf16>, vector<128x128xbf16>, vector<56x128xf32> -> vector<56x128xf32>
      %c1_15 = arith.constant 1 : index
      %c0_16 = arith.constant 0 : index
      %c0_17 = arith.constant 0 : index
      %22 = vector.load %arg5[%c1_15, %c0_16, %c0_17] : memref<3x1x128xf32, #tpu.memory_space<vmem>>, vector<1x1x128xf32>
      %23 = vector.shape_cast %22 : vector<1x1x128xf32> to vector<1x128xf32>
      %24 = vector.broadcast %23 : vector<1x128xf32> to vector<56x128xf32>
      %25 = arith.addf %21, %24 : vector<56x128xf32>
      %c2 = arith.constant 2 : index
      %c0_18 = arith.constant 0 : index
      %c0_19 = arith.constant 0 : index
      %26 = vector.load %arg4[%c2, %c0_18, %c0_19] : memref<3x128x128xbf16, #tpu.memory_space<vmem>>, vector<1x128x128xbf16>
      %27 = vector.shape_cast %26 : vector<1x128x128xbf16> to vector<128x128xbf16>
      %28 = arith.truncf %17 : vector<56x128xf32> to vector<56x128xbf16>
      %cst_20 = arith.constant dense<0.000000e+00> : vector<56x128xf32>
      %29 = tpu.matmul %28, %27, %cst_20 {dimension_numbers = #tpu.dot_dimension_numbers<[1], [0], [0], [1], [0, 0, 1, 1], [], []>} : vector<56x128xbf16>, vector<128x128xbf16>, vector<56x128xf32> -> vector<56x128xf32>
      %c2_21 = arith.constant 2 : index
      %c0_22 = arith.constant 0 : index
      %c0_23 = arith.constant 0 : index
      %30 = vector.load %arg5[%c2_21, %c0_22, %c0_23] : memref<3x1x128xf32, #tpu.memory_space<vmem>>, vector<1x1x128xf32>
      %31 = vector.shape_cast %30 : vector<1x1x128xf32> to vector<1x128xf32>
      %32 = vector.broadcast %31 : vector<1x128xf32> to vector<56x128xf32>
      %33 = arith.addf %29, %32 : vector<56x128xf32>
      %c0_24 = arith.constant 0 : index
      %c0_25 = arith.constant 0 : index
      %34 = vector.load %arg6[%c0_24, %c0_25] : memref<128x128xbf16, #tpu.memory_space<vmem>>, vector<128x128xbf16>
      %35 = arith.truncf %33 : vector<56x128xf32> to vector<56x128xbf16>
      %cst_26 = arith.constant dense<0.000000e+00> : vector<56x128xf32>
      %36 = tpu.matmul %35, %34, %cst_26 {dimension_numbers = #tpu.dot_dimension_numbers<[1], [0], [0], [1], [0, 0, 1, 1], [], []>} : vector<56x128xbf16>, vector<128x128xbf16>, vector<56x128xf32> -> vector<56x128xf32>
      %c0_27 = arith.constant 0 : index
      %c0_28 = arith.constant 0 : index
      %37 = vector.load %arg7[%c0_27, %c0_28] : memref<1x128xf32, #tpu.memory_space<vmem>>, vector<1x128xf32>
      %38 = vector.broadcast %37 : vector<1x128xf32> to vector<56x128xf32>
      %39 = arith.addf %36, %38 : vector<56x128xf32>
      %cst_29 = arith.constant dense<0xFF800000> : vector<56xf32>
      %40 = vector.multi_reduction <maximumf>, %39, %cst_29 [1] : vector<56x128xf32> to vector<56xf32>
      %41 = vector.shape_cast %40 : vector<56xf32> to vector<56x1xf32>
      %42 = vector.broadcast %41 : vector<56x1xf32> to vector<56x128xf32>
      %43 = arith.subf %39, %42 : vector<56x128xf32>
      %44 = math.exp %43 : vector<56x128xf32>
      %cst_30 = arith.constant dense<0.000000e+00> : vector<56xf32>
      %45 = vector.multi_reduction <add>, %44, %cst_30 [1] : vector<56x128xf32> to vector<56xf32>
      %46 = vector.shape_cast %45 : vector<56xf32> to vector<56x1xf32>
      %47 = math.log %46 : vector<56x1xf32>
      %48 = arith.addf %41, %47 : vector<56x1xf32>
      %49 = tpu.iota {dimensions = array<i32: 1>} : vector<56x128xi32>
      %c0_31 = arith.constant 0 : index
      %c0_32 = arith.constant 0 : index
      %50 = vector.load %arg2[%c0_31, %c0_32] : memref<56x1xi32, #tpu.memory_space<vmem>>, vector<56x1xi32>
      %51 = vector.broadcast %50 : vector<56x1xi32> to vector<56x128xi32>
      %52 = arith.cmpi eq, %49, %51 : vector<56x128xi32>
      %cst_33 = arith.constant 0.000000e+00 : f32
      %53 = vector.broadcast %cst_33 : f32 to vector<56x128xf32>
      %54 = arith.select %52, %39, %53 : vector<56x128xi1>, vector<56x128xf32>
      %cst_34 = arith.constant dense<0.000000e+00> : vector<56xf32>
      %55 = vector.multi_reduction <add>, %54, %cst_34 [1] : vector<56x128xf32> to vector<56xf32>
      %56 = vector.shape_cast %55 : vector<56xf32> to vector<56x1xf32>
      %57 = arith.subf %48, %56 : vector<56x1xf32>
      %cst_35 = arith.constant 1.000000e+00 : f32
      %58 = vector.broadcast %cst_35 : f32 to vector<56x128xf32>
      %59 = arith.addf %58, %25 : vector<56x128xf32>
      %60 = arith.mulf %17, %17 : vector<56x128xf32>
      %61 = arith.subf %59, %60 : vector<56x128xf32>
      %62 = math.exp %25 : vector<56x128xf32>
      %63 = arith.subf %61, %62 : vector<56x128xf32>
      %cst_36 = arith.constant dense<0.000000e+00> : vector<56xf32>
      %64 = vector.multi_reduction <add>, %63, %cst_36 [1] : vector<56x128xf32> to vector<56xf32>
      %65 = vector.shape_cast %64 : vector<56xf32> to vector<56x1xf32>
      %cst_37 = arith.constant -5.000000e-01 : f32
      %66 = vector.broadcast %cst_37 : f32 to vector<56x1xf32>
      %67 = arith.mulf %66, %65 : vector<56x1xf32>
      %c0_38 = arith.constant 0 : index
      %c0_39 = arith.constant 0 : index
      %68 = vector.load %arg3[%c0_38, %c0_39] : memref<56x1xf32, #tpu.memory_space<vmem>>, vector<56x1xf32>
      %69 = arith.mulf %68, %67 : vector<56x1xf32>
      %70 = arith.addf %57, %69 : vector<56x1xf32>
      %71 = vector.extract_strided_slice %70 {offsets = [0, 0], sizes = [8, 1], strides = [1, 1]} : vector<56x1xf32> to vector<8x1xf32>
      %72 = vector.extract_strided_slice %70 {offsets = [8, 0], sizes = [8, 1], strides = [1, 1]} : vector<56x1xf32> to vector<8x1xf32>
      %73 = arith.addf %71, %72 : vector<8x1xf32>
      %74 = vector.extract_strided_slice %70 {offsets = [16, 0], sizes = [8, 1], strides = [1, 1]} : vector<56x1xf32> to vector<8x1xf32>
      %75 = arith.addf %73, %74 : vector<8x1xf32>
      %76 = vector.extract_strided_slice %70 {offsets = [24, 0], sizes = [8, 1], strides = [1, 1]} : vector<56x1xf32> to vector<8x1xf32>
      %77 = arith.addf %75, %76 : vector<8x1xf32>
      %78 = vector.extract_strided_slice %70 {offsets = [32, 0], sizes = [8, 1], strides = [1, 1]} : vector<56x1xf32> to vector<8x1xf32>
      %79 = arith.addf %77, %78 : vector<8x1xf32>
      %80 = vector.extract_strided_slice %70 {offsets = [40, 0], sizes = [8, 1], strides = [1, 1]} : vector<56x1xf32> to vector<8x1xf32>
      %81 = arith.addf %79, %80 : vector<8x1xf32>
      %82 = vector.extract_strided_slice %70 {offsets = [48, 0], sizes = [8, 1], strides = [1, 1]} : vector<56x1xf32> to vector<8x1xf32>
      %83 = arith.addf %81, %82 : vector<8x1xf32>
      %c0_i32_40 = arith.constant 0 : i32
      %84 = vector.broadcast %c0_i32_40 : i32 to vector<8x128xi32>
      %85 = arith.cmpi eq, %0, %84 : vector<8x128xi32>
      %cst_41 = arith.constant 0.000000e+00 : f32
      %86 = vector.shape_cast %83 : vector<8x1xf32> to vector<8x1xf32>
      %87 = vector.broadcast %86 : vector<8x1xf32> to vector<8x128xf32>
      %88 = vector.broadcast %cst_41 : f32 to vector<8x128xf32>
      %89 = arith.select %85, %87, %88 : vector<8x128xi1>, vector<8x128xf32>
      %c0_42 = arith.constant 0 : index
      %c0_43 = arith.constant 0 : index
      %90 = vector.load %arg20[%c0_42, %c0_43] : memref<8x128xf32, #tpu.memory_space<vmem>>, vector<8x128xf32>
      tpu.vector_store %arg20[%c0_42, %c0_43], %89 {strides = array<i32>} : memref<8x128xf32, #tpu.memory_space<vmem>>, vector<8x128xf32>,
    } else {
    }
    %c1_i32 = arith.constant 1 : i32
    %6 = arith.cmpi eq, %arg0, %c1_i32 : i32
    %7 = arith.extui %6 : i1 to i32
    %c0_i32_2 = arith.constant 0 : i32
    %8 = arith.cmpi ne, %7, %c0_i32_2 : i32
    scf.if %8 {
      %c0_3 = arith.constant 0 : index
      %c0_4 = arith.constant 0 : index
      %9 = vector.load %arg8[%c0_3, %c0_4] : memref<16x128xf32, #tpu.memory_space<vmem>>, vector<16x128xf32>
      %cst_5 = arith.constant 0.000000e+00 : f32
      %10 = vector.broadcast %cst_5 : f32 to vector<8x128xf32>
      %c0_6 = arith.constant 0 : index
      %c0_7 = arith.constant 0 : index
      %c0_8 = arith.constant 0 : index
      %11 = vector.load %arg12[%c0_6, %c0_7, %c0_8] : memref<3x128x384xbf16, #tpu.memory_space<vmem>>, vector<1x128x384xbf16>
      %12 = vector.shape_cast %11 : vector<1x128x384xbf16> to vector<128x384xbf16>
      %c0_9 = arith.constant 0 : index
      %c0_10 = arith.constant 0 : index
      %c0_11 = arith.constant 0 : index
      %13 = vector.load %arg13[%c0_9, %c0_10, %c0_11] : memref<3x128x384xbf16, #tpu.memory_space<vmem>>, vector<1x128x384xbf16>
      %14 = vector.shape_cast %13 : vector<1x128x384xbf16> to vector<128x384xbf16>
      %15 = arith.truncf %9 : vector<16x128xf32> to vector<16x128xbf16>
      %cst_12 = arith.constant dense<0.000000e+00> : vector<16x384xf32>
      %16 = tpu.matmul %15, %12, %cst_12 {dimension_numbers = #tpu.dot_dimension_numbers<[1], [0], [0], [1], [0, 0, 1, 1], [], []>} : vector<16x128xbf16>, vector<128x384xbf16>, vector<16x384xf32> -> vector<16x384xf32>
      %c0_13 = arith.constant 0 : index
      %c0_14 = arith.constant 0 : index
      %c0_15 = arith.constant 0 : index
      %17 = vector.load %arg14[%c0_13, %c0_14, %c0_15] : memref<3x1x384xf32, #tpu.memory_space<vmem>>, vector<1x1x384xf32>
      %18 = vector.shape_cast %17 : vector<1x1x384xf32> to vector<1x384xf32>
      %19 = vector.broadcast %18 : vector<1x384xf32> to vector<16x384xf32>
      %20 = arith.addf %16, %19 : vector<16x384xf32>
      %c0_16 = arith.constant 0 : index
      %c0_17 = arith.constant 0 : index
      %c0_18 = arith.constant 0 : index
      %21 = vector.load %arg15[%c0_16, %c0_17, %c0_18] : memref<3x1x384xf32, #tpu.memory_space<vmem>>, vector<1x1x384xf32>
      %22 = vector.shape_cast %21 : vector<1x1x384xf32> to vector<1x384xf32>
      %23 = vector.shape_cast %22 : vector<1x384xf32> to vector<1x384xf32>
      %24 = vector.broadcast %23 : vector<1x384xf32> to vector<8x384xf32>
      %25 = vector.extract_strided_slice %20 {offsets = [0, 0], sizes = [8, 384], strides = [1, 1]} : vector<16x384xf32> to vector<8x384xf32>
      %26 = arith.truncf %10 : vector<8x128xf32> to vector<8x128xbf16>
      %cst_19 = arith.constant dense<0.000000e+00> : vector<8x384xf32>
      %27 = tpu.matmul %26, %14, %cst_19 {dimension_numbers = #tpu.dot_dimension_numbers<[1], [0], [0], [1], [0, 0, 1, 1], [], []>} : vector<8x128xbf16>, vector<128x384xbf16>, vector<8x384xf32> -> vector<8x384xf32>
      %28 = arith.addf %27, %24 : vector<8x384xf32>
      %29 = vector.extract_strided_slice %25 {offsets = [0, 0], sizes = [8, 128], strides = [1, 1]} : vector<8x384xf32> to vector<8x128xf32>
      %30 = vector.extract_strided_slice %28 {offsets = [0, 0], sizes = [8, 128], strides = [1, 1]} : vector<8x384xf32> to vector<8x128xf32>
      %31 = arith.addf %29, %30 : vector<8x128xf32>
      %32 = arith.negf %31 : vector<8x128xf32>
      %33 = math.exp %32 : vector<8x128xf32>
      %cst_20 = arith.constant 1.000000e+00 : f32
      %34 = vector.broadcast %cst_20 : f32 to vector<8x128xf32>
      %35 = arith.addf %34, %33 : vector<8x128xf32>
      %36 = arith.divf %34, %35 : vector<8x128xf32>
      %37 = vector.extract_strided_slice %25 {offsets = [0, 128], sizes = [8, 128], strides = [1, 1]} : vector<8x384xf32> to vector<8x128xf32>
      %38 = vector.extract_strided_slice %28 {offsets = [0, 128], sizes = [8, 128], strides = [1, 1]} : vector<8x384xf32> to vector<8x128xf32>
      %39 = arith.addf %37, %38 : vector<8x128xf32>
      %40 = arith.negf %39 : vector<8x128xf32>
      %41 = math.exp %40 : vector<8x128xf32>
      %cst_21 = arith.constant 1.000000e+00 : f32
      %42 = vector.broadcast %cst_21 : f32 to vector<8x128xf32>
      %43 = arith.addf %42, %41 : vector<8x128xf32>
      %44 = arith.divf %42, %43 : vector<8x128xf32>
      %45 = vector.extract_strided_slice %25 {offsets = [0, 256], sizes = [8, 128], strides = [1, 1]} : vector<8x384xf32> to vector<8x128xf32>
      %46 = vector.extract_strided_slice %28 {offsets = [0, 256], sizes = [8, 128], strides = [1, 1]} : vector<8x384xf32> to vector<8x128xf32>
      %47 = arith.mulf %36, %46 : vector<8x128xf32>
      %48 = arith.addf %45, %47 : vector<8x128xf32>
      %49 = math.tanh %48 : vector<8x128xf32>
      %cst_22 = arith.constant 1.000000e+00 : f32
      %50 = vector.broadcast %cst_22 : f32 to vector<8x128xf32>
      %51 = arith.subf %50, %44 : vector<8x128xf32>
      %52 = arith.mulf %51, %49 : vector<8x128xf32>
      %53 = arith.mulf %44, %10 : vector<8x128xf32>
      %54 = arith.addf %52, %53 : vector<8x128xf32>
      %c0_23 = arith.constant 0 : index
      %c0_24 = arith.constant 0 : index
      %55 = vector.load %arg21[%c0_23, %c0_24] : memref<16x128xf32, #tpu.memory_space<vmem>>, vector<8x128xf32>
      tpu.vector_store %arg21[%c0_23, %c0_24], %54 {strides = array<i32>} : memref<16x128xf32, #tpu.memory_space<vmem>>, vector<8x128xf32>,
      %56 = vector.extract_strided_slice %20 {offsets = [8, 0], sizes = [8, 384], strides = [1, 1]} : vector<16x384xf32> to vector<8x384xf32>
      %57 = arith.truncf %54 : vector<8x128xf32> to vector<8x128xbf16>
      %cst_25 = arith.constant dense<0.000000e+00> : vector<8x384xf32>
      %58 = tpu.matmul %57, %14, %cst_25 {dimension_numbers = #tpu.dot_dimension_numbers<[1], [0], [0], [1], [0, 0, 1, 1], [], []>} : vector<8x128xbf16>, vector<128x384xbf16>, vector<8x384xf32> -> vector<8x384xf32>
      %59 = arith.addf %58, %24 : vector<8x384xf32>
      %60 = vector.extract_strided_slice %56 {offsets = [0, 0], sizes = [8, 128], strides = [1, 1]} : vector<8x384xf32> to vector<8x128xf32>
      %61 = vector.extract_strided_slice %59 {offsets = [0, 0], sizes = [8, 128], strides = [1, 1]} : vector<8x384xf32> to vector<8x128xf32>
      %62 = arith.addf %60, %61 : vector<8x128xf32>
      %63 = arith.negf %62 : vector<8x128xf32>
      %64 = math.exp %63 : vector<8x128xf32>
      %cst_26 = arith.constant 1.000000e+00 : f32
      %65 = vector.broadcast %cst_26 : f32 to vector<8x128xf32>
      %66 = arith.addf %65, %64 : vector<8x128xf32>
      %67 = arith.divf %65, %66 : vector<8x128xf32>
      %68 = vector.extract_strided_slice %56 {offsets = [0, 128], sizes = [8, 128], strides = [1, 1]} : vector<8x384xf32> to vector<8x128xf32>
      %69 = vector.extract_strided_slice %59 {offsets = [0, 128], sizes = [8, 128], strides = [1, 1]} : vector<8x384xf32> to vector<8x128xf32>
      %70 = arith.addf %68, %69 : vector<8x128xf32>
      %71 = arith.negf %70 : vector<8x128xf32>
      %72 = math.exp %71 : vector<8x128xf32>
      %cst_27 = arith.constant 1.000000e+00 : f32
      %73 = vector.broadcast %cst_27 : f32 to vector<8x128xf32>
      %74 = arith.addf %73, %72 : vector<8x128xf32>
      %75 = arith.divf %73, %74 : vector<8x128xf32>
      %76 = vector.extract_strided_slice %56 {offsets = [0, 256], sizes = [8, 128], strides = [1, 1]} : vector<8x384xf32> to vector<8x128xf32>
      %77 = vector.extract_strided_slice %59 {offsets = [0, 256], sizes = [8, 128], strides = [1, 1]} : vector<8x384xf32> to vector<8x128xf32>
      %78 = arith.mulf %67, %77 : vector<8x128xf32>
      %79 = arith.addf %76, %78 : vector<8x128xf32>
      %80 = math.tanh %79 : vector<8x128xf32>
      %cst_28 = arith.constant 1.000000e+00 : f32
      %81 = vector.broadcast %cst_28 : f32 to vector<8x128xf32>
      %82 = arith.subf %81, %75 : vector<8x128xf32>
      %83 = arith.mulf %82, %80 : vector<8x128xf32>
      %84 = arith.mulf %75, %54 : vector<8x128xf32>
      %85 = arith.addf %83, %84 : vector<8x128xf32>
      %c8 = arith.constant 8 : index
      %c0_29 = arith.constant 0 : index
      %86 = vector.load %arg21[%c8, %c0_29] : memref<16x128xf32, #tpu.memory_space<vmem>>, vector<8x128xf32>
      tpu.vector_store %arg21[%c8, %c0_29], %85 {strides = array<i32>} : memref<16x128xf32, #tpu.memory_space<vmem>>, vector<8x128xf32>,
      %c0_30 = arith.constant 0 : index
      %c0_31 = arith.constant 0 : index
      %c0_32 = arith.constant 0 : index
      %87 = vector.load %arg16[%c0_30, %c0_31, %c0_32] : memref<3x128x128xbf16, #tpu.memory_space<vmem>>, vector<1x128x128xbf16>
      %88 = vector.shape_cast %87 : vector<1x128x128xbf16> to vector<128x128xbf16>
      %89 = arith.truncf %85 : vector<8x128xf32> to vector<8x128xbf16>
      %cst_33 = arith.constant dense<0.000000e+00> : vector<8x128xf32>
      %90 = tpu.matmul %89, %88, %cst_33 {dimension_numbers = #tpu.dot_dimension_numbers<[1], [0], [0], [1], [0, 0, 1, 1], [], []>} : vector<8x128xbf16>, vector<128x128xbf16>, vector<8x128xf32> -> vector<8x128xf32>
      %c0_34 = arith.constant 0 : index
      %c0_35 = arith.constant 0 : index
      %c0_36 = arith.constant 0 : index
      %91 = vector.load %arg17[%c0_34, %c0_35, %c0_36] : memref<3x1x128xf32, #tpu.memory_space<vmem>>, vector<1x1x128xf32>
      %92 = vector.shape_cast %91 : vector<1x1x128xf32> to vector<1x128xf32>
      %93 = vector.broadcast %92 : vector<1x128xf32> to vector<8x128xf32>
      %94 = arith.addf %90, %93 : vector<8x128xf32>
      %c1 = arith.constant 1 : index
      %c0_37 = arith.constant 0 : index
      %c0_38 = arith.constant 0 : index
      %95 = vector.load %arg16[%c1, %c0_37, %c0_38] : memref<3x128x128xbf16, #tpu.memory_space<vmem>>, vector<1x128x128xbf16>
      %96 = vector.shape_cast %95 : vector<1x128x128xbf16> to vector<128x128xbf16>
      %97 = arith.truncf %85 : vector<8x128xf32> to vector<8x128xbf16>
      %cst_39 = arith.constant dense<0.000000e+00> : vector<8x128xf32>
      %98 = tpu.matmul %97, %96, %cst_39 {dimension_numbers = #tpu.dot_dimension_numbers<[1], [0], [0], [1], [0, 0, 1, 1], [], []>} : vector<8x128xbf16>, vector<128x128xbf16>, vector<8x128xf32> -> vector<8x128xf32>
      %c1_40 = arith.constant 1 : index
      %c0_41 = arith.constant 0 : index
      %c0_42 = arith.constant 0 : index
      %99 = vector.load %arg17[%c1_40, %c0_41, %c0_42] : memref<3x1x128xf32, #tpu.memory_space<vmem>>, vector<1x1x128xf32>
      %100 = vector.shape_cast %99 : vector<1x1x128xf32> to vector<1x128xf32>
      %101 = vector.broadcast %100 : vector<1x128xf32> to vector<8x128xf32>
      %102 = arith.addf %98, %101 : vector<8x128xf32>
      %cst_43 = arith.constant 1.000000e+00 : f32
      %103 = vector.broadcast %cst_43 : f32 to vector<8x128xf32>
      %104 = arith.addf %103, %102 : vector<8x128xf32>
      %105 = arith.mulf %94, %94 : vector<8x128xf32>
      %106 = arith.subf %104, %105 : vector<8x128xf32>
      %107 = math.exp %102 : vector<8x128xf32>
      %108 = arith.subf %106, %107 : vector<8x128xf32>
      %cst_44 = arith.constant dense<0.000000e+00> : vector<8xf32>
      %109 = vector.multi_reduction <add>, %108, %cst_44 [1] : vector<8x128xf32> to vector<8xf32>
      %110 = vector.shape_cast %109 : vector<8xf32> to vector<8x1xf32>
      %cst_45 = arith.constant -5.000000e-01 : f32
      %111 = vector.broadcast %cst_45 : f32 to vector<8x1xf32>
      %112 = arith.mulf %111, %110 : vector<8x1xf32>
      %c2 = arith.constant 2 : index
      %c0_46 = arith.constant 0 : index
      %c0_47 = arith.constant 0 : index
      %113 = vector.load %arg16[%c2, %c0_46, %c0_47] : memref<3x128x128xbf16, #tpu.memory_space<vmem>>, vector<1x128x128xbf16>
      %114 = vector.shape_cast %113 : vector<1x128x128xbf16> to vector<128x128xbf16>
      %115 = arith.truncf %94 : vector<8x128xf32> to vector<8x128xbf16>
      %cst_48 = arith.constant dense<0.000000e+00> : vector<8x128xf32>
      %116 = tpu.matmul %115, %114, %cst_48 {dimension_numbers = #tpu.dot_dimension_numbers<[1], [0], [0], [1], [0, 0, 1, 1], [], []>} : vector<8x128xbf16>, vector<128x128xbf16>, vector<8x128xf32> -> vector<8x128xf32>
      %c2_49 = arith.constant 2 : index
      %c0_50 = arith.constant 0 : index
      %c0_51 = arith.constant 0 : index
      %117 = vector.load %arg17[%c2_49, %c0_50, %c0_51] : memref<3x1x128xf32, #tpu.memory_space<vmem>>, vector<1x1x128xf32>
      %118 = vector.shape_cast %117 : vector<1x1x128xf32> to vector<1x128xf32>
      %119 = vector.broadcast %118 : vector<1x128xf32> to vector<8x128xf32>
      %120 = arith.addf %116, %119 : vector<8x128xf32>
      %c0_52 = arith.constant 0 : index
      %c0_53 = arith.constant 0 : index
      %121 = vector.load %arg9[%c0_52, %c0_53] : memref<64x128xf32, #tpu.memory_space<vmem>>, vector<64x128xf32>
      %c1_54 = arith.constant 1 : index
      %c0_55 = arith.constant 0 : index
      %c0_56 = arith.constant 0 : index
      %122 = vector.load %arg12[%c1_54, %c0_55, %c0_56] : memref<3x128x384xbf16, #tpu.memory_space<vmem>>, vector<1x128x384xbf16>
      %123 = vector.shape_cast %122 : vector<1x128x384xbf16> to vector<128x384xbf16>
      %c1_57 = arith.constant 1 : index
      %c0_58 = arith.constant 0 : index
      %c0_59 = arith.constant 0 : index
      %124 = vector.load %arg13[%c1_57, %c0_58, %c0_59] : memref<3x128x384xbf16, #tpu.memory_space<vmem>>, vector<1x128x384xbf16>
      %125 = vector.shape_cast %124 : vector<1x128x384xbf16> to vector<128x384xbf16>
      %126 = arith.truncf %121 : vector<64x128xf32> to vector<64x128xbf16>
      %cst_60 = arith.constant dense<0.000000e+00> : vector<64x384xf32>
      %127 = tpu.matmul %126, %123, %cst_60 {dimension_numbers = #tpu.dot_dimension_numbers<[1], [0], [0], [1], [0, 0, 1, 1], [], []>} : vector<64x128xbf16>, vector<128x384xbf16>, vector<64x384xf32> -> vector<64x384xf32>
      %c1_61 = arith.constant 1 : index
      %c0_62 = arith.constant 0 : index
      %c0_63 = arith.constant 0 : index
      %128 = vector.load %arg14[%c1_61, %c0_62, %c0_63] : memref<3x1x384xf32, #tpu.memory_space<vmem>>, vector<1x1x384xf32>
      %129 = vector.shape_cast %128 : vector<1x1x384xf32> to vector<1x384xf32>
      %130 = vector.broadcast %129 : vector<1x384xf32> to vector<64x384xf32>
      %131 = arith.addf %127, %130 : vector<64x384xf32>
      %c1_64 = arith.constant 1 : index
      %c0_65 = arith.constant 0 : index
      %c0_66 = arith.constant 0 : index
      %132 = vector.load %arg15[%c1_64, %c0_65, %c0_66] : memref<3x1x384xf32, #tpu.memory_space<vmem>>, vector<1x1x384xf32>
      %133 = vector.shape_cast %132 : vector<1x1x384xf32> to vector<1x384xf32>
      %134 = vector.shape_cast %133 : vector<1x384xf32> to vector<1x384xf32>
      %135 = vector.broadcast %134 : vector<1x384xf32> to vector<8x384xf32>
      %136 = vector.extract_strided_slice %131 {offsets = [0, 0], sizes = [8, 384], strides = [1, 1]} : vector<64x384xf32> to vector<8x384xf32>
      %137 = arith.truncf %120 : vector<8x128xf32> to vector<8x128xbf16>
      %cst_67 = arith.constant dense<0.000000e+00> : vector<8x384xf32>
      %138 = tpu.matmul %137, %125, %cst_67 {dimension_numbers = #tpu.dot_dimension_numbers<[1], [0], [0], [1], [0, 0, 1, 1], [], []>} : vector<8x128xbf16>, vector<128x384xbf16>, vector<8x384xf32> -> vector<8x384xf32>
      %139 = arith.addf %138, %135 : vector<8x384xf32>
      %140 = vector.extract_strided_slice %136 {offsets = [0, 0], sizes = [8, 128], strides = [1, 1]} : vector<8x384xf32> to vector<8x128xf32>
      %141 = vector.extract_strided_slice %139 {offsets = [0, 0], sizes = [8, 128], strides = [1, 1]} : vector<8x384xf32> to vector<8x128xf32>
      %142 = arith.addf %140, %141 : vector<8x128xf32>
      %143 = arith.negf %142 : vector<8x128xf32>
      %144 = math.exp %143 : vector<8x128xf32>
      %cst_68 = arith.constant 1.000000e+00 : f32
      %145 = vector.broadcast %cst_68 : f32 to vector<8x128xf32>
      %146 = arith.addf %145, %144 : vector<8x128xf32>
      %147 = arith.divf %145, %146 : vector<8x128xf32>
      %148 = vector.extract_strided_slice %136 {offsets = [0, 128], sizes = [8, 128], strides = [1, 1]} : vector<8x384xf32> to vector<8x128xf32>
      %149 = vector.extract_strided_slice %139 {offsets = [0, 128], sizes = [8, 128], strides = [1, 1]} : vector<8x384xf32> to vector<8x128xf32>
      %150 = arith.addf %148, %149 : vector<8x128xf32>
      %151 = arith.negf %150 : vector<8x128xf32>
      %152 = math.exp %151 : vector<8x128xf32>
      %cst_69 = arith.constant 1.000000e+00 : f32
      %153 = vector.broadcast %cst_69 : f32 to vector<8x128xf32>
      %154 = arith.addf %153, %152 : vector<8x128xf32>
      %155 = arith.divf %153, %154 : vector<8x128xf32>
      %156 = vector.extract_strided_slice %136 {offsets = [0, 256], sizes = [8, 128], strides = [1, 1]} : vector<8x384xf32> to vector<8x128xf32>
      %157 = vector.extract_strided_slice %139 {offsets = [0, 256], sizes = [8, 128], strides = [1, 1]} : vector<8x384xf32> to vector<8x128xf32>
      %158 = arith.mulf %147, %157 : vector<8x128xf32>
      %159 = arith.addf %156, %158 : vector<8x128xf32>
      %160 = math.tanh %159 : vector<8x128xf32>
      %cst_70 = arith.constant 1.000000e+00 : f32
      %161 = vector.broadcast %cst_70 : f32 to vector<8x128xf32>
      %162 = arith.subf %161, %155 : vector<8x128xf32>
      %163 = arith.mulf %162, %160 : vector<8x128xf32>
      %164 = arith.mulf %155, %120 : vector<8x128xf32>
      %165 = arith.addf %163, %164 : vector<8x128xf32>
      %c0_71 = arith.constant 0 : index
      %c0_72 = arith.constant 0 : index
      %166 = vector.load %arg22[%c0_71, %c0_72] : memref<64x128xf32, #tpu.memory_space<vmem>>, vector<8x128xf32>
      tpu.vector_store %arg22[%c0_71, %c0_72], %165 {strides = array<i32>} : memref<64x128xf32, #tpu.memory_space<vmem>>, vector<8x128xf32>,
      %167 = vector.extract_strided_slice %131 {offsets = [8, 0], sizes = [8, 384], strides = [1, 1]} : vector<64x384xf32> to vector<8x384xf32>
      %168 = arith.truncf %165 : vector<8x128xf32> to vector<8x128xbf16>
      %cst_73 = arith.constant dense<0.000000e+00> : vector<8x384xf32>
      %169 = tpu.matmul %168, %125, %cst_73 {dimension_numbers = #tpu.dot_dimension_numbers<[1], [0], [0], [1], [0, 0, 1, 1], [], []>} : vector<8x128xbf16>, vector<128x384xbf16>, vector<8x384xf32> -> vector<8x384xf32>
      %170 = arith.addf %169, %135 : vector<8x384xf32>
      %171 = vector.extract_strided_slice %167 {offsets = [0, 0], sizes = [8, 128], strides = [1, 1]} : vector<8x384xf32> to vector<8x128xf32>
      %172 = vector.extract_strided_slice %170 {offsets = [0, 0], sizes = [8, 128], strides = [1, 1]} : vector<8x384xf32> to vector<8x128xf32>
      %173 = arith.addf %171, %172 : vector<8x128xf32>
      %174 = arith.negf %173 : vector<8x128xf32>
      %175 = math.exp %174 : vector<8x128xf32>
      %cst_74 = arith.constant 1.000000e+00 : f32
      %176 = vector.broadcast %cst_74 : f32 to vector<8x128xf32>
      %177 = arith.addf %176, %175 : vector<8x128xf32>
      %178 = arith.divf %176, %177 : vector<8x128xf32>
      %179 = vector.extract_strided_slice %167 {offsets = [0, 128], sizes = [8, 128], strides = [1, 1]} : vector<8x384xf32> to vector<8x128xf32>
      %180 = vector.extract_strided_slice %170 {offsets = [0, 128], sizes = [8, 128], strides = [1, 1]} : vector<8x384xf32> to vector<8x128xf32>
      %181 = arith.addf %179, %180 : vector<8x128xf32>
      %182 = arith.negf %181 : vector<8x128xf32>
      %183 = math.exp %182 : vector<8x128xf32>
      %cst_75 = arith.constant 1.000000e+00 : f32
      %184 = vector.broadcast %cst_75 : f32 to vector<8x128xf32>
      %185 = arith.addf %184, %183 : vector<8x128xf32>
      %186 = arith.divf %184, %185 : vector<8x128xf32>
      %187 = vector.extract_strided_slice %167 {offsets = [0, 256], sizes = [8, 128], strides = [1, 1]} : vector<8x384xf32> to vector<8x128xf32>
      %188 = vector.extract_strided_slice %170 {offsets = [0, 256], sizes = [8, 128], strides = [1, 1]} : vector<8x384xf32> to vector<8x128xf32>
      %189 = arith.mulf %178, %188 : vector<8x128xf32>
      %190 = arith.addf %187, %189 : vector<8x128xf32>
      %191 = math.tanh %190 : vector<8x128xf32>
      %cst_76 = arith.constant 1.000000e+00 : f32
      %192 = vector.broadcast %cst_76 : f32 to vector<8x128xf32>
      %193 = arith.subf %192, %186 : vector<8x128xf32>
      %194 = arith.mulf %193, %191 : vector<8x128xf32>
      %195 = arith.mulf %186, %165 : vector<8x128xf32>
      %196 = arith.addf %194, %195 : vector<8x128xf32>
      %c8_77 = arith.constant 8 : index
      %c0_78 = arith.constant 0 : index
      %197 = vector.load %arg22[%c8_77, %c0_78] : memref<64x128xf32, #tpu.memory_space<vmem>>, vector<8x128xf32>
      tpu.vector_store %arg22[%c8_77, %c0_78], %196 {strides = array<i32>} : memref<64x128xf32, #tpu.memory_space<vmem>>, vector<8x128xf32>,
      %198 = vector.extract_strided_slice %131 {offsets = [16, 0], sizes = [8, 384], strides = [1, 1]} : vector<64x384xf32> to vector<8x384xf32>
      %199 = arith.truncf %196 : vector<8x128xf32> to vector<8x128xbf16>
      %cst_79 = arith.constant dense<0.000000e+00> : vector<8x384xf32>
      %200 = tpu.matmul %199, %125, %cst_79 {dimension_numbers = #tpu.dot_dimension_numbers<[1], [0], [0], [1], [0, 0, 1, 1], [], []>} : vector<8x128xbf16>, vector<128x384xbf16>, vector<8x384xf32> -> vector<8x384xf32>
      %201 = arith.addf %200, %135 : vector<8x384xf32>
      %202 = vector.extract_strided_slice %198 {offsets = [0, 0], sizes = [8, 128], strides = [1, 1]} : vector<8x384xf32> to vector<8x128xf32>
      %203 = vector.extract_strided_slice %201 {offsets = [0, 0], sizes = [8, 128], strides = [1, 1]} : vector<8x384xf32> to vector<8x128xf32>
      %204 = arith.addf %202, %203 : vector<8x128xf32>
      %205 = arith.negf %204 : vector<8x128xf32>
      %206 = math.exp %205 : vector<8x128xf32>
      %cst_80 = arith.constant 1.000000e+00 : f32
      %207 = vector.broadcast %cst_80 : f32 to vector<8x128xf32>
      %208 = arith.addf %207, %206 : vector<8x128xf32>
      %209 = arith.divf %207, %208 : vector<8x128xf32>
      %210 = vector.extract_strided_slice %198 {offsets = [0, 128], sizes = [8, 128], strides = [1, 1]} : vector<8x384xf32> to vector<8x128xf32>
      %211 = vector.extract_strided_slice %201 {offsets = [0, 128], sizes = [8, 128], strides = [1, 1]} : vector<8x384xf32> to vector<8x128xf32>
      %212 = arith.addf %210, %211 : vector<8x128xf32>
      %213 = arith.negf %212 : vector<8x128xf32>
      %214 = math.exp %213 : vector<8x128xf32>
      %cst_81 = arith.constant 1.000000e+00 : f32
      %215 = vector.broadcast %cst_81 : f32 to vector<8x128xf32>
      %216 = arith.addf %215, %214 : vector<8x128xf32>
      %217 = arith.divf %215, %216 : vector<8x128xf32>
      %218 = vector.extract_strided_slice %198 {offsets = [0, 256], sizes = [8, 128], strides = [1, 1]} : vector<8x384xf32> to vector<8x128xf32>
      %219 = vector.extract_strided_slice %201 {offsets = [0, 256], sizes = [8, 128], strides = [1, 1]} : vector<8x384xf32> to vector<8x128xf32>
      %220 = arith.mulf %209, %219 : vector<8x128xf32>
      %221 = arith.addf %218, %220 : vector<8x128xf32>
      %222 = math.tanh %221 : vector<8x128xf32>
      %cst_82 = arith.constant 1.000000e+00 : f32
      %223 = vector.broadcast %cst_82 : f32 to vector<8x128xf32>
      %224 = arith.subf %223, %217 : vector<8x128xf32>
      %225 = arith.mulf %224, %222 : vector<8x128xf32>
      %226 = arith.mulf %217, %196 : vector<8x128xf32>
      %227 = arith.addf %225, %226 : vector<8x128xf32>
      %c16 = arith.constant 16 : index
      %c0_83 = arith.constant 0 : index
      %228 = vector.load %arg22[%c16, %c0_83] : memref<64x128xf32, #tpu.memory_space<vmem>>, vector<8x128xf32>
      tpu.vector_store %arg22[%c16, %c0_83], %227 {strides = array<i32>} : memref<64x128xf32, #tpu.memory_space<vmem>>, vector<8x128xf32>,
      %229 = vector.extract_strided_slice %131 {offsets = [24, 0], sizes = [8, 384], strides = [1, 1]} : vector<64x384xf32> to vector<8x384xf32>
      %230 = arith.truncf %227 : vector<8x128xf32> to vector<8x128xbf16>
      %cst_84 = arith.constant dense<0.000000e+00> : vector<8x384xf32>
      %231 = tpu.matmul %230, %125, %cst_84 {dimension_numbers = #tpu.dot_dimension_numbers<[1], [0], [0], [1], [0, 0, 1, 1], [], []>} : vector<8x128xbf16>, vector<128x384xbf16>, vector<8x384xf32> -> vector<8x384xf32>
      %232 = arith.addf %231, %135 : vector<8x384xf32>
      %233 = vector.extract_strided_slice %229 {offsets = [0, 0], sizes = [8, 128], strides = [1, 1]} : vector<8x384xf32> to vector<8x128xf32>
      %234 = vector.extract_strided_slice %232 {offsets = [0, 0], sizes = [8, 128], strides = [1, 1]} : vector<8x384xf32> to vector<8x128xf32>
      %235 = arith.addf %233, %234 : vector<8x128xf32>
      %236 = arith.negf %235 : vector<8x128xf32>
      %237 = math.exp %236 : vector<8x128xf32>
      %cst_85 = arith.constant 1.000000e+00 : f32
      %238 = vector.broadcast %cst_85 : f32 to vector<8x128xf32>
      %239 = arith.addf %238, %237 : vector<8x128xf32>
      %240 = arith.divf %238, %239 : vector<8x128xf32>
      %241 = vector.extract_strided_slice %229 {offsets = [0, 128], sizes = [8, 128], strides = [1, 1]} : vector<8x384xf32> to vector<8x128xf32>
      %242 = vector.extract_strided_slice %232 {offsets = [0, 128], sizes = [8, 128], strides = [1, 1]} : vector<8x384xf32> to vector<8x128xf32>
      %243 = arith.addf %241, %242 : vector<8x128xf32>
      %244 = arith.negf %243 : vector<8x128xf32>
      %245 = math.exp %244 : vector<8x128xf32>
      %cst_86 = arith.constant 1.000000e+00 : f32
      %246 = vector.broadcast %cst_86 : f32 to vector<8x128xf32>
      %247 = arith.addf %246, %245 : vector<8x128xf32>
      %248 = arith.divf %246, %247 : vector<8x128xf32>
      %249 = vector.extract_strided_slice %229 {offsets = [0, 256], sizes = [8, 128], strides = [1, 1]} : vector<8x384xf32> to vector<8x128xf32>
      %250 = vector.extract_strided_slice %232 {offsets = [0, 256], sizes = [8, 128], strides = [1, 1]} : vector<8x384xf32> to vector<8x128xf32>
      %251 = arith.mulf %240, %250 : vector<8x128xf32>
      %252 = arith.addf %249, %251 : vector<8x128xf32>
      %253 = math.tanh %252 : vector<8x128xf32>
      %cst_87 = arith.constant 1.000000e+00 : f32
      %254 = vector.broadcast %cst_87 : f32 to vector<8x128xf32>
      %255 = arith.subf %254, %248 : vector<8x128xf32>
      %256 = arith.mulf %255, %253 : vector<8x128xf32>
      %257 = arith.mulf %248, %227 : vector<8x128xf32>
      %258 = arith.addf %256, %257 : vector<8x128xf32>
      %c24 = arith.constant 24 : index
      %c0_88 = arith.constant 0 : index
      %259 = vector.load %arg22[%c24, %c0_88] : memref<64x128xf32, #tpu.memory_space<vmem>>, vector<8x128xf32>
      tpu.vector_store %arg22[%c24, %c0_88], %258 {strides = array<i32>} : memref<64x128xf32, #tpu.memory_space<vmem>>, vector<8x128xf32>,
      %260 = vector.extract_strided_slice %131 {offsets = [32, 0], sizes = [8, 384], strides = [1, 1]} : vector<64x384xf32> to vector<8x384xf32>
      %261 = arith.truncf %258 : vector<8x128xf32> to vector<8x128xbf16>
      %cst_89 = arith.constant dense<0.000000e+00> : vector<8x384xf32>
      %262 = tpu.matmul %261, %125, %cst_89 {dimension_numbers = #tpu.dot_dimension_numbers<[1], [0], [0], [1], [0, 0, 1, 1], [], []>} : vector<8x128xbf16>, vector<128x384xbf16>, vector<8x384xf32> -> vector<8x384xf32>
      %263 = arith.addf %262, %135 : vector<8x384xf32>
      %264 = vector.extract_strided_slice %260 {offsets = [0, 0], sizes = [8, 128], strides = [1, 1]} : vector<8x384xf32> to vector<8x128xf32>
      %265 = vector.extract_strided_slice %263 {offsets = [0, 0], sizes = [8, 128], strides = [1, 1]} : vector<8x384xf32> to vector<8x128xf32>
      %266 = arith.addf %264, %265 : vector<8x128xf32>
      %267 = arith.negf %266 : vector<8x128xf32>
      %268 = math.exp %267 : vector<8x128xf32>
      %cst_90 = arith.constant 1.000000e+00 : f32
      %269 = vector.broadcast %cst_90 : f32 to vector<8x128xf32>
      %270 = arith.addf %269, %268 : vector<8x128xf32>
      %271 = arith.divf %269, %270 : vector<8x128xf32>
      %272 = vector.extract_strided_slice %260 {offsets = [0, 128], sizes = [8, 128], strides = [1, 1]} : vector<8x384xf32> to vector<8x128xf32>
      %273 = vector.extract_strided_slice %263 {offsets = [0, 128], sizes = [8, 128], strides = [1, 1]} : vector<8x384xf32> to vector<8x128xf32>
      %274 = arith.addf %272, %273 : vector<8x128xf32>
      %275 = arith.negf %274 : vector<8x128xf32>
      %276 = math.exp %275 : vector<8x128xf32>
      %cst_91 = arith.constant 1.000000e+00 : f32
      %277 = vector.broadcast %cst_91 : f32 to vector<8x128xf32>
      %278 = arith.addf %277, %276 : vector<8x128xf32>
      %279 = arith.divf %277, %278 : vector<8x128xf32>
      %280 = vector.extract_strided_slice %260 {offsets = [0, 256], sizes = [8, 128], strides = [1, 1]} : vector<8x384xf32> to vector<8x128xf32>
      %281 = vector.extract_strided_slice %263 {offsets = [0, 256], sizes = [8, 128], strides = [1, 1]} : vector<8x384xf32> to vector<8x128xf32>
      %282 = arith.mulf %271, %281 : vector<8x128xf32>
      %283 = arith.addf %280, %282 : vector<8x128xf32>
      %284 = math.tanh %283 : vector<8x128xf32>
      %cst_92 = arith.constant 1.000000e+00 : f32
      %285 = vector.broadcast %cst_92 : f32 to vector<8x128xf32>
      %286 = arith.subf %285, %279 : vector<8x128xf32>
      %287 = arith.mulf %286, %284 : vector<8x128xf32>
      %288 = arith.mulf %279, %258 : vector<8x128xf32>
      %289 = arith.addf %287, %288 : vector<8x128xf32>
      %c32 = arith.constant 32 : index
      %c0_93 = arith.constant 0 : index
      %290 = vector.load %arg22[%c32, %c0_93] : memref<64x128xf32, #tpu.memory_space<vmem>>, vector<8x128xf32>
      tpu.vector_store %arg22[%c32, %c0_93], %289 {strides = array<i32>} : memref<64x128xf32, #tpu.memory_space<vmem>>, vector<8x128xf32>,
      %291 = vector.extract_strided_slice %131 {offsets = [40, 0], sizes = [8, 384], strides = [1, 1]} : vector<64x384xf32> to vector<8x384xf32>
      %292 = arith.truncf %289 : vector<8x128xf32> to vector<8x128xbf16>
      %cst_94 = arith.constant dense<0.000000e+00> : vector<8x384xf32>
      %293 = tpu.matmul %292, %125, %cst_94 {dimension_numbers = #tpu.dot_dimension_numbers<[1], [0], [0], [1], [0, 0, 1, 1], [], []>} : vector<8x128xbf16>, vector<128x384xbf16>, vector<8x384xf32> -> vector<8x384xf32>
      %294 = arith.addf %293, %135 : vector<8x384xf32>
      %295 = vector.extract_strided_slice %291 {offsets = [0, 0], sizes = [8, 128], strides = [1, 1]} : vector<8x384xf32> to vector<8x128xf32>
      %296 = vector.extract_strided_slice %294 {offsets = [0, 0], sizes = [8, 128], strides = [1, 1]} : vector<8x384xf32> to vector<8x128xf32>
      %297 = arith.addf %295, %296 : vector<8x128xf32>
      %298 = arith.negf %297 : vector<8x128xf32>
      %299 = math.exp %298 : vector<8x128xf32>
      %cst_95 = arith.constant 1.000000e+00 : f32
      %300 = vector.broadcast %cst_95 : f32 to vector<8x128xf32>
      %301 = arith.addf %300, %299 : vector<8x128xf32>
      %302 = arith.divf %300, %301 : vector<8x128xf32>
      %303 = vector.extract_strided_slice %291 {offsets = [0, 128], sizes = [8, 128], strides = [1, 1]} : vector<8x384xf32> to vector<8x128xf32>
      %304 = vector.extract_strided_slice %294 {offsets = [0, 128], sizes = [8, 128], strides = [1, 1]} : vector<8x384xf32> to vector<8x128xf32>
      %305 = arith.addf %303, %304 : vector<8x128xf32>
      %306 = arith.negf %305 : vector<8x128xf32>
      %307 = math.exp %306 : vector<8x128xf32>
      %cst_96 = arith.constant 1.000000e+00 : f32
      %308 = vector.broadcast %cst_96 : f32 to vector<8x128xf32>
      %309 = arith.addf %308, %307 : vector<8x128xf32>
      %310 = arith.divf %308, %309 : vector<8x128xf32>
      %311 = vector.extract_strided_slice %291 {offsets = [0, 256], sizes = [8, 128], strides = [1, 1]} : vector<8x384xf32> to vector<8x128xf32>
      %312 = vector.extract_strided_slice %294 {offsets = [0, 256], sizes = [8, 128], strides = [1, 1]} : vector<8x384xf32> to vector<8x128xf32>
      %313 = arith.mulf %302, %312 : vector<8x128xf32>
      %314 = arith.addf %311, %313 : vector<8x128xf32>
      %315 = math.tanh %314 : vector<8x128xf32>
      %cst_97 = arith.constant 1.000000e+00 : f32
      %316 = vector.broadcast %cst_97 : f32 to vector<8x128xf32>
      %317 = arith.subf %316, %310 : vector<8x128xf32>
      %318 = arith.mulf %317, %315 : vector<8x128xf32>
      %319 = arith.mulf %310, %289 : vector<8x128xf32>
      %320 = arith.addf %318, %319 : vector<8x128xf32>
      %c40 = arith.constant 40 : index
      %c0_98 = arith.constant 0 : index
      %321 = vector.load %arg22[%c40, %c0_98] : memref<64x128xf32, #tpu.memory_space<vmem>>, vector<8x128xf32>
      tpu.vector_store %arg22[%c40, %c0_98], %320 {strides = array<i32>} : memref<64x128xf32, #tpu.memory_space<vmem>>, vector<8x128xf32>,
      %322 = vector.extract_strided_slice %131 {offsets = [48, 0], sizes = [8, 384], strides = [1, 1]} : vector<64x384xf32> to vector<8x384xf32>
      %323 = arith.truncf %320 : vector<8x128xf32> to vector<8x128xbf16>
      %cst_99 = arith.constant dense<0.000000e+00> : vector<8x384xf32>
      %324 = tpu.matmul %323, %125, %cst_99 {dimension_numbers = #tpu.dot_dimension_numbers<[1], [0], [0], [1], [0, 0, 1, 1], [], []>} : vector<8x128xbf16>, vector<128x384xbf16>, vector<8x384xf32> -> vector<8x384xf32>
      %325 = arith.addf %324, %135 : vector<8x384xf32>
      %326 = vector.extract_strided_slice %322 {offsets = [0, 0], sizes = [8, 128], strides = [1, 1]} : vector<8x384xf32> to vector<8x128xf32>
      %327 = vector.extract_strided_slice %325 {offsets = [0, 0], sizes = [8, 128], strides = [1, 1]} : vector<8x384xf32> to vector<8x128xf32>
      %328 = arith.addf %326, %327 : vector<8x128xf32>
      %329 = arith.negf %328 : vector<8x128xf32>
      %330 = math.exp %329 : vector<8x128xf32>
      %cst_100 = arith.constant 1.000000e+00 : f32
      %331 = vector.broadcast %cst_100 : f32 to vector<8x128xf32>
      %332 = arith.addf %331, %330 : vector<8x128xf32>
      %333 = arith.divf %331, %332 : vector<8x128xf32>
      %334 = vector.extract_strided_slice %322 {offsets = [0, 128], sizes = [8, 128], strides = [1, 1]} : vector<8x384xf32> to vector<8x128xf32>
      %335 = vector.extract_strided_slice %325 {offsets = [0, 128], sizes = [8, 128], strides = [1, 1]} : vector<8x384xf32> to vector<8x128xf32>
      %336 = arith.addf %334, %335 : vector<8x128xf32>
      %337 = arith.negf %336 : vector<8x128xf32>
      %338 = math.exp %337 : vector<8x128xf32>
      %cst_101 = arith.constant 1.000000e+00 : f32
      %339 = vector.broadcast %cst_101 : f32 to vector<8x128xf32>
      %340 = arith.addf %339, %338 : vector<8x128xf32>
      %341 = arith.divf %339, %340 : vector<8x128xf32>
      %342 = vector.extract_strided_slice %322 {offsets = [0, 256], sizes = [8, 128], strides = [1, 1]} : vector<8x384xf32> to vector<8x128xf32>
      %343 = vector.extract_strided_slice %325 {offsets = [0, 256], sizes = [8, 128], strides = [1, 1]} : vector<8x384xf32> to vector<8x128xf32>
      %344 = arith.mulf %333, %343 : vector<8x128xf32>
      %345 = arith.addf %342, %344 : vector<8x128xf32>
      %346 = math.tanh %345 : vector<8x128xf32>
      %cst_102 = arith.constant 1.000000e+00 : f32
      %347 = vector.broadcast %cst_102 : f32 to vector<8x128xf32>
      %348 = arith.subf %347, %341 : vector<8x128xf32>
      %349 = arith.mulf %348, %346 : vector<8x128xf32>
      %350 = arith.mulf %341, %320 : vector<8x128xf32>
      %351 = arith.addf %349, %350 : vector<8x128xf32>
      %c48 = arith.constant 48 : index
      %c0_103 = arith.constant 0 : index
      %352 = vector.load %arg22[%c48, %c0_103] : memref<64x128xf32, #tpu.memory_space<vmem>>, vector<8x128xf32>
      tpu.vector_store %arg22[%c48, %c0_103], %351 {strides = array<i32>} : memref<64x128xf32, #tpu.memory_space<vmem>>, vector<8x128xf32>,
      %353 = vector.extract_strided_slice %131 {offsets = [56, 0], sizes = [8, 384], strides = [1, 1]} : vector<64x384xf32> to vector<8x384xf32>
      %354 = arith.truncf %351 : vector<8x128xf32> to vector<8x128xbf16>
      %cst_104 = arith.constant dense<0.000000e+00> : vector<8x384xf32>
      %355 = tpu.matmul %354, %125, %cst_104 {dimension_numbers = #tpu.dot_dimension_numbers<[1], [0], [0], [1], [0, 0, 1, 1], [], []>} : vector<8x128xbf16>, vector<128x384xbf16>, vector<8x384xf32> -> vector<8x384xf32>
      %356 = arith.addf %355, %135 : vector<8x384xf32>
      %357 = vector.extract_strided_slice %353 {offsets = [0, 0], sizes = [8, 128], strides = [1, 1]} : vector<8x384xf32> to vector<8x128xf32>
      %358 = vector.extract_strided_slice %356 {offsets = [0, 0], sizes = [8, 128], strides = [1, 1]} : vector<8x384xf32> to vector<8x128xf32>
      %359 = arith.addf %357, %358 : vector<8x128xf32>
      %360 = arith.negf %359 : vector<8x128xf32>
      %361 = math.exp %360 : vector<8x128xf32>
      %cst_105 = arith.constant 1.000000e+00 : f32
      %362 = vector.broadcast %cst_105 : f32 to vector<8x128xf32>
      %363 = arith.addf %362, %361 : vector<8x128xf32>
      %364 = arith.divf %362, %363 : vector<8x128xf32>
      %365 = vector.extract_strided_slice %353 {offsets = [0, 128], sizes = [8, 128], strides = [1, 1]} : vector<8x384xf32> to vector<8x128xf32>
      %366 = vector.extract_strided_slice %356 {offsets = [0, 128], sizes = [8, 128], strides = [1, 1]} : vector<8x384xf32> to vector<8x128xf32>
      %367 = arith.addf %365, %366 : vector<8x128xf32>
      %368 = arith.negf %367 : vector<8x128xf32>
      %369 = math.exp %368 : vector<8x128xf32>
      %cst_106 = arith.constant 1.000000e+00 : f32
      %370 = vector.broadcast %cst_106 : f32 to vector<8x128xf32>
      %371 = arith.addf %370, %369 : vector<8x128xf32>
      %372 = arith.divf %370, %371 : vector<8x128xf32>
      %373 = vector.extract_strided_slice %353 {offsets = [0, 256], sizes = [8, 128], strides = [1, 1]} : vector<8x384xf32> to vector<8x128xf32>
      %374 = vector.extract_strided_slice %356 {offsets = [0, 256], sizes = [8, 128], strides = [1, 1]} : vector<8x384xf32> to vector<8x128xf32>
      %375 = arith.mulf %364, %374 : vector<8x128xf32>
      %376 = arith.addf %373, %375 : vector<8x128xf32>
      %377 = math.tanh %376 : vector<8x128xf32>
      %cst_107 = arith.constant 1.000000e+00 : f32
      %378 = vector.broadcast %cst_107 : f32 to vector<8x128xf32>
      %379 = arith.subf %378, %372 : vector<8x128xf32>
      %380 = arith.mulf %379, %377 : vector<8x128xf32>
      %381 = arith.mulf %372, %351 : vector<8x128xf32>
      %382 = arith.addf %380, %381 : vector<8x128xf32>
      %c56 = arith.constant 56 : index
      %c0_108 = arith.constant 0 : index
      %383 = vector.load %arg22[%c56, %c0_108] : memref<64x128xf32, #tpu.memory_space<vmem>>, vector<8x128xf32>
      tpu.vector_store %arg22[%c56, %c0_108], %382 {strides = array<i32>} : memref<64x128xf32, #tpu.memory_space<vmem>>, vector<8x128xf32>,
      %c2_109 = arith.constant 2 : index
      %c0_110 = arith.constant 0 : index
      %c0_111 = arith.constant 0 : index
      %384 = vector.load %arg12[%c2_109, %c0_110, %c0_111] : memref<3x128x384xbf16, #tpu.memory_space<vmem>>, vector<1x128x384xbf16>
      %385 = vector.shape_cast %384 : vector<1x128x384xbf16> to vector<128x384xbf16>
      %c2_112 = arith.constant 2 : index
      %c0_113 = arith.constant 0 : index
      %c0_114 = arith.constant 0 : index
      %386 = vector.load %arg13[%c2_112, %c0_113, %c0_114] : memref<3x128x384xbf16, #tpu.memory_space<vmem>>, vector<1x128x384xbf16>
      %387 = vector.shape_cast %386 : vector<1x128x384xbf16> to vector<128x384xbf16>
      %388 = arith.truncf %9 : vector<16x128xf32> to vector<16x128xbf16>
      %cst_115 = arith.constant dense<0.000000e+00> : vector<16x384xf32>
      %389 = tpu.matmul %388, %385, %cst_115 {dimension_numbers = #tpu.dot_dimension_numbers<[1], [0], [0], [1], [0, 0, 1, 1], [], []>} : vector<16x128xbf16>, vector<128x384xbf16>, vector<16x384xf32> -> vector<16x384xf32>
      %c2_116 = arith.constant 2 : index
      %c0_117 = arith.constant 0 : index
      %c0_118 = arith.constant 0 : index
      %390 = vector.load %arg14[%c2_116, %c0_117, %c0_118] : memref<3x1x384xf32, #tpu.memory_space<vmem>>, vector<1x1x384xf32>
      %391 = vector.shape_cast %390 : vector<1x1x384xf32> to vector<1x384xf32>
      %392 = vector.broadcast %391 : vector<1x384xf32> to vector<16x384xf32>
      %393 = arith.addf %389, %392 : vector<16x384xf32>
      %c2_119 = arith.constant 2 : index
      %c0_120 = arith.constant 0 : index
      %c0_121 = arith.constant 0 : index
      %394 = vector.load %arg15[%c2_119, %c0_120, %c0_121] : memref<3x1x384xf32, #tpu.memory_space<vmem>>, vector<1x1x384xf32>
      %395 = vector.shape_cast %394 : vector<1x1x384xf32> to vector<1x384xf32>
      %396 = vector.shape_cast %395 : vector<1x384xf32> to vector<1x384xf32>
      %397 = vector.broadcast %396 : vector<1x384xf32> to vector<8x384xf32>
      %398 = vector.extract_strided_slice %393 {offsets = [0, 0], sizes = [8, 384], strides = [1, 1]} : vector<16x384xf32> to vector<8x384xf32>
      %399 = arith.truncf %120 : vector<8x128xf32> to vector<8x128xbf16>
      %cst_122 = arith.constant dense<0.000000e+00> : vector<8x384xf32>
      %400 = tpu.matmul %399, %387, %cst_122 {dimension_numbers = #tpu.dot_dimension_numbers<[1], [0], [0], [1], [0, 0, 1, 1], [], []>} : vector<8x128xbf16>, vector<128x384xbf16>, vector<8x384xf32> -> vector<8x384xf32>
      %401 = arith.addf %400, %397 : vector<8x384xf32>
      %402 = vector.extract_strided_slice %398 {offsets = [0, 0], sizes = [8, 128], strides = [1, 1]} : vector<8x384xf32> to vector<8x128xf32>
      %403 = vector.extract_strided_slice %401 {offsets = [0, 0], sizes = [8, 128], strides = [1, 1]} : vector<8x384xf32> to vector<8x128xf32>
      %404 = arith.addf %402, %403 : vector<8x128xf32>
      %405 = arith.negf %404 : vector<8x128xf32>
      %406 = math.exp %405 : vector<8x128xf32>
      %cst_123 = arith.constant 1.000000e+00 : f32
      %407 = vector.broadcast %cst_123 : f32 to vector<8x128xf32>
      %408 = arith.addf %407, %406 : vector<8x128xf32>
      %409 = arith.divf %407, %408 : vector<8x128xf32>
      %410 = vector.extract_strided_slice %398 {offsets = [0, 128], sizes = [8, 128], strides = [1, 1]} : vector<8x384xf32> to vector<8x128xf32>
      %411 = vector.extract_strided_slice %401 {offsets = [0, 128], sizes = [8, 128], strides = [1, 1]} : vector<8x384xf32> to vector<8x128xf32>
      %412 = arith.addf %410, %411 : vector<8x128xf32>
      %413 = arith.negf %412 : vector<8x128xf32>
      %414 = math.exp %413 : vector<8x128xf32>
      %cst_124 = arith.constant 1.000000e+00 : f32
      %415 = vector.broadcast %cst_124 : f32 to vector<8x128xf32>
      %416 = arith.addf %415, %414 : vector<8x128xf32>
      %417 = arith.divf %415, %416 : vector<8x128xf32>
      %418 = vector.extract_strided_slice %398 {offsets = [0, 256], sizes = [8, 128], strides = [1, 1]} : vector<8x384xf32> to vector<8x128xf32>
      %419 = vector.extract_strided_slice %401 {offsets = [0, 256], sizes = [8, 128], strides = [1, 1]} : vector<8x384xf32> to vector<8x128xf32>
      %420 = arith.mulf %409, %419 : vector<8x128xf32>
      %421 = arith.addf %418, %420 : vector<8x128xf32>
      %422 = math.tanh %421 : vector<8x128xf32>
      %cst_125 = arith.constant 1.000000e+00 : f32
      %423 = vector.broadcast %cst_125 : f32 to vector<8x128xf32>
      %424 = arith.subf %423, %417 : vector<8x128xf32>
      %425 = arith.mulf %424, %422 : vector<8x128xf32>
      %426 = arith.mulf %417, %120 : vector<8x128xf32>
      %427 = arith.addf %425, %426 : vector<8x128xf32>
      %c0_126 = arith.constant 0 : index
      %c0_127 = arith.constant 0 : index
      %428 = vector.load %arg23[%c0_126, %c0_127] : memref<16x128xf32, #tpu.memory_space<vmem>>, vector<8x128xf32>
      tpu.vector_store %arg23[%c0_126, %c0_127], %427 {strides = array<i32>} : memref<16x128xf32, #tpu.memory_space<vmem>>, vector<8x128xf32>,
      %429 = vector.extract_strided_slice %393 {offsets = [8, 0], sizes = [8, 384], strides = [1, 1]} : vector<16x384xf32> to vector<8x384xf32>
      %430 = arith.truncf %427 : vector<8x128xf32> to vector<8x128xbf16>
      %cst_128 = arith.constant dense<0.000000e+00> : vector<8x384xf32>
      %431 = tpu.matmul %430, %387, %cst_128 {dimension_numbers = #tpu.dot_dimension_numbers<[1], [0], [0], [1], [0, 0, 1, 1], [], []>} : vector<8x128xbf16>, vector<128x384xbf16>, vector<8x384xf32> -> vector<8x384xf32>
      %432 = arith.addf %431, %397 : vector<8x384xf32>
      %433 = vector.extract_strided_slice %429 {offsets = [0, 0], sizes = [8, 128], strides = [1, 1]} : vector<8x384xf32> to vector<8x128xf32>
      %434 = vector.extract_strided_slice %432 {offsets = [0, 0], sizes = [8, 128], strides = [1, 1]} : vector<8x384xf32> to vector<8x128xf32>
      %435 = arith.addf %433, %434 : vector<8x128xf32>
      %436 = arith.negf %435 : vector<8x128xf32>
      %437 = math.exp %436 : vector<8x128xf32>
      %cst_129 = arith.constant 1.000000e+00 : f32
      %438 = vector.broadcast %cst_129 : f32 to vector<8x128xf32>
      %439 = arith.addf %438, %437 : vector<8x128xf32>
      %440 = arith.divf %438, %439 : vector<8x128xf32>
      %441 = vector.extract_strided_slice %429 {offsets = [0, 128], sizes = [8, 128], strides = [1, 1]} : vector<8x384xf32> to vector<8x128xf32>
      %442 = vector.extract_strided_slice %432 {offsets = [0, 128], sizes = [8, 128], strides = [1, 1]} : vector<8x384xf32> to vector<8x128xf32>
      %443 = arith.addf %441, %442 : vector<8x128xf32>
      %444 = arith.negf %443 : vector<8x128xf32>
      %445 = math.exp %444 : vector<8x128xf32>
      %cst_130 = arith.constant 1.000000e+00 : f32
      %446 = vector.broadcast %cst_130 : f32 to vector<8x128xf32>
      %447 = arith.addf %446, %445 : vector<8x128xf32>
      %448 = arith.divf %446, %447 : vector<8x128xf32>
      %449 = vector.extract_strided_slice %429 {offsets = [0, 256], sizes = [8, 128], strides = [1, 1]} : vector<8x384xf32> to vector<8x128xf32>
      %450 = vector.extract_strided_slice %432 {offsets = [0, 256], sizes = [8, 128], strides = [1, 1]} : vector<8x384xf32> to vector<8x128xf32>
      %451 = arith.mulf %440, %450 : vector<8x128xf32>
      %452 = arith.addf %449, %451 : vector<8x128xf32>
      %453 = math.tanh %452 : vector<8x128xf32>
      %cst_131 = arith.constant 1.000000e+00 : f32
      %454 = vector.broadcast %cst_131 : f32 to vector<8x128xf32>
      %455 = arith.subf %454, %448 : vector<8x128xf32>
      %456 = arith.mulf %455, %453 : vector<8x128xf32>
      %457 = arith.mulf %448, %427 : vector<8x128xf32>
      %458 = arith.addf %456, %457 : vector<8x128xf32>
      %c8_132 = arith.constant 8 : index
      %c0_133 = arith.constant 0 : index
      %459 = vector.load %arg23[%c8_132, %c0_133] : memref<16x128xf32, #tpu.memory_space<vmem>>, vector<8x128xf32>
      tpu.vector_store %arg23[%c8_132, %c0_133], %458 {strides = array<i32>} : memref<16x128xf32, #tpu.memory_space<vmem>>, vector<8x128xf32>,
      %c0_134 = arith.constant 0 : index
      %c0_135 = arith.constant 0 : index
      %460 = vector.load %arg22[%c0_134, %c0_135] : memref<64x128xf32, #tpu.memory_space<vmem>>, vector<64x128xf32>
      %c0_136 = arith.constant 0 : index
      %c0_137 = arith.constant 0 : index
      %c0_138 = arith.constant 0 : index
      %461 = vector.load %arg18[%c0_136, %c0_137, %c0_138] : memref<2x128x128xbf16, #tpu.memory_space<vmem>>, vector<1x128x128xbf16>
      %462 = vector.shape_cast %461 : vector<1x128x128xbf16> to vector<128x128xbf16>
      %463 = arith.truncf %460 : vector<64x128xf32> to vector<64x128xbf16>
      %cst_139 = arith.constant dense<0.000000e+00> : vector<64x128xf32>
      %464 = tpu.matmul %463, %462, %cst_139 {dimension_numbers = #tpu.dot_dimension_numbers<[1], [0], [0], [1], [0, 0, 1, 1], [], []>} : vector<64x128xbf16>, vector<128x128xbf16>, vector<64x128xf32> -> vector<64x128xf32>
      %c0_140 = arith.constant 0 : index
      %c0_141 = arith.constant 0 : index
      %c0_142 = arith.constant 0 : index
      %465 = vector.load %arg19[%c0_140, %c0_141, %c0_142] : memref<2x1x128xf32, #tpu.memory_space<vmem>>, vector<1x1x128xf32>
      %466 = vector.shape_cast %465 : vector<1x1x128xf32> to vector<1x128xf32>
      %467 = vector.broadcast %466 : vector<1x128xf32> to vector<64x128xf32>
      %468 = arith.addf %464, %467 : vector<64x128xf32>
      %c0_143 = arith.constant 0 : index
      %c0_144 = arith.constant 0 : index
      %469 = vector.load %arg10[%c0_143, %c0_144] : memref<64x1xi32, #tpu.memory_space<vmem>>, vector<64x1xi32>
      %cst_145 = arith.constant dense<0xFF800000> : vector<64xf32>
      %470 = vector.multi_reduction <maximumf>, %468, %cst_145 [1] : vector<64x128xf32> to vector<64xf32>
      %471 = vector.shape_cast %470 : vector<64xf32> to vector<64x1xf32>
      %472 = vector.broadcast %471 : vector<64x1xf32> to vector<64x128xf32>
      %473 = arith.subf %468, %472 : vector<64x128xf32>
      %474 = math.exp %473 : vector<64x128xf32>
      %cst_146 = arith.constant dense<0.000000e+00> : vector<64xf32>
      %475 = vector.multi_reduction <add>, %474, %cst_146 [1] : vector<64x128xf32> to vector<64xf32>
      %476 = vector.shape_cast %475 : vector<64xf32> to vector<64x1xf32>
      %cst_147 = arith.constant 0.000000e+00 : f32
      %477 = vector.broadcast %cst_147 : f32 to vector<64x1xf32>
      %478 = arith.subf %477, %471 : vector<64x1xf32>
      %479 = math.exp %478 : vector<64x1xf32>
      %cst_148 = arith.constant 9.99999997E-7 : f32
      %480 = vector.broadcast %cst_148 : f32 to vector<64x1xf32>
      %481 = arith.mulf %480, %479 : vector<64x1xf32>
      %482 = arith.addf %476, %481 : vector<64x1xf32>
      %483 = math.log %482 : vector<64x1xf32>
      %484 = arith.addf %471, %483 : vector<64x1xf32>
      %485 = tpu.iota {dimensions = array<i32: 1>} : vector<64x128xi32>
      %486 = vector.broadcast %469 : vector<64x1xi32> to vector<64x128xi32>
      %487 = arith.cmpi eq, %485, %486 : vector<64x128xi32>
      %cst_149 = arith.constant 0.000000e+00 : f32
      %488 = vector.broadcast %cst_149 : f32 to vector<64x128xf32>
      %489 = arith.select %487, %468, %488 : vector<64x128xi1>, vector<64x128xf32>
      %cst_150 = arith.constant dense<0.000000e+00> : vector<64xf32>
      %490 = vector.multi_reduction <add>, %489, %cst_150 [1] : vector<64x128xf32> to vector<64xf32>
      %491 = vector.shape_cast %490 : vector<64xf32> to vector<64x1xf32>
      %492 = arith.subf %484, %491 : vector<64x1xf32>
      %c15_i32 = arith.constant 15 : i32
      %493 = vector.broadcast %c15_i32 : i32 to vector<64x1xi32>
      %494 = arith.cmpi eq, %469, %493 : vector<64x1xi32>
      %cst_151 = arith.constant 0.000000e+00 : f32
      %495 = vector.broadcast %cst_151 : f32 to vector<64x1xf32>
      %496 = arith.select %494, %495, %492 : vector<64x1xi1>, vector<64x1xf32>
      %497 = vector.extract_strided_slice %496 {offsets = [0, 0], sizes = [8, 1], strides = [1, 1]} : vector<64x1xf32> to vector<8x1xf32>
      %498 = vector.extract_strided_slice %496 {offsets = [8, 0], sizes = [8, 1], strides = [1, 1]} : vector<64x1xf32> to vector<8x1xf32>
      %499 = arith.addf %497, %498 : vector<8x1xf32>
      %500 = vector.extract_strided_slice %496 {offsets = [16, 0], sizes = [8, 1], strides = [1, 1]} : vector<64x1xf32> to vector<8x1xf32>
      %501 = arith.addf %499, %500 : vector<8x1xf32>
      %502 = vector.extract_strided_slice %496 {offsets = [24, 0], sizes = [8, 1], strides = [1, 1]} : vector<64x1xf32> to vector<8x1xf32>
      %503 = arith.addf %501, %502 : vector<8x1xf32>
      %504 = vector.extract_strided_slice %496 {offsets = [32, 0], sizes = [8, 1], strides = [1, 1]} : vector<64x1xf32> to vector<8x1xf32>
      %505 = arith.addf %503, %504 : vector<8x1xf32>
      %506 = vector.extract_strided_slice %496 {offsets = [40, 0], sizes = [8, 1], strides = [1, 1]} : vector<64x1xf32> to vector<8x1xf32>
      %507 = arith.addf %505, %506 : vector<8x1xf32>
      %508 = vector.extract_strided_slice %496 {offsets = [48, 0], sizes = [8, 1], strides = [1, 1]} : vector<64x1xf32> to vector<8x1xf32>
      %509 = arith.addf %507, %508 : vector<8x1xf32>
      %510 = vector.extract_strided_slice %496 {offsets = [56, 0], sizes = [8, 1], strides = [1, 1]} : vector<64x1xf32> to vector<8x1xf32>
      %511 = arith.addf %509, %510 : vector<8x1xf32>
      %c0_152 = arith.constant 0 : index
      %c0_153 = arith.constant 0 : index
      %512 = vector.load %arg23[%c0_152, %c0_153] : memref<16x128xf32, #tpu.memory_space<vmem>>, vector<16x128xf32>
      %c1_154 = arith.constant 1 : index
      %c0_155 = arith.constant 0 : index
      %c0_156 = arith.constant 0 : index
      %513 = vector.load %arg18[%c1_154, %c0_155, %c0_156] : memref<2x128x128xbf16, #tpu.memory_space<vmem>>, vector<1x128x128xbf16>
      %514 = vector.shape_cast %513 : vector<1x128x128xbf16> to vector<128x128xbf16>
      %515 = arith.truncf %512 : vector<16x128xf32> to vector<16x128xbf16>
      %cst_157 = arith.constant dense<0.000000e+00> : vector<16x128xf32>
      %516 = tpu.matmul %515, %514, %cst_157 {dimension_numbers = #tpu.dot_dimension_numbers<[1], [0], [0], [1], [0, 0, 1, 1], [], []>} : vector<16x128xbf16>, vector<128x128xbf16>, vector<16x128xf32> -> vector<16x128xf32>
      %c1_158 = arith.constant 1 : index
      %c0_159 = arith.constant 0 : index
      %c0_160 = arith.constant 0 : index
      %517 = vector.load %arg19[%c1_158, %c0_159, %c0_160] : memref<2x1x128xf32, #tpu.memory_space<vmem>>, vector<1x1x128xf32>
      %518 = vector.shape_cast %517 : vector<1x1x128xf32> to vector<1x128xf32>
      %519 = vector.broadcast %518 : vector<1x128xf32> to vector<16x128xf32>
      %520 = arith.addf %516, %519 : vector<16x128xf32>
      %c0_161 = arith.constant 0 : index
      %c0_162 = arith.constant 0 : index
      %521 = vector.load %arg11[%c0_161, %c0_162] : memref<16x1xi32, #tpu.memory_space<vmem>>, vector<16x1xi32>
      %cst_163 = arith.constant dense<0xFF800000> : vector<16xf32>
      %522 = vector.multi_reduction <maximumf>, %520, %cst_163 [1] : vector<16x128xf32> to vector<16xf32>
      %523 = vector.shape_cast %522 : vector<16xf32> to vector<16x1xf32>
      %524 = vector.broadcast %523 : vector<16x1xf32> to vector<16x128xf32>
      %525 = arith.subf %520, %524 : vector<16x128xf32>
      %526 = math.exp %525 : vector<16x128xf32>
      %cst_164 = arith.constant dense<0.000000e+00> : vector<16xf32>
      %527 = vector.multi_reduction <add>, %526, %cst_164 [1] : vector<16x128xf32> to vector<16xf32>
      %528 = vector.shape_cast %527 : vector<16xf32> to vector<16x1xf32>
      %cst_165 = arith.constant 0.000000e+00 : f32
      %529 = vector.broadcast %cst_165 : f32 to vector<16x1xf32>
      %530 = arith.subf %529, %523 : vector<16x1xf32>
      %531 = math.exp %530 : vector<16x1xf32>
      %cst_166 = arith.constant 9.99999997E-7 : f32
      %532 = vector.broadcast %cst_166 : f32 to vector<16x1xf32>
      %533 = arith.mulf %532, %531 : vector<16x1xf32>
      %534 = arith.addf %528, %533 : vector<16x1xf32>
      %535 = math.log %534 : vector<16x1xf32>
      %536 = arith.addf %523, %535 : vector<16x1xf32>
      %537 = tpu.iota {dimensions = array<i32: 1>} : vector<16x128xi32>
      %538 = vector.broadcast %521 : vector<16x1xi32> to vector<16x128xi32>
      %539 = arith.cmpi eq, %537, %538 : vector<16x128xi32>
      %cst_167 = arith.constant 0.000000e+00 : f32
      %540 = vector.broadcast %cst_167 : f32 to vector<16x128xf32>
      %541 = arith.select %539, %520, %540 : vector<16x128xi1>, vector<16x128xf32>
      %cst_168 = arith.constant dense<0.000000e+00> : vector<16xf32>
      %542 = vector.multi_reduction <add>, %541, %cst_168 [1] : vector<16x128xf32> to vector<16xf32>
      %543 = vector.shape_cast %542 : vector<16xf32> to vector<16x1xf32>
      %544 = arith.subf %536, %543 : vector<16x1xf32>
      %c15_i32_169 = arith.constant 15 : i32
      %545 = vector.broadcast %c15_i32_169 : i32 to vector<16x1xi32>
      %546 = arith.cmpi eq, %521, %545 : vector<16x1xi32>
      %cst_170 = arith.constant 0.000000e+00 : f32
      %547 = vector.broadcast %cst_170 : f32 to vector<16x1xf32>
      %548 = arith.select %546, %547, %544 : vector<16x1xi1>, vector<16x1xf32>
      %cst_171 = arith.constant 1.000000e-01 : f32
      %549 = vector.broadcast %cst_171 : f32 to vector<16x1xf32>
      %550 = arith.mulf %549, %548 : vector<16x1xf32>
      %551 = vector.extract_strided_slice %550 {offsets = [0, 0], sizes = [8, 1], strides = [1, 1]} : vector<16x1xf32> to vector<8x1xf32>
      %552 = vector.extract_strided_slice %550 {offsets = [8, 0], sizes = [8, 1], strides = [1, 1]} : vector<16x1xf32> to vector<8x1xf32>
      %553 = arith.addf %551, %552 : vector<8x1xf32>
      %554 = tpu.iota {dimensions = array<i32: 0>} : vector<8x1xi32>
      %c2_i32 = arith.constant 2 : i32
      %555 = vector.broadcast %c2_i32 : i32 to vector<8x1xi32>
      %556 = arith.cmpi slt, %554, %555 : vector<8x1xi32>
      %cst_172 = arith.constant 0.000000e+00 : f32
      %557 = vector.broadcast %cst_172 : f32 to vector<8x1xf32>
      %558 = arith.select %556, %553, %557 : vector<8x1xi1>, vector<8x1xf32>
      %cst_173 = arith.constant dense<0.000000e+00> : vector<1xf32>
      %559 = vector.multi_reduction <add>, %558, %cst_173 [0] : vector<8x1xf32> to vector<1xf32>
      %560 = vector.shape_cast %559 : vector<1xf32> to vector<1x1xf32>
      %cst_174 = arith.constant 2.500000e-01 : f32
      %561 = vector.broadcast %cst_174 : f32 to vector<1x1xf32>
      %562 = arith.mulf %560, %561 : vector<1x1xf32>
      %c0_i32_175 = arith.constant 0 : i32
      %563 = vector.broadcast %c0_i32_175 : i32 to vector<8x128xi32>
      %564 = arith.cmpi eq, %0, %563 : vector<8x128xi32>
      %cst_176 = arith.constant 0.000000e+00 : f32
      %565 = vector.shape_cast %511 : vector<8x1xf32> to vector<8x1xf32>
      %566 = vector.broadcast %565 : vector<8x1xf32> to vector<8x128xf32>
      %567 = vector.broadcast %cst_176 : f32 to vector<8x128xf32>
      %568 = arith.select %564, %566, %567 : vector<8x128xi1>, vector<8x128xf32>
      %c1_i32_177 = arith.constant 1 : i32
      %569 = vector.broadcast %c1_i32_177 : i32 to vector<8x128xi32>
      %570 = arith.cmpi eq, %0, %569 : vector<8x128xi32>
      %cst_178 = arith.constant 0.000000e+00 : f32
      %571 = vector.shape_cast %112 : vector<8x1xf32> to vector<8x1xf32>
      %572 = vector.broadcast %571 : vector<8x1xf32> to vector<8x128xf32>
      %573 = vector.broadcast %cst_178 : f32 to vector<8x128xf32>
      %574 = arith.select %570, %572, %573 : vector<8x128xi1>, vector<8x128xf32>
      %575 = arith.addf %568, %574 : vector<8x128xf32>
      %c2_i32_179 = arith.constant 2 : i32
      %576 = vector.broadcast %c2_i32_179 : i32 to vector<8x128xi32>
      %577 = arith.cmpi eq, %0, %576 : vector<8x128xi32>
      %cst_180 = arith.constant 0.000000e+00 : f32
      %578 = vector.shape_cast %562 : vector<1x1xf32> to vector<1x1xf32>
      %579 = vector.broadcast %578 : vector<1x1xf32> to vector<8x128xf32>
      %580 = vector.broadcast %cst_180 : f32 to vector<8x128xf32>
      %581 = arith.select %577, %579, %580 : vector<8x128xi1>, vector<8x128xf32>
      %582 = arith.addf %575, %581 : vector<8x128xf32>
      %c0_181 = arith.constant 0 : index
      %c0_182 = arith.constant 0 : index
      %583 = vector.load %arg20[%c0_181, %c0_182] : memref<8x128xf32, #tpu.memory_space<vmem>>, vector<8x128xf32>
      tpu.vector_store %arg20[%c0_181, %c0_182], %582 {strides = array<i32>} : memref<8x128xf32, #tpu.memory_space<vmem>>, vector<8x128xf32>,
    } else {
    }
    return
  }
  func.func @transform_0(%arg0: i32) -> (i32, i32) {
    %c0_i32 = arith.constant 0 : i32
    %c0_i32_0 = arith.constant 0 : i32
    %c0_i32_1 = arith.constant 0 : i32
    return %c0_i32, %c0_i32_0 : i32, i32
  }
  func.func @transform_1(%arg0: i32) -> (i32, i32) {
    %c0_i32 = arith.constant 0 : i32
    %c0_i32_0 = arith.constant 0 : i32
    %c0_i32_1 = arith.constant 0 : i32
    return %c0_i32, %c0_i32_0 : i32, i32
  }
  func.func @transform_2(%arg0: i32) -> (i32, i32) {
    %c0_i32 = arith.constant 0 : i32
    %c0_i32_0 = arith.constant 0 : i32
    %c0_i32_1 = arith.constant 0 : i32
    return %c0_i32, %c0_i32_0 : i32, i32
  }
  func.func @transform_3(%arg0: i32) -> (i32, i32, i32) {
    %c0_i32 = arith.constant 0 : i32
    %c0_i32_0 = arith.constant 0 : i32
    %c0_i32_1 = arith.constant 0 : i32
    %c0_i32_2 = arith.constant 0 : i32
    return %c0_i32, %c0_i32_0, %c0_i32_1 : i32, i32, i32
  }
  func.func @transform_4(%arg0: i32) -> (i32, i32, i32) {
    %c0_i32 = arith.constant 0 : i32
    %c0_i32_0 = arith.constant 0 : i32
    %c0_i32_1 = arith.constant 0 : i32
    %c0_i32_2 = arith.constant 0 : i32
    return %c0_i32, %c0_i32_0, %c0_i32_1 : i32, i32, i32
  }
  func.func @transform_5(%arg0: i32) -> (i32, i32) {
    %c0_i32 = arith.constant 0 : i32
    %c0_i32_0 = arith.constant 0 : i32
    %c0_i32_1 = arith.constant 0 : i32
    return %c0_i32, %c0_i32_0 : i32, i32
  }
  func.func @transform_6(%arg0: i32) -> (i32, i32) {
    %c0_i32 = arith.constant 0 : i32
    %c0_i32_0 = arith.constant 0 : i32
    %c0_i32_1 = arith.constant 0 : i32
    return %c0_i32, %c0_i32_0 : i32, i32
  }
  func.func @transform_7(%arg0: i32) -> (i32, i32) {
    %c0_i32 = arith.constant 0 : i32
    %c0_i32_0 = arith.constant 0 : i32
    %c0_i32_1 = arith.constant 0 : i32
    return %c0_i32, %c0_i32_0 : i32, i32
  }
  func.func @transform_8(%arg0: i32) -> (i32, i32) {
    %c0_i32 = arith.constant 0 : i32
    %c0_i32_0 = arith.constant 0 : i32
    %c0_i32_1 = arith.constant 0 : i32
    return %c0_i32, %c0_i32_0 : i32, i32
  }
  func.func @transform_9(%arg0: i32) -> (i32, i32) {
    %c0_i32 = arith.constant 0 : i32
    %c0_i32_0 = arith.constant 0 : i32
    %c0_i32_1 = arith.constant 0 : i32
    return %c0_i32, %c0_i32_0 : i32, i32
  }
  func.func @transform_10(%arg0: i32) -> (i32, i32) {
    %c0_i32 = arith.constant 0 : i32
    %c0_i32_0 = arith.constant 0 : i32
    %c0_i32_1 = arith.constant 0 : i32
    return %c0_i32, %c0_i32_0 : i32, i32
  }
  func.func @transform_11(%arg0: i32) -> (i32, i32, i32) {
    %c0_i32 = arith.constant 0 : i32
    %c0_i32_0 = arith.constant 0 : i32
    %c0_i32_1 = arith.constant 0 : i32
    %c0_i32_2 = arith.constant 0 : i32
    return %c0_i32, %c0_i32_0, %c0_i32_1 : i32, i32, i32
  }
  func.func @transform_12(%arg0: i32) -> (i32, i32, i32) {
    %c0_i32 = arith.constant 0 : i32
    %c0_i32_0 = arith.constant 0 : i32
    %c0_i32_1 = arith.constant 0 : i32
    %c0_i32_2 = arith.constant 0 : i32
    return %c0_i32, %c0_i32_0, %c0_i32_1 : i32, i32, i32
  }
  func.func @transform_13(%arg0: i32) -> (i32, i32, i32) {
    %c0_i32 = arith.constant 0 : i32
    %c0_i32_0 = arith.constant 0 : i32
    %c0_i32_1 = arith.constant 0 : i32
    %c0_i32_2 = arith.constant 0 : i32
    return %c0_i32, %c0_i32_0, %c0_i32_1 : i32, i32, i32
  }
  func.func @transform_14(%arg0: i32) -> (i32, i32, i32) {
    %c0_i32 = arith.constant 0 : i32
    %c0_i32_0 = arith.constant 0 : i32
    %c0_i32_1 = arith.constant 0 : i32
    %c0_i32_2 = arith.constant 0 : i32
    return %c0_i32, %c0_i32_0, %c0_i32_1 : i32, i32, i32
  }
  func.func @transform_15(%arg0: i32) -> (i32, i32, i32) {
    %c0_i32 = arith.constant 0 : i32
    %c0_i32_0 = arith.constant 0 : i32
    %c0_i32_1 = arith.constant 0 : i32
    %c0_i32_2 = arith.constant 0 : i32
    return %c0_i32, %c0_i32_0, %c0_i32_1 : i32, i32, i32
  }
  func.func @transform_16(%arg0: i32) -> (i32, i32, i32) {
    %c0_i32 = arith.constant 0 : i32
    %c0_i32_0 = arith.constant 0 : i32
    %c0_i32_1 = arith.constant 0 : i32
    %c0_i32_2 = arith.constant 0 : i32
    return %c0_i32, %c0_i32_0, %c0_i32_1 : i32, i32, i32
  }
  func.func @transform_17(%arg0: i32) -> (i32, i32, i32) {
    %c0_i32 = arith.constant 0 : i32
    %c0_i32_0 = arith.constant 0 : i32
    %c0_i32_1 = arith.constant 0 : i32
    %c0_i32_2 = arith.constant 0 : i32
    return %c0_i32, %c0_i32_0, %c0_i32_1 : i32, i32, i32
  }
  func.func @transform_18(%arg0: i32) -> (i32, i32, i32) {
    %c0_i32 = arith.constant 0 : i32
    %c0_i32_0 = arith.constant 0 : i32
    %c0_i32_1 = arith.constant 0 : i32
    %c0_i32_2 = arith.constant 0 : i32
    return %c0_i32, %c0_i32_0, %c0_i32_1 : i32, i32, i32
  }
  func.func @transform_19(%arg0: i32) -> (i32, i32) {
    %c0_i32 = arith.constant 0 : i32
    %c0_i32_0 = arith.constant 0 : i32
    return %arg0, %c0_i32 : i32, i32
  }
}

</mosaic_0001>

<llo_original>
// kernel: model_forward.1
$region0: #{model_forward.1}
  #allocation0 [shape = 'u32[]', space=smem, size = 0x4, offset = 0x4, fixed_abs, tag = 'smem constant byte address 0x4 - core index']
  #allocation1 [shape = 'u32[144,128]{1,0:T(1,128)}', space=vmem, size = 0x12000, scoped, tag = 'internal scratch']
  #allocation2 [shape = 'f32[16,128]{1,0:T(8,128)}', space=vmem, size = 0x2000, scoped, tag = 'scratch operand']
  #allocation3 [shape = 'f32[64,128]{1,0:T(8,128)}', space=vmem, size = 0x8000, scoped, tag = 'scratch operand']
  #allocation4 [shape = 'f32[16,128]{1,0:T(8,128)}', space=vmem, size = 0x2000, scoped, tag = 'scratch operand']
  %s0 = inlined_call_operand.vmem [shape: f32[56,128], index: 0, kind: input, shape index: {}]
  %s1 = inlined_call_operand.vmem [shape: s32[56,1], index: 1, kind: input, shape index: {}]
  %s2 = inlined_call_operand.vmem [shape: f32[56,1], index: 2, kind: input, shape index: {}]
  %s3 = inlined_call_operand.vmem [shape: bf16[3,128,128], index: 3, kind: input, shape index: {}]
  %s4 = inlined_call_operand.vmem [shape: f32[3,1,128], index: 4, kind: input, shape index: {}]
  %s5 = inlined_call_operand.vmem [shape: bf16[128,128], index: 5, kind: input, shape index: {}]
  %s6 = inlined_call_operand.vmem [shape: f32[1,128], index: 6, kind: input, shape index: {}]
  %s7 = inlined_call_operand.vmem [shape: f32[16,128], index: 7, kind: input, shape index: {}]
  %s8 = inlined_call_operand.vmem [shape: f32[64,128], index: 8, kind: input, shape index: {}]
  %s9 = inlined_call_operand.vmem [shape: s32[64,1], index: 9, kind: input, shape index: {}]
  %s10 = inlined_call_operand.vmem [shape: s32[16,1], index: 10, kind: input, shape index: {}]
  %s11 = inlined_call_operand.vmem [shape: bf16[3,128,384], index: 11, kind: input, shape index: {}]
  %s12 = inlined_call_operand.vmem [shape: bf16[3,128,384], index: 12, kind: input, shape index: {}]
  %s13 = inlined_call_operand.vmem [shape: f32[3,1,384], index: 13, kind: input, shape index: {}]
  %s14 = inlined_call_operand.vmem [shape: f32[3,1,384], index: 14, kind: input, shape index: {}]
  %s15 = inlined_call_operand.vmem [shape: bf16[3,128,128], index: 15, kind: input, shape index: {}]
  %s16 = inlined_call_operand.vmem [shape: f32[3,1,128], index: 16, kind: input, shape index: {}]
  %s17 = inlined_call_operand.vmem [shape: bf16[2,128,128], index: 17, kind: input, shape index: {}]
  %s18 = inlined_call_operand.vmem [shape: f32[2,1,128], index: 18, kind: input, shape index: {}]
  %s19 = inlined_call_operand.vmem [shape: f32[16,128], index: 19, kind: output, shape index: {}]
  %s20 = sld [smem:[#allocation0]]
  $region117: #{model_forward.1} parent=0
    _
  %s22 = ssub.s32 1, %s20
  %s23 = scalar_select 0, %s22, %s20
  loop: start=0, step=1, limit=4
  $region2: #{model_forward.1} parent=0 // loop_pre_header
    _
  $region3: #{model_forward.1} parent=0 // loop_header
    %s25 = sphi 0, %s29
    %p26 = scmp.ge.s32.totalorder %s25, 4
    %s33 = sphi 0, %s33
    %s35 = sphi 0, %s33
    %s36 = sphi 0, %s35
    %s50 = sphi 0, %s36
    %s54 = sphi 0, %s54
    %s56 = sphi 0, %s54
    %s57 = sphi 0, %s56
    %s71 = sphi 0, %s57
    %s75 = sphi 0, %s75
    %s77 = sphi 0, %s75
    %s78 = sphi 0, %s77
    %s92 = sphi 0, %s78
    %s96 = sphi 0, %s96
    %s98 = sphi 0, %s96
    %s99 = sphi 0, %s98
    %s113 = sphi 0, %s99
    %s117 = sphi 0, %s117
    %s119 = sphi 0, %s117
    %s120 = sphi 0, %s119
    %s134 = sphi 0, %s120
    %s138 = sphi 0, %s138
    %s140 = sphi 0, %s138
    %s141 = sphi 0, %s140
    %s155 = sphi 0, %s141
    %s159 = sphi 0, %s159
    %s161 = sphi 0, %s159
    %s162 = sphi 0, %s161
    %s176 = sphi 0, %s162
    %s180 = sphi 0, %s180
    %s182 = sphi 0, %s180
    %s183 = sphi 0, %s182
    %s197 = sphi 0, %s183
    %s201 = sphi 0, %s201
    %s203 = sphi 0, %s201
    %s204 = sphi 0, %s203
    %s218 = sphi 0, %s204
    %s222 = sphi 0, %s222
    %s224 = sphi 0, %s222
    %s225 = sphi 0, %s224
    %s239 = sphi 0, %s225
    %s243 = sphi 0, %s243
    %s245 = sphi 0, %s243
    %s246 = sphi 0, %s245
    %s260 = sphi 0, %s246
    %s264 = sphi 0, %s264
    %s266 = sphi 0, %s264
    %s267 = sphi 0, %s266
    %s281 = sphi 0, %s267
    %s285 = sphi 0, %s285
    %s287 = sphi 0, %s285
    %s288 = sphi 0, %s287
    %s302 = sphi 0, %s288
    %s306 = sphi 0, %s306
    %s308 = sphi 0, %s306
    %s309 = sphi 0, %s308
    %s323 = sphi 0, %s309
    %s327 = sphi 0, %s327
    %s329 = sphi 0, %s327
    %s330 = sphi 0, %s329
    %s344 = sphi 0, %s330
    %s348 = sphi 0, %s348
    %s350 = sphi 0, %s348
    %s351 = sphi 0, %s350
    %s365 = sphi 0, %s351
    %s369 = sphi 0, %s369
    %s371 = sphi 0, %s369
    %s372 = sphi 0, %s371
    %s386 = sphi 0, %s372
    %s390 = sphi 0, %s390
    %s392 = sphi 0, %s390
    %s393 = sphi 0, %s392
    %s407 = sphi 0, %s393
    %s411 = sphi 0, %s411
    %s413 = sphi 0, %s411
    %s414 = sphi 0, %s413
    %s428 = sphi 0, %s414
    %s434 = sphi 0, %s436
    %s437 = sphi 0, %s434
    %s438 = sphi 0, %s437
    %s454 = sphi 0, %s438
  $region4: #{model_forward.1} parent=0 // loop_header_branch
    %28 = sbr.rel (%p26) target = $region8
  $region5: #{model_forward.1} parent=0 // loop_body
    %s30 = ssub.s32 %s25, 1
    %s31 = ssub.s32 %s25, 2
    %s32 = sadd.s32 %s25, 1
    %s34 = sadd.s32 %s33, 1
    %p37 = scmp.eq.s32.totalorder %s25, 1
    %p38 = scmp.ne.s32.totalorder %s33, %s35
    %p39 = scmp.eq.s32.totalorder %s25, 0
    %p40 = por %p38, %p39
    %p41 = scmp.ne.s32.totalorder %s33, %s35
    %p42 = scmp.eq.s32.totalorder %s30, 1
    %p43 = por %p41, %p42
    %p44 = scmp.ne.s32.totalorder %s35, %s36
    %p45 = scmp.eq.s32.totalorder %s30, 0
    %p46 = por %p44, %p45
    %p47 = scmp.ne.s32.totalorder %s35, %s36
    %p48 = scmp.eq.s32.totalorder %s31, 1
    %p49 = por %p47, %p48
    %p51 = scmp.ne.s32.totalorder %s36, %s50
    %p52 = scmp.eq.s32.totalorder %s31, 0
    %p53 = por %p51, %p52
    %s55 = sadd.s32 %s54, 1
    %p58 = scmp.eq.s32.totalorder %s25, 1
    %p59 = scmp.ne.s32.totalorder %s54, %s56
    %p60 = scmp.eq.s32.totalorder %s25, 0
    %p61 = por %p59, %p60
    %p62 = scmp.ne.s32.totalorder %s54, %s56
    %p63 = scmp.eq.s32.totalorder %s30, 1
    %p64 = por %p62, %p63
    %p65 = scmp.ne.s32.totalorder %s56, %s57
    %p66 = scmp.eq.s32.totalorder %s30, 0
    %p67 = por %p65, %p66
    %p68 = scmp.ne.s32.totalorder %s56, %s57
    %p69 = scmp.eq.s32.totalorder %s31, 1
    %p70 = por %p68, %p69
    %p72 = scmp.ne.s32.totalorder %s57, %s71
    %p73 = scmp.eq.s32.totalorder %s31, 0
    %p74 = por %p72, %p73
    %s76 = sadd.s32 %s75, 1
    %p79 = scmp.eq.s32.totalorder %s25, 1
    %p80 = scmp.ne.s32.totalorder %s75, %s77
    %p81 = scmp.eq.s32.totalorder %s25, 0
    %p82 = por %p80, %p81
    %p83 = scmp.ne.s32.totalorder %s75, %s77
    %p84 = scmp.eq.s32.totalorder %s30, 1
    %p85 = por %p83, %p84
    %p86 = scmp.ne.s32.totalorder %s77, %s78
    %p87 = scmp.eq.s32.totalorder %s30, 0
    %p88 = por %p86, %p87
    %p89 = scmp.ne.s32.totalorder %s77, %s78
    %p90 = scmp.eq.s32.totalorder %s31, 1
    %p91 = por %p89, %p90
    %p93 = scmp.ne.s32.totalorder %s78, %s92
    %p94 = scmp.eq.s32.totalorder %s31, 0
    %p95 = por %p93, %p94
    %s97 = sadd.s32 %s96, 1
    %p100 = scmp.eq.s32.totalorder %s25, 1
    %p101 = scmp.ne.s32.totalorder %s96, %s98
    %p102 = scmp.eq.s32.totalorder %s25, 0
    %p103 = por %p101, %p102
    %p104 = scmp.ne.s32.totalorder %s96, %s98
    %p105 = scmp.eq.s32.totalorder %s30, 1
    %p106 = por %p104, %p105
    %p107 = scmp.ne.s32.totalorder %s98, %s99
    %p108 = scmp.eq.s32.totalorder %s30, 0
    %p109 = por %p107, %p108
    %p110 = scmp.ne.s32.totalorder %s98, %s99
    %p111 = scmp.eq.s32.totalorder %s31, 1
    %p112 = por %p110, %p111
    %p114 = scmp.ne.s32.totalorder %s99, %s113
    %p115 = scmp.eq.s32.totalorder %s31, 0
    %p116 = por %p114, %p115
    %s118 = sadd.s32 %s117, 1
    %p121 = scmp.eq.s32.totalorder %s25, 1
    %p122 = scmp.ne.s32.totalorder %s117, %s119
    %p123 = scmp.eq.s32.totalorder %s25, 0
    %p124 = por %p122, %p123
    %p125 = scmp.ne.s32.totalorder %s117, %s119
    %p126 = scmp.eq.s32.totalorder %s30, 1
    %p127 = por %p125, %p126
    %p128 = scmp.ne.s32.totalorder %s119, %s120
    %p129 = scmp.eq.s32.totalorder %s30, 0
    %p130 = por %p128, %p129
    %p131 = scmp.ne.s32.totalorder %s119, %s120
    %p132 = scmp.eq.s32.totalorder %s31, 1
    %p133 = por %p131, %p132
    %p135 = scmp.ne.s32.totalorder %s120, %s134
    %p136 = scmp.eq.s32.totalorder %s31, 0
    %p137 = por %p135, %p136
    %s139 = sadd.s32 %s138, 1
    %p142 = scmp.eq.s32.totalorder %s25, 1
    %p143 = scmp.ne.s32.totalorder %s138, %s140
    %p144 = scmp.eq.s32.totalorder %s25, 0
    %p145 = por %p143, %p144
    %p146 = scmp.ne.s32.totalorder %s138, %s140
    %p147 = scmp.eq.s32.totalorder %s30, 1
    %p148 = por %p146, %p147
    %p149 = scmp.ne.s32.totalorder %s140, %s141
    %p150 = scmp.eq.s32.totalorder %s30, 0
    %p151 = por %p149, %p150
    %p152 = scmp.ne.s32.totalorder %s140, %s141
    %p153 = scmp.eq.s32.totalorder %s31, 1
    %p154 = por %p152, %p153
    %p156 = scmp.ne.s32.totalorder %s141, %s155
    %p157 = scmp.eq.s32.totalorder %s31, 0
    %p158 = por %p156, %p157
    %s160 = sadd.s32 %s159, 1
    %p163 = scmp.eq.s32.totalorder %s25, 1
    %p164 = scmp.ne.s32.totalorder %s159, %s161
    %p165 = scmp.eq.s32.totalorder %s25, 0
    %p166 = por %p164, %p165
    %p167 = scmp.ne.s32.totalorder %s159, %s161
    %p168 = scmp.eq.s32.totalorder %s30, 1
    %p169 = por %p167, %p168
    %p170 = scmp.ne.s32.totalorder %s161, %s162
    %p171 = scmp.eq.s32.totalorder %s30, 0
    %p172 = por %p170, %p171
    %p173 = scmp.ne.s32.totalorder %s161, %s162
    %p174 = scmp.eq.s32.totalorder %s31, 1
    %p175 = por %p173, %p174
    %p177 = scmp.ne.s32.totalorder %s162, %s176
    %p178 = scmp.eq.s32.totalorder %s31, 0
    %p179 = por %p177, %p178
    %s181 = sadd.s32 %s180, 1
    %p184 = scmp.eq.s32.totalorder %s25, 1
    %p185 = scmp.ne.s32.totalorder %s180, %s182
    %p186 = scmp.eq.s32.totalorder %s25, 0
    %p187 = por %p185, %p186
    %p188 = scmp.ne.s32.totalorder %s180, %s182
    %p189 = scmp.eq.s32.totalorder %s30, 1
    %p190 = por %p188, %p189
    %p191 = scmp.ne.s32.totalorder %s182, %s183
    %p192 = scmp.eq.s32.totalorder %s30, 0
    %p193 = por %p191, %p192
    %p194 = scmp.ne.s32.totalorder %s182, %s183
    %p195 = scmp.eq.s32.totalorder %s31, 1
    %p196 = por %p194, %p195
    %p198 = scmp.ne.s32.totalorder %s183, %s197
    %p199 = scmp.eq.s32.totalorder %s31, 0
    %p200 = por %p198, %p199
    %s202 = sadd.s32 %s201, 1
    %p205 = scmp.eq.s32.totalorder %s25, 1
    %p206 = scmp.ne.s32.totalorder %s201, %s203
    %p207 = scmp.eq.s32.totalorder %s25, 0
    %p208 = por %p206, %p207
    %p209 = scmp.ne.s32.totalorder %s201, %s203
    %p210 = scmp.eq.s32.totalorder %s30, 1
    %p211 = por %p209, %p210
    %p212 = scmp.ne.s32.totalorder %s203, %s204
    %p213 = scmp.eq.s32.totalorder %s30, 0
    %p214 = por %p212, %p213
    %p215 = scmp.ne.s32.totalorder %s203, %s204
    %p216 = scmp.eq.s32.totalorder %s31, 1
    %p217 = por %p215, %p216
    %p219 = scmp.ne.s32.totalorder %s204, %s218
    %p220 = scmp.eq.s32.totalorder %s31, 0
    %p221 = por %p219, %p220
    %s223 = sadd.s32 %s222, 1
    %p226 = scmp.eq.s32.totalorder %s25, 1
    %p227 = scmp.ne.s32.totalorder %s222, %s224
    %p228 = scmp.eq.s32.totalorder %s25, 0
    %p229 = por %p227, %p228
    %p230 = scmp.ne.s32.totalorder %s222, %s224
    %p231 = scmp.eq.s32.totalorder %s30, 1
    %p232 = por %p230, %p231
    %p233 = scmp.ne.s32.totalorder %s224, %s225
    %p234 = scmp.eq.s32.totalorder %s30, 0
    %p235 = por %p233, %p234
    %p236 = scmp.ne.s32.totalorder %s224, %s225
    %p237 = scmp.eq.s32.totalorder %s31, 1
    %p238 = por %p236, %p237
    %p240 = scmp.ne.s32.totalorder %s225, %s239
    %p241 = scmp.eq.s32.totalorder %s31, 0
    %p242 = por %p240, %p241
    %s244 = sadd.s32 %s243, 1
    %p247 = scmp.eq.s32.totalorder %s25, 1
    %p248 = scmp.ne.s32.totalorder %s243, %s245
    %p249 = scmp.eq.s32.totalorder %s25, 0
    %p250 = por %p248, %p249
    %p251 = scmp.ne.s32.totalorder %s243, %s245
    %p252 = scmp.eq.s32.totalorder %s30, 1
    %p253 = por %p251, %p252
    %p254 = scmp.ne.s32.totalorder %s245, %s246
    %p255 = scmp.eq.s32.totalorder %s30, 0
    %p256 = por %p254, %p255
    %p257 = scmp.ne.s32.totalorder %s245, %s246
    %p258 = scmp.eq.s32.totalorder %s31, 1
    %p259 = por %p257, %p258
    %p261 = scmp.ne.s32.totalorder %s246, %s260
    %p262 = scmp.eq.s32.totalorder %s31, 0
    %p263 = por %p261, %p262
    %s265 = sadd.s32 %s264, 1
    %p268 = scmp.eq.s32.totalorder %s25, 1
    %p269 = scmp.ne.s32.totalorder %s264, %s266
    %p270 = scmp.eq.s32.totalorder %s25, 0
    %p271 = por %p269, %p270
    %p272 = scmp.ne.s32.totalorder %s264, %s266
    %p273 = scmp.eq.s32.totalorder %s30, 1
    %p274 = por %p272, %p273
    %p275 = scmp.ne.s32.totalorder %s266, %s267
    %p276 = scmp.eq.s32.totalorder %s30, 0
    %p277 = por %p275, %p276
    %p278 = scmp.ne.s32.totalorder %s266, %s267
    %p279 = scmp.eq.s32.totalorder %s31, 1
    %p280 = por %p278, %p279
    %p282 = scmp.ne.s32.totalorder %s267, %s281
    %p283 = scmp.eq.s32.totalorder %s31, 0
    %p284 = por %p282, %p283
    %s286 = sadd.s32 %s285, 1
    %p289 = scmp.eq.s32.totalorder %s25, 1
    %p290 = scmp.ne.s32.totalorder %s285, %s287
    %p291 = scmp.eq.s32.totalorder %s25, 0
    %p292 = por %p290, %p291
    %p293 = scmp.ne.s32.totalorder %s285, %s287
    %p294 = scmp.eq.s32.totalorder %s30, 1
    %p295 = por %p293, %p294
    %p296 = scmp.ne.s32.totalorder %s287, %s288
    %p297 = scmp.eq.s32.totalorder %s30, 0
    %p298 = por %p296, %p297
    %p299 = scmp.ne.s32.totalorder %s287, %s288
    %p300 = scmp.eq.s32.totalorder %s31, 1
    %p301 = por %p299, %p300
    %p303 = scmp.ne.s32.totalorder %s288, %s302
    %p304 = scmp.eq.s32.totalorder %s31, 0
    %p305 = por %p303, %p304
    %s307 = sadd.s32 %s306, 1
    %p310 = scmp.eq.s32.totalorder %s25, 1
    %p311 = scmp.ne.s32.totalorder %s306, %s308
    %p312 = scmp.eq.s32.totalorder %s25, 0
    %p313 = por %p311, %p312
    %p314 = scmp.ne.s32.totalorder %s306, %s308
    %p315 = scmp.eq.s32.totalorder %s30, 1
    %p316 = por %p314, %p315
    %p317 = scmp.ne.s32.totalorder %s308, %s309
    %p318 = scmp.eq.s32.totalorder %s30, 0
    %p319 = por %p317, %p318
    %p320 = scmp.ne.s32.totalorder %s308, %s309
    %p321 = scmp.eq.s32.totalorder %s31, 1
    %p322 = por %p320, %p321
    %p324 = scmp.ne.s32.totalorder %s309, %s323
    %p325 = scmp.eq.s32.totalorder %s31, 0
    %p326 = por %p324, %p325
    %s328 = sadd.s32 %s327, 1
    %p331 = scmp.eq.s32.totalorder %s25, 1
    %p332 = scmp.ne.s32.totalorder %s327, %s329
    %p333 = scmp.eq.s32.totalorder %s25, 0
    %p334 = por %p332, %p333
    %p335 = scmp.ne.s32.totalorder %s327, %s329
    %p336 = scmp.eq.s32.totalorder %s30, 1
    %p337 = por %p335, %p336
    %p338 = scmp.ne.s32.totalorder %s329, %s330
    %p339 = scmp.eq.s32.totalorder %s30, 0
    %p340 = por %p338, %p339
    %p341 = scmp.ne.s32.totalorder %s329, %s330
    %p342 = scmp.eq.s32.totalorder %s31, 1
    %p343 = por %p341, %p342
    %p345 = scmp.ne.s32.totalorder %s330, %s344
    %p346 = scmp.eq.s32.totalorder %s31, 0
    %p347 = por %p345, %p346
    %s349 = sadd.s32 %s348, 1
    %p352 = scmp.eq.s32.totalorder %s25, 1
    %p353 = scmp.ne.s32.totalorder %s348, %s350
    %p354 = scmp.eq.s32.totalorder %s25, 0
    %p355 = por %p353, %p354
    %p356 = scmp.ne.s32.totalorder %s348, %s350
    %p357 = scmp.eq.s32.totalorder %s30, 1
    %p358 = por %p356, %p357
    %p359 = scmp.ne.s32.totalorder %s350, %s351
    %p360 = scmp.eq.s32.totalorder %s30, 0
    %p361 = por %p359, %p360
    %p362 = scmp.ne.s32.totalorder %s350, %s351
    %p363 = scmp.eq.s32.totalorder %s31, 1
    %p364 = por %p362, %p363
    %p366 = scmp.ne.s32.totalorder %s351, %s365
    %p367 = scmp.eq.s32.totalorder %s31, 0
    %p368 = por %p366, %p367
    %s370 = sadd.s32 %s369, 1
    %p373 = scmp.eq.s32.totalorder %s25, 1
    %p374 = scmp.ne.s32.totalorder %s369, %s371
    %p375 = scmp.eq.s32.totalorder %s25, 0
    %p376 = por %p374, %p375
    %p377 = scmp.ne.s32.totalorder %s369, %s371
    %p378 = scmp.eq.s32.totalorder %s30, 1
    %p379 = por %p377, %p378
    %p380 = scmp.ne.s32.totalorder %s371, %s372
    %p381 = scmp.eq.s32.totalorder %s30, 0
    %p382 = por %p380, %p381
    %p383 = scmp.ne.s32.totalorder %s371, %s372
    %p384 = scmp.eq.s32.totalorder %s31, 1
    %p385 = por %p383, %p384
    %p387 = scmp.ne.s32.totalorder %s372, %s386
    %p388 = scmp.eq.s32.totalorder %s31, 0
    %p389 = por %p387, %p388
    %s391 = sadd.s32 %s390, 1
    %p394 = scmp.eq.s32.totalorder %s25, 1
    %p395 = scmp.ne.s32.totalorder %s390, %s392
    %p396 = scmp.eq.s32.totalorder %s25, 0
    %p397 = por %p395, %p396
    %p398 = scmp.ne.s32.totalorder %s390, %s392
    %p399 = scmp.eq.s32.totalorder %s30, 1
    %p400 = por %p398, %p399
    %p401 = scmp.ne.s32.totalorder %s392, %s393
    %p402 = scmp.eq.s32.totalorder %s30, 0
    %p403 = por %p401, %p402
    %p404 = scmp.ne.s32.totalorder %s392, %s393
    %p405 = scmp.eq.s32.totalorder %s31, 1
    %p406 = por %p404, %p405
    %p408 = scmp.ne.s32.totalorder %s393, %s407
    %p409 = scmp.eq.s32.totalorder %s31, 0
    %p410 = por %p408, %p409
    %s412 = sadd.s32 %s411, 1
    %p415 = scmp.eq.s32.totalorder %s25, 1
    %p416 = scmp.ne.s32.totalorder %s411, %s413
    %p417 = scmp.eq.s32.totalorder %s25, 0
    %p418 = por %p416, %p417
    %p419 = scmp.ne.s32.totalorder %s411, %s413
    %p420 = scmp.eq.s32.totalorder %s30, 1
    %p421 = por %p419, %p420
    %p422 = scmp.ne.s32.totalorder %s413, %s414
    %p423 = scmp.eq.s32.totalorder %s30, 0
    %p424 = por %p422, %p423
    %p425 = scmp.ne.s32.totalorder %s413, %s414
    %p426 = scmp.eq.s32.totalorder %s31, 1
    %p427 = por %p425, %p426
    %p429 = scmp.ne.s32.totalorder %s414, %s428
    %p430 = scmp.eq.s32.totalorder %s31, 0
    %p431 = por %p429, %p430
    %s432 = ssub.s32 %s25, %s32
    %p433 = scmp.eq.s32.totalorder %s432, 0
    %s435 = sadd.s32 %s434, 1
    %s436 = scalar_select %p433, %s434, %s435
    %p439 = pneg %p433
    %p440 = scmp.eq.s32.totalorder %s25, 1
    %p441 = por %p439, %p440
    %p442 = scmp.ne.s32.totalorder %s434, %s437
    %p443 = scmp.eq.s32.totalorder %s25, 0
    %p444 = por %p442, %p443
    %p445 = scmp.ne.s32.totalorder %s434, %s437
    %p446 = scmp.eq.s32.totalorder %s30, 1
    %p447 = por %p445, %p446
    %p448 = scmp.ne.s32.totalorder %s437, %s438
    %p449 = scmp.eq.s32.totalorder %s30, 0
    %p450 = por %p448, %p449
    %p451 = scmp.ne.s32.totalorder %s437, %s438
    %p452 = scmp.eq.s32.totalorder %s31, 1
    %p453 = por %p451, %p452
    %p455 = scmp.ne.s32.totalorder %s438, %s454
    %p456 = scmp.eq.s32.totalorder %s31, 0
    %p457 = por %p455, %p456
    %p458 = scmp.le.s32.totalorder 1, %s25
    %p459 = scmp.lt.s32.totalorder %s25, 3
    %p460 = pnand %p458, %p459
    %p461 = pneg %p460
    // Predicated region
    $region9: #{model_forward.1} parent=5 // pred_check
      _
    $region10: #{model_forward.1} parent=5 // pred_check_branch
      %463 = sbr.rel (%p460) target = $region12
    $region11: #{model_forward.1} parent=5 // pred_region
      %s464 = ssub.s32 %s25, 1
      // Predicated region
      $region13: #{model_forward.1} parent=11 // pred_check
        %p465 = pneg %p46
      $region14: #{model_forward.1} parent=11 // pred_check_branch
        %467 = sbr.rel (%p465) target = $region16
      $region15: #{model_forward.1} parent=11 // pred_region
        _
      $region16: #{model_forward.1} parent=11 // pred_fallthru
        _
      // Predicated region
      $region17: #{model_forward.1} parent=11 // pred_check
        %p468 = pneg %p67
      $region18: #{model_forward.1} parent=11 // pred_check_branch
        %470 = sbr.rel (%p468) target = $region20
      $region19: #{model_forward.1} parent=11 // pred_region
        _
      $region20: #{model_forward.1} parent=11 // pred_fallthru
        _
      // Predicated region
      $region21: #{model_forward.1} parent=11 // pred_check
        %p471 = pneg %p88
      $region22: #{model_forward.1} parent=11 // pred_check_branch
        %473 = sbr.rel (%p471) target = $region24
      $region23: #{model_forward.1} parent=11 // pred_region
        _
      $region24: #{model_forward.1} parent=11 // pred_fallthru
        _
      // Predicated region
      $region25: #{model_forward.1} parent=11 // pred_check
        %p474 = pneg %p109
      $region26: #{model_forward.1} parent=11 // pred_check_branch
        %476 = sbr.rel (%p474) target = $region28
      $region27: #{model_forward.1} parent=11 // pred_region
        _
      $region28: #{model_forward.1} parent=11 // pred_fallthru
        _
      // Predicated region
      $region29: #{model_forward.1} parent=11 // pred_check
        %p477 = pneg %p130
      $region30: #{model_forward.1} parent=11 // pred_check_branch
        %479 = sbr.rel (%p477) target = $region32
      $region31: #{model_forward.1} parent=11 // pred_region
        _
      $region32: #{model_forward.1} parent=11 // pred_fallthru
        _
      // Predicated region
      $region33: #{model_forward.1} parent=11 // pred_check
        %p480 = pneg %p151
      $region34: #{model_forward.1} parent=11 // pred_check_branch
        %482 = sbr.rel (%p480) target = $region36
      $region35: #{model_forward.1} parent=11 // pred_region
        _
      $region36: #{model_forward.1} parent=11 // pred_fallthru
        _
      // Predicated region
      $region37: #{model_forward.1} parent=11 // pred_check
        %p483 = pneg %p172
      $region38: #{model_forward.1} parent=11 // pred_check_branch
        %485 = sbr.rel (%p483) target = $region40
      $region39: #{model_forward.1} parent=11 // pred_region
        _
      $region40: #{model_forward.1} parent=11 // pred_fallthru
        _
      // Predicated region
      $region41: #{model_forward.1} parent=11 // pred_check
        %p486 = pneg %p193
      $region42: #{model_forward.1} parent=11 // pred_check_branch
        %488 = sbr.rel (%p486) target = $region44
      $region43: #{model_forward.1} parent=11 // pred_region
        _
      $region44: #{model_forward.1} parent=11 // pred_fallthru
        _
      // Predicated region
      $region45: #{model_forward.1} parent=11 // pred_check
        %p489 = pneg %p214
      $region46: #{model_forward.1} parent=11 // pred_check_branch
        %491 = sbr.rel (%p489) target = $region48
      $region47: #{model_forward.1} parent=11 // pred_region
        _
      $region48: #{model_forward.1} parent=11 // pred_fallthru
        _
      // Predicated region
      $region49: #{model_forward.1} parent=11 // pred_check
        %p492 = pneg %p235
      $region50: #{model_forward.1} parent=11 // pred_check_branch
        %494 = sbr.rel (%p492) target = $region52
      $region51: #{model_forward.1} parent=11 // pred_region
        _
      $region52: #{model_forward.1} parent=11 // pred_fallthru
        _
      // Predicated region
      $region53: #{model_forward.1} parent=11 // pred_check
        %p495 = pneg %p256
      $region54: #{model_forward.1} parent=11 // pred_check_branch
        %497 = sbr.rel (%p495) target = $region56
      $region55: #{model_forward.1} parent=11 // pred_region
        _
      $region56: #{model_forward.1} parent=11 // pred_fallthru
        _
      // Predicated region
      $region57: #{model_forward.1} parent=11 // pred_check
        %p498 = pneg %p277
      $region58: #{model_forward.1} parent=11 // pred_check_branch
        %500 = sbr.rel (%p498) target = $region60
      $region59: #{model_forward.1} parent=11 // pred_region
        _
      $region60: #{model_forward.1} parent=11 // pred_fallthru
        _
      // Predicated region
      $region61: #{model_forward.1} parent=11 // pred_check
        %p501 = pneg %p298
      $region62: #{model_forward.1} parent=11 // pred_check_branch
        %503 = sbr.rel (%p501) target = $region64
      $region63: #{model_forward.1} parent=11 // pred_region
        _
      $region64: #{model_forward.1} parent=11 // pred_fallthru
        _
      // Predicated region
      $region65: #{model_forward.1} parent=11 // pred_check
        %p504 = pneg %p319
      $region66: #{model_forward.1} parent=11 // pred_check_branch
        %506 = sbr.rel (%p504) target = $region68
      $region67: #{model_forward.1} parent=11 // pred_region
        _
      $region68: #{model_forward.1} parent=11 // pred_fallthru
        _
      // Predicated region
      $region69: #{model_forward.1} parent=11 // pred_check
        %p507 = pneg %p340
      $region70: #{model_forward.1} parent=11 // pred_check_branch
        %509 = sbr.rel (%p507) target = $region72
      $region71: #{model_forward.1} parent=11 // pred_region
        _
      $region72: #{model_forward.1} parent=11 // pred_fallthru
        _
      // Predicated region
      $region73: #{model_forward.1} parent=11 // pred_check
        %p510 = pneg %p361
      $region74: #{model_forward.1} parent=11 // pred_check_branch
        %512 = sbr.rel (%p510) target = $region76
      $region75: #{model_forward.1} parent=11 // pred_region
        _
      $region76: #{model_forward.1} parent=11 // pred_fallthru
        _
      // Predicated region
      $region77: #{model_forward.1} parent=11 // pred_check
        %p513 = pneg %p382
      $region78: #{model_forward.1} parent=11 // pred_check_branch
        %515 = sbr.rel (%p513) target = $region80
      $region79: #{model_forward.1} parent=11 // pred_region
        _
      $region80: #{model_forward.1} parent=11 // pred_fallthru
        _
      // Predicated region
      $region81: #{model_forward.1} parent=11 // pred_check
        %p516 = pneg %p403
      $region82: #{model_forward.1} parent=11 // pred_check_branch
        %518 = sbr.rel (%p516) target = $region84
      $region83: #{model_forward.1} parent=11 // pred_region
        _
      $region84: #{model_forward.1} parent=11 // pred_fallthru
        _
      // Predicated region
      $region85: #{model_forward.1} parent=11 // pred_check
        %p519 = pneg %p424
      $region86: #{model_forward.1} parent=11 // pred_check_branch
        %521 = sbr.rel (%p519) target = $region88
      $region87: #{model_forward.1} parent=11 // pred_region
        _
      $region88: #{model_forward.1} parent=11 // pred_fallthru
        _
    $region12: #{model_forward.1} parent=5 // pred_fallthru
      _
    %p522 = scmp.lt.s32.totalorder %s25, 2
    // Predicated region
    $region89: #{model_forward.1} parent=5 // pred_check
      %p523 = pneg %p522
    $region90: #{model_forward.1} parent=5 // pred_check_branch
      %525 = sbr.rel (%p523) target = $region92
    $region91: #{model_forward.1} parent=5 // pred_region
      _
    $region92: #{model_forward.1} parent=5 // pred_fallthru
      _
    %p526 = scmp.le.s32.totalorder 1, %s25
    %p527 = scmp.lt.s32.totalorder %s25, 3
    %p528 = pnand %p526, %p527
    %p529 = pneg %p528
    // Predicated region
    $region93: #{model_forward.1} parent=5 // pred_check
      _
    $region94: #{model_forward.1} parent=5 // pred_check_branch
      %531 = sbr.rel (%p528) target = $region96
    $region95: #{model_forward.1} parent=5 // pred_region
      %s532 = ssub.s32 %s25, 1
      %p533 = pneg %p46
      %p534 = pneg %p43
      %p535 = pneg %p67
      %p536 = pneg %p64
      %p537 = pneg %p88
      %p538 = pneg %p85
      %p539 = pneg %p109
      %p540 = pneg %p106
      %p541 = pneg %p130
      %p542 = pneg %p127
      %p543 = pneg %p151
      %p544 = pneg %p148
      %p545 = pneg %p172
      %p546 = pneg %p169
      %p547 = pneg %p193
      %p548 = pneg %p190
      %p549 = pneg %p214
      %p550 = pneg %p211
      %p551 = pneg %p235
      %p552 = pneg %p232
      %p553 = pneg %p256
      %p554 = pneg %p253
      %p555 = pneg %p277
      %p556 = pneg %p274
      %p557 = pneg %p298
      %p558 = pneg %p295
      %p559 = pneg %p319
      %p560 = pneg %p316
      %p561 = pneg %p340
      %p562 = pneg %p337
      %p563 = pneg %p361
      %p564 = pneg %p358
      %p565 = pneg %p382
      %p566 = pneg %p379
      %p567 = pneg %p403
      %p568 = pneg %p400
      %p569 = pneg %p424
      %p570 = pneg %p421
      %p571 = pneg %p450
      %p572 = pneg %p447
      %p573 = scmp.lt.s32.totalorder %s30, 1
      %s574 = scalar_select %p573, %s30, 1
      %s575 = smul.addr %s574, 8
      %s576 = scalar_lea.vmem %s19, %s575
      %p577 = scmp.lt.s32.totalorder %s30, 1
      %s578 = scalar_select %p577, %s30, 1
      %s579 = smul.addr %s578, 8
      %s580 = scalar_lea.vmem %s19, %s579
      %v582 = vlaneseq
      %v583 = vand.u32 %v582, 127
      %584 = vst [vmem:[%s580] sm:$0xff] 0.0
      %p585 = scmp.eq.s32.totalorder %s30, 0
      // Predicated region
      $region97: #{model_forward.1} parent=95 // pred_check
        %p586 = pneg %p585
      $region98: #{model_forward.1} parent=95 // pred_check_branch
        %588 = sbr.rel (%p586) target = $region100
      $region99: #{model_forward.1} parent=95 // pred_region
        %v589 = vld [vmem:[%s0] sm:$0xff]
        %v590 = vld [vmem:[%s0 + $0x8] sm:$0xff]
        %v591 = vld [vmem:[%s0 + $0x10] sm:$0xff]
        %v592 = vld [vmem:[%s0 + $0x18] sm:$0xff]
        %v593 = vld [vmem:[%s0 + $0x20] sm:$0xff]
        %v594 = vld [vmem:[%s0 + $0x28] sm:$0xff]
        %v595 = vld [vmem:[%s0 + $0x30] sm:$0xff]
        %v596 = vld [vmem:[%s3] sm:$0xf]
        %v597 = vld [vmem:[%s3 + $0x4] sm:$0xf]
        %v598 = vld [vmem:[%s3 + $0x8] sm:$0xf]
        %v599 = vld [vmem:[%s3 + $0xc] sm:$0xf]
        %v600 = vld [vmem:[%s3 + $0x10] sm:$0xf]
        %v601 = vld [vmem:[%s3 + $0x14] sm:$0xf]
        %v602 = vld [vmem:[%s3 + $0x18] sm:$0xf]
        %v603 = vld [vmem:[%s3 + $0x1c] sm:$0xf]
        %v604 = vld [vmem:[%s3 + $0x20] sm:$0xf]
        %v605 = vld [vmem:[%s3 + $0x24] sm:$0xf]
        %v606 = vld [vmem:[%s3 + $0x28] sm:$0xf]
        %v607 = vld [vmem:[%s3 + $0x2c] sm:$0xf]
        %v608 = vld [vmem:[%s3 + $0x30] sm:$0xf]
        %v609 = vld [vmem:[%s3 + $0x34] sm:$0xf]
        %v610 = vld [vmem:[%s3 + $0x38] sm:$0xf]
        %v611 = vld [vmem:[%s3 + $0x3c] sm:$0xf]
        %v612 = vpack.c.bf16 %v590, %v589
        %v613 = vpack.c.bf16 %v592, %v591
        %v614 = vpack.c.bf16 %v594, %v593
        %v615 = vpack.c.bf16 %v595, %v595
        %v616 = vld [vmem:[%s4] sm:$0x1]
        %v618 = vlaneseq
        %v619 = vshrl.u32 %v618, 7
        %v620 = vsub.s32 0, %v619
        %v621 = vrot.slane %v616, %v620
        %v639 = vunpack.c.l.b16 %v596
        %v640 = vunpack.c.l.b16 %v597
        %v641 = vunpack.c.l.b16 %v598
        %v642 = vunpack.c.l.b16 %v599
        %v643 = vunpack.c.l.b16 %v600
        %v644 = vunpack.c.l.b16 %v601
        %v645 = vunpack.c.l.b16 %v602
        %v646 = vunpack.c.l.b16 %v603
        %v647 = vunpack.c.l.b16 %v604
        %v648 = vunpack.c.l.b16 %v605
        %v649 = vunpack.c.l.b16 %v606
        %v650 = vunpack.c.l.b16 %v607
        %v651 = vunpack.c.l.b16 %v608
        %v652 = vunpack.c.l.b16 %v609
        %v653 = vunpack.c.l.b16 %v610
        %v654 = vunpack.c.l.b16 %v611
        %v655 = vpack.c.b16 %v640, %v639
        %v656 = vpack.c.b16 %v642, %v641
        %v657 = vpack.c.b16 %v644, %v643
        %v658 = vpack.c.b16 %v646, %v645
        %v659 = vpack.c.b16 %v648, %v647
        %v660 = vpack.c.b16 %v650, %v649
        %v661 = vpack.c.b16 %v652, %v651
        %v662 = vpack.c.b16 %v654, %v653
        %671 = vmatprep.subr.bf16.mxu0 0
        %672 = vmatpush1.bf16.msra.mxu0 %v655
        %673 = vmatprep.subr.bf16.mxu0 0
        %674 = vmatpush1.bf16.msra.mxu0 %v656
        %675 = vmatprep.subr.bf16.mxu0 0
        %676 = vmatpush1.bf16.msra.mxu0 %v657
        %677 = vmatprep.subr.bf16.mxu0 0
        %678 = vmatpush1.bf16.msra.mxu0 %v658
        %679 = vmatprep.subr.bf16.mxu0 0
        %680 = vmatpush1.bf16.msra.mxu0 %v659
        %681 = vmatprep.subr.bf16.mxu0 0
        %682 = vmatpush1.bf16.msra.mxu0 %v660
        %683 = vmatprep.subr.bf16.mxu0 0
        %684 = vmatpush1.bf16.msra.mxu0 %v661
        %685 = vmatprep.subr.bf16.mxu0 0
        %686 = vmatpush1.bf16.msra.mxu0 %v662
        %687 = vmatprep.subr.bf16.mxu0 0
        %688 = vmatpush1.bf16.msra.mxu0 0
        %689 = vmatprep.subr.bf16.mxu0 0
        %690 = vmatpush1.bf16.msra.mxu0 0
        %691 = vmatprep.subr.bf16.mxu0 0
        %692 = vmatpush1.bf16.msra.mxu0 0
        %693 = vmatprep.subr.bf16.mxu0 0
        %694 = vmatpush1.bf16.msra.mxu0 0
        %695 = vmatprep.subr.bf16.mxu0 0
        %696 = vmatpush1.bf16.msra.mxu0 0
        %697 = vmatprep.subr.bf16.mxu0 0
        %698 = vmatpush1.bf16.msra.mxu0 0
        %699 = vmatprep.subr.bf16.mxu0 0
        %700 = vmatpush1.bf16.msra.mxu0 0
        %701 = vmatprep.subr.bf16.mxu0 0
        %702 = vmatpush1.bf16.msra.mxu0 0
        %703 = vmatprep.mubr.bf16.mxu0 0
        %704 = vmatmul.mubr.bf16.gmra.mrb[0].mxu0 %v612
        %v705 = vpop.f32.mrb[0].mxu0
        %v706 = vadd.f32 %v621, %v705
        %v707 = vpop.f32.mrb[0].mxu0
        %v708 = vpop.f32.mrb[0].mxu0
        %v709 = vadd.f32 %v621, %v708
        %v710 = vpop.f32.mrb[0].mxu0
        %711 = vmatprep.mubr.bf16.mxu0 0
        %712 = vmatmul.mubr.bf16.gmra.mrb[0].mxu0 %v613
        %v713 = vpop.f32.mrb[0].mxu0
        %v714 = vadd.f32 %v621, %v713
        %v715 = vpop.f32.mrb[0].mxu0
        %v716 = vpop.f32.mrb[0].mxu0
        %v717 = vadd.f32 %v621, %v716
        %v718 = vpop.f32.mrb[0].mxu0
        %719 = vmatprep.mubr.bf16.mxu0 0
        %720 = vmatmul.mubr.bf16.gmra.mrb[0].mxu0 %v614
        %v721 = vpop.f32.mrb[0].mxu0
        %v722 = vadd.f32 %v621, %v721
        %v723 = vpop.f32.mrb[0].mxu0
        %v724 = vpop.f32.mrb[0].mxu0
        %v725 = vadd.f32 %v621, %v724
        %v726 = vpop.f32.mrb[0].mxu0
        %727 = vmatprep.mubr.bf16.mxu0 0
        %728 = vmatmul.mubr.bf16.gmra.mrb[0].mxu0 %v615
        %v729 = vpop.f32.mrb[0].mxu0
        %v730 = vadd.f32 %v621, %v729
        %v731 = vpop.f32.mrb[0].mxu0
        %v732 = vpop.f32.mrb[0].mxu0
        %v733 = vpop.f32.mrb[0].mxu0
        %734 = vdwg.mxu0
        %s735 = scalar_lea.vmem %s3, 64
        %v736 = vld [vmem:[%s735] sm:$0xf]
        %v737 = vld [vmem:[%s735 + $0x4] sm:$0xf]
        %v738 = vld [vmem:[%s735 + $0x8] sm:$0xf]
        %v739 = vld [vmem:[%s735 + $0xc] sm:$0xf]
        %v740 = vld [vmem:[%s735 + $0x10] sm:$0xf]
        %v741 = vld [vmem:[%s735 + $0x14] sm:$0xf]
        %v742 = vld [vmem:[%s735 + $0x18] sm:$0xf]
        %v743 = vld [vmem:[%s735 + $0x1c] sm:$0xf]
        %v744 = vld [vmem:[%s735 + $0x20] sm:$0xf]
        %v745 = vld [vmem:[%s735 + $0x24] sm:$0xf]
        %v746 = vld [vmem:[%s735 + $0x28] sm:$0xf]
        %v747 = vld [vmem:[%s735 + $0x2c] sm:$0xf]
        %v748 = vld [vmem:[%s735 + $0x30] sm:$0xf]
        %v749 = vld [vmem:[%s735 + $0x34] sm:$0xf]
        %v750 = vld [vmem:[%s735 + $0x38] sm:$0xf]
        %v751 = vld [vmem:[%s735 + $0x3c] sm:$0xf]
        %s752 = scalar_lea.vmem %s4, 1
        %v753 = vld [vmem:[%s752] sm:$0x1]
        %v755 = vlaneseq
        %v756 = vshrl.u32 %v755, 7
        %v757 = vsub.s32 0, %v756
        %v758 = vrot.slane %v753, %v757
        %v776 = vunpack.c.l.b16 %v736
        %v777 = vunpack.c.l.b16 %v737
        %v778 = vunpack.c.l.b16 %v738
        %v779 = vunpack.c.l.b16 %v739
        %v780 = vunpack.c.l.b16 %v740
        %v781 = vunpack.c.l.b16 %v741
        %v782 = vunpack.c.l.b16 %v742
        %v783 = vunpack.c.l.b16 %v743
        %v784 = vunpack.c.l.b16 %v744
        %v785 = vunpack.c.l.b16 %v745
        %v786 = vunpack.c.l.b16 %v746
        %v787 = vunpack.c.l.b16 %v747
        %v788 = vunpack.c.l.b16 %v748
        %v789 = vunpack.c.l.b16 %v749
        %v790 = vunpack.c.l.b16 %v750
        %v791 = vunpack.c.l.b16 %v751
        %v792 = vpack.c.b16 %v777, %v776
        %v793 = vpack.c.b16 %v779, %v778
        %v794 = vpack.c.b16 %v781, %v780
        %v795 = vpack.c.b16 %v783, %v782
        %v796 = vpack.c.b16 %v785, %v784
        %v797 = vpack.c.b16 %v787, %v786
        %v798 = vpack.c.b16 %v789, %v788
        %v799 = vpack.c.b16 %v791, %v790
        %808 = vmatprep.subr.bf16.mxu0 0
        %809 = vmatpush1.bf16.msra.mxu0 %v792
        %810 = vmatprep.subr.bf16.mxu0 0
        %811 = vmatpush1.bf16.msra.mxu0 %v793
        %812 = vmatprep.subr.bf16.mxu0 0
        %813 = vmatpush1.bf16.msra.mxu0 %v794
        %814 = vmatprep.subr.bf16.mxu0 0
        %815 = vmatpush1.bf16.msra.mxu0 %v795
        %816 = vmatprep.subr.bf16.mxu0 0
        %817 = vmatpush1.bf16.msra.mxu0 %v796
        %818 = vmatprep.subr.bf16.mxu0 0
        %819 = vmatpush1.bf16.msra.mxu0 %v797
        %820 = vmatprep.subr.bf16.mxu0 0
        %821 = vmatpush1.bf16.msra.mxu0 %v798
        %822 = vmatprep.subr.bf16.mxu0 0
        %823 = vmatpush1.bf16.msra.mxu0 %v799
        %824 = vmatprep.subr.bf16.mxu0 0
        %825 = vmatpush1.bf16.msra.mxu0 0
        %826 = vmatprep.subr.bf16.mxu0 0
        %827 = vmatpush1.bf16.msra.mxu0 0
        %828 = vmatprep.subr.bf16.mxu0 0
        %829 = vmatpush1.bf16.msra.mxu0 0
        %830 = vmatprep.subr.bf16.mxu0 0
        %831 = vmatpush1.bf16.msra.mxu0 0
        %832 = vmatprep.subr.bf16.mxu0 0
        %833 = vmatpush1.bf16.msra.mxu0 0
        %834 = vmatprep.subr.bf16.mxu0 0
        %835 = vmatpush1.bf16.msra.mxu0 0
        %836 = vmatprep.subr.bf16.mxu0 0
        %837 = vmatpush1.bf16.msra.mxu0 0
        %838 = vmatprep.subr.bf16.mxu0 0
        %839 = vmatpush1.bf16.msra.mxu0 0
        %840 = vmatprep.mubr.bf16.mxu0 0
        %841 = vmatmul.mubr.bf16.gmra.mrb[0].mxu0 %v612
        %v842 = vpop.f32.mrb[0].mxu0
        %v843 = vadd.f32 %v758, %v842
        %v844 = vpop.f32.mrb[0].mxu0
        %v845 = vpop.f32.mrb[0].mxu0
        %v846 = vadd.f32 %v758, %v845
        %v847 = vpop.f32.mrb[0].mxu0
        %848 = vmatprep.mubr.bf16.mxu0 0
        %849 = vmatmul.mubr.bf16.gmra.mrb[0].mxu0 %v613
        %v850 = vpop.f32.mrb[0].mxu0
        %v851 = vadd.f32 %v758, %v850
        %v852 = vpop.f32.mrb[0].mxu0
        %v853 = vpop.f32.mrb[0].mxu0
        %v854 = vadd.f32 %v758, %v853
        %v855 = vpop.f32.mrb[0].mxu0
        %856 = vmatprep.mubr.bf16.mxu0 0
        %857 = vmatmul.mubr.bf16.gmra.mrb[0].mxu0 %v614
        %v858 = vpop.f32.mrb[0].mxu0
        %v859 = vadd.f32 %v758, %v858
        %v860 = vpop.f32.mrb[0].mxu0
        %v861 = vpop.f32.mrb[0].mxu0
        %v862 = vadd.f32 %v758, %v861
        %v863 = vpop.f32.mrb[0].mxu0
        %864 = vmatprep.mubr.bf16.mxu0 0
        %865 = vmatmul.mubr.bf16.gmra.mrb[0].mxu0 %v615
        %v866 = vpop.f32.mrb[0].mxu0
        %v867 = vadd.f32 %v758, %v866
        %v868 = vpop.f32.mrb[0].mxu0
        %v869 = vpop.f32.mrb[0].mxu0
        %v870 = vpop.f32.mrb[0].mxu0
        %871 = vdwg.mxu0
        %s872 = scalar_lea.vmem %s3, 128
        %v873 = vld [vmem:[%s872] sm:$0xf]
        %v874 = vld [vmem:[%s872 + $0x4] sm:$0xf]
        %v875 = vld [vmem:[%s872 + $0x8] sm:$0xf]
        %v876 = vld [vmem:[%s872 + $0xc] sm:$0xf]
        %v877 = vld [vmem:[%s872 + $0x10] sm:$0xf]
        %v878 = vld [vmem:[%s872 + $0x14] sm:$0xf]
        %v879 = vld [vmem:[%s872 + $0x18] sm:$0xf]
        %v880 = vld [vmem:[%s872 + $0x1c] sm:$0xf]
        %v881 = vld [vmem:[%s872 + $0x20] sm:$0xf]
        %v882 = vld [vmem:[%s872 + $0x24] sm:$0xf]
        %v883 = vld [vmem:[%s872 + $0x28] sm:$0xf]
        %v884 = vld [vmem:[%s872 + $0x2c] sm:$0xf]
        %v885 = vld [vmem:[%s872 + $0x30] sm:$0xf]
        %v886 = vld [vmem:[%s872 + $0x34] sm:$0xf]
        %v887 = vld [vmem:[%s872 + $0x38] sm:$0xf]
        %v888 = vld [vmem:[%s872 + $0x3c] sm:$0xf]
        %v889 = vpack.c.bf16 %v709, %v706
        %v890 = vpack.c.bf16 %v717, %v714
        %v891 = vpack.c.bf16 %v725, %v722
        %v892 = vpack.c.bf16 %v730, %v730
        %s893 = scalar_lea.vmem %s4, 2
        %v894 = vld [vmem:[%s893] sm:$0x1]
        %v896 = vlaneseq
        %v897 = vshrl.u32 %v896, 7
        %v898 = vsub.s32 0, %v897
        %v899 = vrot.slane %v894, %v898
        %v917 = vunpack.c.l.b16 %v873
        %v918 = vunpack.c.l.b16 %v874
        %v919 = vunpack.c.l.b16 %v875
        %v920 = vunpack.c.l.b16 %v876
        %v921 = vunpack.c.l.b16 %v877
        %v922 = vunpack.c.l.b16 %v878
        %v923 = vunpack.c.l.b16 %v879
        %v924 = vunpack.c.l.b16 %v880
        %v925 = vunpack.c.l.b16 %v881
        %v926 = vunpack.c.l.b16 %v882
        %v927 = vunpack.c.l.b16 %v883
        %v928 = vunpack.c.l.b16 %v884
        %v929 = vunpack.c.l.b16 %v885
        %v930 = vunpack.c.l.b16 %v886
        %v931 = vunpack.c.l.b16 %v887
        %v932 = vunpack.c.l.b16 %v888
        %v933 = vpack.c.b16 %v918, %v917
        %v934 = vpack.c.b16 %v920, %v919
        %v935 = vpack.c.b16 %v922, %v921
        %v936 = vpack.c.b16 %v924, %v923
        %v937 = vpack.c.b16 %v926, %v925
        %v938 = vpack.c.b16 %v928, %v927
        %v939 = vpack.c.b16 %v930, %v929
        %v940 = vpack.c.b16 %v932, %v931
        %949 = vmatprep.subr.bf16.mxu0 0
        %950 = vmatpush1.bf16.msra.mxu0 %v933
        %951 = vmatprep.subr.bf16.mxu0 0
        %952 = vmatpush1.bf16.msra.mxu0 %v934
        %953 = vmatprep.subr.bf16.mxu0 0
        %954 = vmatpush1.bf16.msra.mxu0 %v935
        %955 = vmatprep.subr.bf16.mxu0 0
        %956 = vmatpush1.bf16.msra.mxu0 %v936
        %957 = vmatprep.subr.bf16.mxu0 0
        %958 = vmatpush1.bf16.msra.mxu0 %v937
        %959 = vmatprep.subr.bf16.mxu0 0
        %960 = vmatpush1.bf16.msra.mxu0 %v938
        %961 = vmatprep.subr.bf16.mxu0 0
        %962 = vmatpush1.bf16.msra.mxu0 %v939
        %963 = vmatprep.subr.bf16.mxu0 0
        %964 = vmatpush1.bf16.msra.mxu0 %v940
        %965 = vmatprep.subr.bf16.mxu0 0
        %966 = vmatpush1.bf16.msra.mxu0 0
        %967 = vmatprep.subr.bf16.mxu0 0
        %968 = vmatpush1.bf16.msra.mxu0 0
        %969 = vmatprep.subr.bf16.mxu0 0
        %970 = vmatpush1.bf16.msra.mxu0 0
        %971 = vmatprep.subr.bf16.mxu0 0
        %972 = vmatpush1.bf16.msra.mxu0 0
        %973 = vmatprep.subr.bf16.mxu0 0
        %974 = vmatpush1.bf16.msra.mxu0 0
        %975 = vmatprep.subr.bf16.mxu0 0
        %976 = vmatpush1.bf16.msra.mxu0 0
        %977 = vmatprep.subr.bf16.mxu0 0
        %978 = vmatpush1.bf16.msra.mxu0 0
        %979 = vmatprep.subr.bf16.mxu0 0
        %980 = vmatpush1.bf16.msra.mxu0 0
        %981 = vmatprep.mubr.bf16.mxu0 0
        %982 = vmatmul.mubr.bf16.gmra.mrb[0].mxu0 %v889
        %v983 = vpop.f32.mrb[0].mxu0
        %v984 = vadd.f32 %v899, %v983
        %v985 = vpop.f32.mrb[0].mxu0
        %v986 = vpop.f32.mrb[0].mxu0
        %v987 = vadd.f32 %v899, %v986
        %v988 = vpop.f32.mrb[0].mxu0
        %989 = vmatprep.mubr.bf16.mxu0 0
        %990 = vmatmul.mubr.bf16.gmra.mrb[0].mxu0 %v890
        %v991 = vpop.f32.mrb[0].mxu0
        %v992 = vadd.f32 %v899, %v991
        %v993 = vpop.f32.mrb[0].mxu0
        %v994 = vpop.f32.mrb[0].mxu0
        %v995 = vadd.f32 %v899, %v994
        %v996 = vpop.f32.mrb[0].mxu0
        %997 = vmatprep.mubr.bf16.mxu0 0
        %998 = vmatmul.mubr.bf16.gmra.mrb[0].mxu0 %v891
        %v999 = vpop.f32.mrb[0].mxu0
        %v1000 = vadd.f32 %v899, %v999
        %v1001 = vpop.f32.mrb[0].mxu0
        %v1002 = vpop.f32.mrb[0].mxu0
        %v1003 = vadd.f32 %v899, %v1002
        %v1004 = vpop.f32.mrb[0].mxu0
        %1005 = vmatprep.mubr.bf16.mxu0 0
        %1006 = vmatmul.mubr.bf16.gmra.mrb[0].mxu0 %v892
        %v1007 = vpop.f32.mrb[0].mxu0
        %v1008 = vadd.f32 %v899, %v1007
        %v1009 = vpop.f32.mrb[0].mxu0
        %v1010 = vpop.f32.mrb[0].mxu0
        %v1011 = vpop.f32.mrb[0].mxu0
        %1012 = vdwg.mxu0
        %v1013 = vld [vmem:[%s5] sm:$0xf]
        %v1014 = vld [vmem:[%s5 + $0x4] sm:$0xf]
        %v1015 = vld [vmem:[%s5 + $0x8] sm:$0xf]
        %v1016 = vld [vmem:[%s5 + $0xc] sm:$0xf]
        %v1017 = vld [vmem:[%s5 + $0x10] sm:$0xf]
        %v1018 = vld [vmem:[%s5 + $0x14] sm:$0xf]
        %v1019 = vld [vmem:[%s5 + $0x18] sm:$0xf]
        %v1020 = vld [vmem:[%s5 + $0x1c] sm:$0xf]
        %v1021 = vld [vmem:[%s5 + $0x20] sm:$0xf]
        %v1022 = vld [vmem:[%s5 + $0x24] sm:$0xf]
        %v1023 = vld [vmem:[%s5 + $0x28] sm:$0xf]
        %v1024 = vld [vmem:[%s5 + $0x2c] sm:$0xf]
        %v1025 = vld [vmem:[%s5 + $0x30] sm:$0xf]
        %v1026 = vld [vmem:[%s5 + $0x34] sm:$0xf]
        %v1027 = vld [vmem:[%s5 + $0x38] sm:$0xf]
        %v1028 = vld [vmem:[%s5 + $0x3c] sm:$0xf]
        %v1029 = vpack.c.bf16 %v987, %v984
        %v1030 = vpack.c.bf16 %v995, %v992
        %v1031 = vpack.c.bf16 %v1003, %v1000
        %v1032 = vpack.c.bf16 %v1008, %v1008
        %v1033 = vld [vmem:[%s6] sm:$0x1]
        %v1035 = vlaneseq
        %v1036 = vshrl.u32 %v1035, 7
        %v1037 = vsub.s32 0, %v1036
        %v1038 = vrot.slane %v1033, %v1037
        %v1056 = vunpack.c.l.b16 %v1013
        %v1057 = vunpack.c.l.b16 %v1014
        %v1058 = vunpack.c.l.b16 %v1015
        %v1059 = vunpack.c.l.b16 %v1016
        %v1060 = vunpack.c.l.b16 %v1017
        %v1061 = vunpack.c.l.b16 %v1018
        %v1062 = vunpack.c.l.b16 %v1019
        %v1063 = vunpack.c.l.b16 %v1020
        %v1064 = vunpack.c.l.b16 %v1021
        %v1065 = vunpack.c.l.b16 %v1022
        %v1066 = vunpack.c.l.b16 %v1023
        %v1067 = vunpack.c.l.b16 %v1024
        %v1068 = vunpack.c.l.b16 %v1025
        %v1069 = vunpack.c.l.b16 %v1026
        %v1070 = vunpack.c.l.b16 %v1027
        %v1071 = vunpack.c.l.b16 %v1028
        %v1072 = vpack.c.b16 %v1057, %v1056
        %v1073 = vpack.c.b16 %v1059, %v1058
        %v1074 = vpack.c.b16 %v1061, %v1060
        %v1075 = vpack.c.b16 %v1063, %v1062
        %v1076 = vpack.c.b16 %v1065, %v1064
        %v1077 = vpack.c.b16 %v1067, %v1066
        %v1078 = vpack.c.b16 %v1069, %v1068
        %v1079 = vpack.c.b16 %v1071, %v1070
        %1088 = vmatprep.subr.bf16.mxu0 0
        %1089 = vmatpush1.bf16.msra.mxu0 %v1072
        %1090 = vmatprep.subr.bf16.mxu0 0
        %1091 = vmatpush1.bf16.msra.mxu0 %v1073
        %1092 = vmatprep.subr.bf16.mxu0 0
        %1093 = vmatpush1.bf16.msra.mxu0 %v1074
        %1094 = vmatprep.subr.bf16.mxu0 0
        %1095 = vmatpush1.bf16.msra.mxu0 %v1075
        %1096 = vmatprep.subr.bf16.mxu0 0
        %1097 = vmatpush1.bf16.msra.mxu0 %v1076
        %1098 = vmatprep.subr.bf16.mxu0 0
        %1099 = vmatpush1.bf16.msra.mxu0 %v1077
        %1100 = vmatprep.subr.bf16.mxu0 0
        %1101 = vmatpush1.bf16.msra.mxu0 %v1078
        %1102 = vmatprep.subr.bf16.mxu0 0
        %1103 = vmatpush1.bf16.msra.mxu0 %v1079
        %1104 = vmatprep.subr.bf16.mxu0 0
        %1105 = vmatpush1.bf16.msra.mxu0 0
        %1106 = vmatprep.subr.bf16.mxu0 0
        %1107 = vmatpush1.bf16.msra.mxu0 0
        %1108 = vmatprep.subr.bf16.mxu0 0
        %1109 = vmatpush1.bf16.msra.mxu0 0
        %1110 = vmatprep.subr.bf16.mxu0 0
        %1111 = vmatpush1.bf16.msra.mxu0 0
        %1112 = vmatprep.subr.bf16.mxu0 0
        %1113 = vmatpush1.bf16.msra.mxu0 0
        %1114 = vmatprep.subr.bf16.mxu0 0
        %1115 = vmatpush1.bf16.msra.mxu0 0
        %1116 = vmatprep.subr.bf16.mxu0 0
        %1117 = vmatpush1.bf16.msra.mxu0 0
        %1118 = vmatprep.subr.bf16.mxu0 0
        %1119 = vmatpush1.bf16.msra.mxu0 0
        %1120 = vmatprep.mubr.bf16.mxu0 0
        %1121 = vmatmul.mubr.bf16.gmra.mrb[0].mxu0 %v1029
        %v1122 = vpop.f32.mrb[0].mxu0
        %v1123 = vadd.f32 %v1038, %v1122
        %v1124 = vpop.f32.mrb[0].mxu0
        %v1125 = vpop.f32.mrb[0].mxu0
        %v1126 = vadd.f32 %v1038, %v1125
        %v1127 = vpop.f32.mrb[0].mxu0
        %1128 = vmatprep.mubr.bf16.mxu0 0
        %1129 = vmatmul.mubr.bf16.gmra.mrb[0].mxu0 %v1030
        %v1130 = vpop.f32.mrb[0].mxu0
        %v1131 = vadd.f32 %v1038, %v1130
        %v1132 = vpop.f32.mrb[0].mxu0
        %v1133 = vpop.f32.mrb[0].mxu0
        %v1134 = vadd.f32 %v1038, %v1133
        %v1135 = vpop.f32.mrb[0].mxu0
        %1136 = vmatprep.mubr.bf16.mxu0 0
        %1137 = vmatmul.mubr.bf16.gmra.mrb[0].mxu0 %v1031
        %v1138 = vpop.f32.mrb[0].mxu0
        %v1139 = vadd.f32 %v1038, %v1138
        %v1140 = vpop.f32.mrb[0].mxu0
        %v1141 = vpop.f32.mrb[0].mxu0
        %v1142 = vadd.f32 %v1038, %v1141
        %v1143 = vpop.f32.mrb[0].mxu0
        %1144 = vmatprep.mubr.bf16.mxu0 0
        %1145 = vmatmul.mubr.bf16.gmra.mrb[0].mxu0 %v1032
        %v1146 = vpop.f32.mrb[0].mxu0
        %v1147 = vadd.f32 %v1038, %v1146
        %v1148 = vpop.f32.mrb[0].mxu0
        %v1149 = vpop.f32.mrb[0].mxu0
        %v1150 = vpop.f32.mrb[0].mxu0
        %1151 = vdwg.mxu0
        %1152 = vmax.xlane.f32.xlu0 %v1123
        %v1153 = vpop.xlane.xlu0 %1152
        %1154 = vmax.xlane.f32.xlu0 %v1126
        %v1155 = vpop.xlane.xlu0 %1154
        %1156 = vmax.xlane.f32.xlu0 %v1131
        %v1157 = vpop.xlane.xlu0 %1156
        %1158 = vmax.xlane.f32.xlu0 %v1134
        %v1159 = vpop.xlane.xlu0 %1158
        %1160 = vmax.xlane.f32.xlu0 %v1139
        %v1161 = vpop.xlane.xlu0 %1160
        %1162 = vmax.xlane.f32.xlu0 %v1142
        %v1163 = vpop.xlane.xlu0 %1162
        %1164 = vmax.xlane.f32.xlu0 %v1147
        %v1165 = vpop.xlane.xlu0 %1164
        %v1166 = vsub.f32 %v1123, %v1153
        %v1167 = vsub.f32 %v1126, %v1155
        %v1168 = vsub.f32 %v1131, %v1157
        %v1169 = vsub.f32 %v1134, %v1159
        %v1170 = vsub.f32 %v1139, %v1161
        %v1171 = vsub.f32 %v1142, %v1163
        %v1172 = vsub.f32 %v1147, %v1165
        %v1173 = vmul.f32 %v1166, 1.442695
        %v1174 = vpow.pop %v1173
        %v1175 = vmul.f32 %v1167, 1.442695
        %v1176 = vpow.pop %v1175
        %v1177 = vmul.f32 %v1168, 1.442695
        %v1178 = vpow.pop %v1177
        %v1179 = vmul.f32 %v1169, 1.442695
        %v1180 = vpow.pop %v1179
        %v1181 = vmul.f32 %v1170, 1.442695
        %v1182 = vpow.pop %v1181
        %v1183 = vmul.f32 %v1171, 1.442695
        %v1184 = vpow.pop %v1183
        %v1185 = vmul.f32 %v1172, 1.442695
        %v1186 = vpow.pop %v1185
        %1187 = vadd.xlane.f32.xlu0 %v1174
        %v1188 = vpop.xlane.xlu0 %1187
        %1189 = vadd.xlane.f32.xlu0 %v1176
        %v1190 = vpop.xlane.xlu0 %1189
        %1191 = vadd.xlane.f32.xlu0 %v1178
        %v1192 = vpop.xlane.xlu0 %1191
        %1193 = vadd.xlane.f32.xlu0 %v1180
        %v1194 = vpop.xlane.xlu0 %1193
        %1195 = vadd.xlane.f32.xlu0 %v1182
        %v1196 = vpop.xlane.xlu0 %1195
        %1197 = vadd.xlane.f32.xlu0 %v1184
        %v1198 = vpop.xlane.xlu0 %1197
        %1199 = vadd.xlane.f32.xlu0 %v1186
        %v1200 = vpop.xlane.xlu0 %1199
        %v1201 = vlog2.pop %v1188
        %v1202 = vmul.f32 %v1201, 0.6931472
        %v1203 = vlog2.pop %v1190
        %v1204 = vmul.f32 %v1203, 0.6931472
        %v1205 = vlog2.pop %v1192
        %v1206 = vmul.f32 %v1205, 0.6931472
        %v1207 = vlog2.pop %v1194
        %v1208 = vmul.f32 %v1207, 0.6931472
        %v1209 = vlog2.pop %v1196
        %v1210 = vmul.f32 %v1209, 0.6931472
        %v1211 = vlog2.pop %v1198
        %v1212 = vmul.f32 %v1211, 0.6931472
        %v1213 = vlog2.pop %v1200
        %v1214 = vmul.f32 %v1213, 0.6931472
        %v1215 = vadd.f32 %v1153, %v1202
        %v1216 = vadd.f32 %v1155, %v1204
        %v1217 = vadd.f32 %v1157, %v1206
        %v1218 = vadd.f32 %v1159, %v1208
        %v1219 = vadd.f32 %v1161, %v1210
        %v1220 = vadd.f32 %v1163, %v1212
        %v1221 = vadd.f32 %v1165, %v1214
        %v1222 = vld [vmem:[%s1] sm:$0xff]
        %v1223 = vld [vmem:[%s1 + $0x8] sm:$0xff]
        %v1224 = vld [vmem:[%s1 + $0x10] sm:$0xff]
        %v1225 = vld [vmem:[%s1 + $0x18] sm:$0xff]
        %v1226 = vld [vmem:[%s1 + $0x20] sm:$0xff]
        %v1227 = vld [vmem:[%s1 + $0x28] sm:$0xff]
        %v1228 = vld [vmem:[%s1 + $0x30] sm:$0xff]
        %1229 = vset.pattern.permute.xlu0 0
        %1230 = vperm.xlu0 %1229, %v1222
        %v1231 = vpop.permute.xlu0 %1230
        %1232 = vset.pattern.permute.xlu0 0
        %1233 = vperm.xlu0 %1232, %v1223
        %v1234 = vpop.permute.xlu0 %1233
        %1235 = vset.pattern.permute.xlu0 0
        %1236 = vperm.xlu0 %1235, %v1224
        %v1237 = vpop.permute.xlu0 %1236
        %1238 = vset.pattern.permute.xlu0 0
        %1239 = vperm.xlu0 %1238, %v1225
        %v1240 = vpop.permute.xlu0 %1239
        %1241 = vset.pattern.permute.xlu0 0
        %1242 = vperm.xlu0 %1241, %v1226
        %v1243 = vpop.permute.xlu0 %1242
        %1244 = vset.pattern.permute.xlu0 0
        %1245 = vperm.xlu0 %1244, %v1227
        %v1246 = vpop.permute.xlu0 %1245
        %1247 = vset.pattern.permute.xlu0 0
        %1248 = vperm.xlu0 %1247, %v1228
        %v1249 = vpop.permute.xlu0 %1248
        %vm1250 = vcmp.eq.s32.totalorder %v583, %v1231
        %vm1251 = vcmp.eq.s32.totalorder %v583, %v1234
        %vm1252 = vcmp.eq.s32.totalorder %v583, %v1237
        %vm1253 = vcmp.eq.s32.totalorder %v583, %v1240
        %vm1254 = vcmp.eq.s32.totalorder %v583, %v1243
        %vm1255 = vcmp.eq.s32.totalorder %v583, %v1246
        %vm1256 = vcmp.eq.s32.totalorder %v583, %v1249
        %v1257 = vsel %vm1250, %v1123, 0.0
        %v1258 = vsel %vm1251, %v1126, 0.0
        %v1259 = vsel %vm1252, %v1131, 0.0
        %v1260 = vsel %vm1253, %v1134, 0.0
        %v1261 = vsel %vm1254, %v1139, 0.0
        %v1262 = vsel %vm1255, %v1142, 0.0
        %v1263 = vsel %vm1256, %v1147, 0.0
        %1264 = vadd.xlane.f32.xlu0 %v1257
        %v1265 = vpop.xlane.xlu0 %1264
        %1266 = vadd.xlane.f32.xlu0 %v1258
        %v1267 = vpop.xlane.xlu0 %1266
        %1268 = vadd.xlane.f32.xlu0 %v1259
        %v1269 = vpop.xlane.xlu0 %1268
        %1270 = vadd.xlane.f32.xlu0 %v1260
        %v1271 = vpop.xlane.xlu0 %1270
        %1272 = vadd.xlane.f32.xlu0 %v1261
        %v1273 = vpop.xlane.xlu0 %1272
        %1274 = vadd.xlane.f32.xlu0 %v1262
        %v1275 = vpop.xlane.xlu0 %1274
        %1276 = vadd.xlane.f32.xlu0 %v1263
        %v1277 = vpop.xlane.xlu0 %1276
        %v1278 = vsub.f32 %v1215, %v1265
        %v1279 = vsub.f32 %v1216, %v1267
        %v1280 = vsub.f32 %v1217, %v1269
        %v1281 = vsub.f32 %v1218, %v1271
        %v1282 = vsub.f32 %v1219, %v1273
        %v1283 = vsub.f32 %v1220, %v1275
        %v1284 = vsub.f32 %v1221, %v1277
        %v1285 = vadd.f32 %v843, 1.0
        %v1286 = vadd.f32 %v846, 1.0
        %v1287 = vadd.f32 %v851, 1.0
        %v1288 = vadd.f32 %v854, 1.0
        %v1289 = vadd.f32 %v859, 1.0
        %v1290 = vadd.f32 %v862, 1.0
        %v1291 = vadd.f32 %v867, 1.0
        %v1292 = vmul.f32 %v706, %v706
        %v1293 = vmul.f32 %v709, %v709
        %v1294 = vmul.f32 %v714, %v714
        %v1295 = vmul.f32 %v717, %v717
        %v1296 = vmul.f32 %v722, %v722
        %v1297 = vmul.f32 %v725, %v725
        %v1298 = vmul.f32 %v730, %v730
        %v1299 = vsub.f32 %v1285, %v1292
        %v1300 = vsub.f32 %v1286, %v1293
        %v1301 = vsub.f32 %v1287, %v1294
        %v1302 = vsub.f32 %v1288, %v1295
        %v1303 = vsub.f32 %v1289, %v1296
        %v1304 = vsub.f32 %v1290, %v1297
        %v1305 = vsub.f32 %v1291, %v1298
        %v1306 = vmul.f32 %v843, 1.442695
        %v1307 = vpow.pop %v1306
        %v1308 = vmul.f32 %v846, 1.442695
        %v1309 = vpow.pop %v1308
        %v1310 = vmul.f32 %v851, 1.442695
        %v1311 = vpow.pop %v1310
        %v1312 = vmul.f32 %v854, 1.442695
        %v1313 = vpow.pop %v1312
        %v1314 = vmul.f32 %v859, 1.442695
        %v1315 = vpow.pop %v1314
        %v1316 = vmul.f32 %v862, 1.442695
        %v1317 = vpow.pop %v1316
        %v1318 = vmul.f32 %v867, 1.442695
        %v1319 = vpow.pop %v1318
        %v1320 = vsub.f32 %v1299, %v1307
        %v1321 = vsub.f32 %v1300, %v1309
        %v1322 = vsub.f32 %v1301, %v1311
        %v1323 = vsub.f32 %v1302, %v1313
        %v1324 = vsub.f32 %v1303, %v1315
        %v1325 = vsub.f32 %v1304, %v1317
        %v1326 = vsub.f32 %v1305, %v1319
        %1327 = vadd.xlane.f32.xlu0 %v1320
        %v1328 = vpop.xlane.xlu0 %1327
        %1329 = vadd.xlane.f32.xlu0 %v1321
        %v1330 = vpop.xlane.xlu0 %1329
        %1331 = vadd.xlane.f32.xlu0 %v1322
        %v1332 = vpop.xlane.xlu0 %1331
        %1333 = vadd.xlane.f32.xlu0 %v1323
        %v1334 = vpop.xlane.xlu0 %1333
        %1335 = vadd.xlane.f32.xlu0 %v1324
        %v1336 = vpop.xlane.xlu0 %1335
        %1337 = vadd.xlane.f32.xlu0 %v1325
        %v1338 = vpop.xlane.xlu0 %1337
        %1339 = vadd.xlane.f32.xlu0 %v1326
        %v1340 = vpop.xlane.xlu0 %1339
        %v1341 = vmul.f32 %v1328, -0.5
        %v1342 = vmul.f32 %v1330, -0.5
        %v1343 = vmul.f32 %v1332, -0.5
        %v1344 = vmul.f32 %v1334, -0.5
        %v1345 = vmul.f32 %v1336, -0.5
        %v1346 = vmul.f32 %v1338, -0.5
        %v1347 = vmul.f32 %v1340, -0.5
        %v1348 = vld [vmem:[%s2] sm:$0xff]
        %v1349 = vld [vmem:[%s2 + $0x8] sm:$0xff]
        %v1350 = vld [vmem:[%s2 + $0x10] sm:$0xff]
        %v1351 = vld [vmem:[%s2 + $0x18] sm:$0xff]
        %v1352 = vld [vmem:[%s2 + $0x20] sm:$0xff]
        %v1353 = vld [vmem:[%s2 + $0x28] sm:$0xff]
        %v1354 = vld [vmem:[%s2 + $0x30] sm:$0xff]
        %v1355 = vmul.f32 %v1348, %v1341
        %v1356 = vmul.f32 %v1349, %v1342
        %v1357 = vmul.f32 %v1350, %v1343
        %v1358 = vmul.f32 %v1351, %v1344
        %v1359 = vmul.f32 %v1352, %v1345
        %v1360 = vmul.f32 %v1353, %v1346
        %v1361 = vmul.f32 %v1354, %v1347
        %v1362 = vadd.f32 %v1278, %v1355
        %v1363 = vadd.f32 %v1279, %v1356
        %v1364 = vadd.f32 %v1280, %v1357
        %v1365 = vadd.f32 %v1281, %v1358
        %v1366 = vadd.f32 %v1282, %v1359
        %v1367 = vadd.f32 %v1283, %v1360
        %v1368 = vadd.f32 %v1284, %v1361
        %v1369 = vadd.f32 %v1362, %v1363
        %v1370 = vadd.f32 %v1369, %v1364
        %v1371 = vadd.f32 %v1370, %v1365
        %v1372 = vadd.f32 %v1371, %v1366
        %v1373 = vadd.f32 %v1372, %v1367
        %v1374 = vadd.f32 %v1373, %v1368
        %vm1375 = vcmp.eq.s32.totalorder %v583, 0
        %1377 = vset.pattern.permute.xlu0 0
        %1378 = vperm.xlu0 %1377, %v1374
        %v1379 = vpop.permute.xlu0 %1378
        %v1381 = vsel %vm1375, %v1379, 0.0
        %1382 = vst [vmem:[%s580] sm:$0xff] %v1381
      $region100: #{model_forward.1} parent=95 // pred_fallthru
        _
      %p1383 = scmp.eq.s32.totalorder %s30, 1
      // Predicated region
      $region101: #{model_forward.1} parent=95 // pred_check
        %p1384 = pneg %p1383
      $region102: #{model_forward.1} parent=95 // pred_check_branch
        %1386 = sbr.rel (%p1384) target = $region104
      $region103: #{model_forward.1} parent=95 // pred_region
        %v1387 = vld [vmem:[%s7] sm:$0xff]
        %v1388 = vld [vmem:[%s7 + $0x8] sm:$0xff]
        %v1389 = vld [vmem:[%s11] sm:$0xff]
        %v1390 = vld [vmem:[%s11 + $0x8] sm:$0xf]
        %v1391 = vld [vmem:[%s11 + $0xc] sm:$0xff]
        %v1392 = vld [vmem:[%s11 + $0x14] sm:$0xf]
        %v1393 = vld [vmem:[%s11 + $0x18] sm:$0xff]
        %v1394 = vld [vmem:[%s11 + $0x20] sm:$0xf]
        %v1395 = vld [vmem:[%s11 + $0x24] sm:$0xff]
        %v1396 = vld [vmem:[%s11 + $0x2c] sm:$0xf]
        %v1397 = vld [vmem:[%s11 + $0x30] sm:$0xff]
        %v1398 = vld [vmem:[%s11 + $0x38] sm:$0xf]
        %v1399 = vld [vmem:[%s11 + $0x3c] sm:$0xff]
        %v1400 = vld [vmem:[%s11 + $0x44] sm:$0xf]
        %v1401 = vld [vmem:[%s11 + $0x48] sm:$0xff]
        %v1402 = vld [vmem:[%s11 + $0x50] sm:$0xf]
        %v1403 = vld [vmem:[%s11 + $0x54] sm:$0xff]
        %v1404 = vld [vmem:[%s11 + $0x5c] sm:$0xf]
        %v1405 = vld [vmem:[%s11 + $0x60] sm:$0xff]
        %v1406 = vld [vmem:[%s11 + $0x68] sm:$0xf]
        %v1407 = vld [vmem:[%s11 + $0x6c] sm:$0xff]
        %v1408 = vld [vmem:[%s11 + $0x74] sm:$0xf]
        %v1409 = vld [vmem:[%s11 + $0x78] sm:$0xff]
        %v1410 = vld [vmem:[%s11 + $0x80] sm:$0xf]
        %v1411 = vld [vmem:[%s11 + $0x84] sm:$0xff]
        %v1412 = vld [vmem:[%s11 + $0x8c] sm:$0xf]
        %v1413 = vld [vmem:[%s11 + $0x90] sm:$0xff]
        %v1414 = vld [vmem:[%s11 + $0x98] sm:$0xf]
        %v1415 = vld [vmem:[%s11 + $0x9c] sm:$0xff]
        %v1416 = vld [vmem:[%s11 + $0xa4] sm:$0xf]
        %v1417 = vld [vmem:[%s11 + $0xa8] sm:$0xff]
        %v1418 = vld [vmem:[%s11 + $0xb0] sm:$0xf]
        %v1419 = vld [vmem:[%s11 + $0xb4] sm:$0xff]
        %v1420 = vld [vmem:[%s11 + $0xbc] sm:$0xf]
        %v1421 = vld [vmem:[%s12] sm:$0xff]
        %v1422 = vld [vmem:[%s12 + $0x8] sm:$0xf]
        %v1423 = vld [vmem:[%s12 + $0xc] sm:$0xff]
        %v1424 = vld [vmem:[%s12 + $0x14] sm:$0xf]
        %v1425 = vld [vmem:[%s12 + $0x18] sm:$0xff]
        %v1426 = vld [vmem:[%s12 + $0x20] sm:$0xf]
        %v1427 = vld [vmem:[%s12 + $0x24] sm:$0xff]
        %v1428 = vld [vmem:[%s12 + $0x2c] sm:$0xf]
        %v1429 = vld [vmem:[%s12 + $0x30] sm:$0xff]
        %v1430 = vld [vmem:[%s12 + $0x38] sm:$0xf]
        %v1431 = vld [vmem:[%s12 + $0x3c] sm:$0xff]
        %v1432 = vld [vmem:[%s12 + $0x44] sm:$0xf]
        %v1433 = vld [vmem:[%s12 + $0x48] sm:$0xff]
        %v1434 = vld [vmem:[%s12 + $0x50] sm:$0xf]
        %v1435 = vld [vmem:[%s12 + $0x54] sm:$0xff]
        %v1436 = vld [vmem:[%s12 + $0x5c] sm:$0xf]
        %v1437 = vld [vmem:[%s12 + $0x60] sm:$0xff]
        %v1438 = vld [vmem:[%s12 + $0x68] sm:$0xf]
        %v1439 = vld [vmem:[%s12 + $0x6c] sm:$0xff]
        %v1440 = vld [vmem:[%s12 + $0x74] sm:$0xf]
        %v1441 = vld [vmem:[%s12 + $0x78] sm:$0xff]
        %v1442 = vld [vmem:[%s12 + $0x80] sm:$0xf]
        %v1443 = vld [vmem:[%s12 + $0x84] sm:$0xff]
        %v1444 = vld [vmem:[%s12 + $0x8c] sm:$0xf]
        %v1445 = vld [vmem:[%s12 + $0x90] sm:$0xff]
        %v1446 = vld [vmem:[%s12 + $0x98] sm:$0xf]
        %v1447 = vld [vmem:[%s12 + $0x9c] sm:$0xff]
        %v1448 = vld [vmem:[%s12 + $0xa4] sm:$0xf]
        %v1449 = vld [vmem:[%s12 + $0xa8] sm:$0xff]
        %v1450 = vld [vmem:[%s12 + $0xb0] sm:$0xf]
        %v1451 = vld [vmem:[%s12 + $0xb4] sm:$0xff]
        %v1452 = vld [vmem:[%s12 + $0xbc] sm:$0xf]
        %v1453 = vpack.c.bf16 %v1388, %v1387
        %v1454 = vld [vmem:[%s13] sm:$0x7]
        %v1456 = vlaneseq
        %v1457 = vshrl.u32 %v1456, 7
        %v1458 = vsub.s32 0, %v1457
        %v1459 = vrot.slane %v1454, %v1458
        %v1460 = vlaneseq
        %v1461 = vshrl.u32 %v1460, 7
        %v1462 = vsub.s32 1, %v1461
        %v1463 = vrot.slane %v1454, %v1462
        %v1464 = vlaneseq
        %v1465 = vshrl.u32 %v1464, 7
        %v1466 = vsub.s32 2, %v1465
        %v1467 = vrot.slane %v1454, %v1466
        %v1503 = vunpack.c.l.b16 %v1389
        %v1504 = vunpack.c.h.b16 %v1389
        %v1505 = vunpack.c.l.b16 %v1390
        %v1506 = vunpack.c.l.b16 %v1391
        %v1507 = vunpack.c.h.b16 %v1391
        %v1508 = vunpack.c.l.b16 %v1392
        %v1509 = vunpack.c.l.b16 %v1393
        %v1510 = vunpack.c.h.b16 %v1393
        %v1511 = vunpack.c.l.b16 %v1394
        %v1512 = vunpack.c.l.b16 %v1395
        %v1513 = vunpack.c.h.b16 %v1395
        %v1514 = vunpack.c.l.b16 %v1396
        %v1515 = vunpack.c.l.b16 %v1397
        %v1516 = vunpack.c.h.b16 %v1397
        %v1517 = vunpack.c.l.b16 %v1398
        %v1518 = vunpack.c.l.b16 %v1399
        %v1519 = vunpack.c.h.b16 %v1399
        %v1520 = vunpack.c.l.b16 %v1400
        %v1521 = vunpack.c.l.b16 %v1401
        %v1522 = vunpack.c.h.b16 %v1401
        %v1523 = vunpack.c.l.b16 %v1402
        %v1524 = vunpack.c.l.b16 %v1403
        %v1525 = vunpack.c.h.b16 %v1403
        %v1526 = vunpack.c.l.b16 %v1404
        %v1527 = vunpack.c.l.b16 %v1405
        %v1528 = vunpack.c.h.b16 %v1405
        %v1529 = vunpack.c.l.b16 %v1406
        %v1530 = vunpack.c.l.b16 %v1407
        %v1531 = vunpack.c.h.b16 %v1407
        %v1532 = vunpack.c.l.b16 %v1408
        %v1533 = vunpack.c.l.b16 %v1409
        %v1534 = vunpack.c.h.b16 %v1409
        %v1535 = vunpack.c.l.b16 %v1410
        %v1536 = vunpack.c.l.b16 %v1411
        %v1537 = vunpack.c.h.b16 %v1411
        %v1538 = vunpack.c.l.b16 %v1412
        %v1539 = vunpack.c.l.b16 %v1413
        %v1540 = vunpack.c.h.b16 %v1413
        %v1541 = vunpack.c.l.b16 %v1414
        %v1542 = vunpack.c.l.b16 %v1415
        %v1543 = vunpack.c.h.b16 %v1415
        %v1544 = vunpack.c.l.b16 %v1416
        %v1545 = vunpack.c.l.b16 %v1417
        %v1546 = vunpack.c.h.b16 %v1417
        %v1547 = vunpack.c.l.b16 %v1418
        %v1548 = vunpack.c.l.b16 %v1419
        %v1549 = vunpack.c.h.b16 %v1419
        %v1550 = vunpack.c.l.b16 %v1420
        %v1551 = vpack.c.b16 %v1506, %v1503
        %v1552 = vpack.c.b16 %v1507, %v1504
        %v1553 = vpack.c.b16 %v1508, %v1505
        %v1554 = vpack.c.b16 %v1512, %v1509
        %v1555 = vpack.c.b16 %v1513, %v1510
        %v1556 = vpack.c.b16 %v1514, %v1511
        %v1557 = vpack.c.b16 %v1518, %v1515
        %v1558 = vpack.c.b16 %v1519, %v1516
        %v1559 = vpack.c.b16 %v1520, %v1517
        %v1560 = vpack.c.b16 %v1524, %v1521
        %v1561 = vpack.c.b16 %v1525, %v1522
        %v1562 = vpack.c.b16 %v1526, %v1523
        %v1563 = vpack.c.b16 %v1530, %v1527
        %v1564 = vpack.c.b16 %v1531, %v1528
        %v1565 = vpack.c.b16 %v1532, %v1529
        %v1566 = vpack.c.b16 %v1536, %v1533
        %v1567 = vpack.c.b16 %v1537, %v1534
        %v1568 = vpack.c.b16 %v1538, %v1535
        %v1569 = vpack.c.b16 %v1542, %v1539
        %v1570 = vpack.c.b16 %v1543, %v1540
        %v1571 = vpack.c.b16 %v1544, %v1541
        %v1572 = vpack.c.b16 %v1548, %v1545
        %v1573 = vpack.c.b16 %v1549, %v1546
        %v1574 = vpack.c.b16 %v1550, %v1547
        %1599 = vmatprep.subr.bf16.mxu0 %v1552
        %1600 = vmatpush1.bf16.msra.mxu0 %v1551
        %1601 = vmatprep.subr.bf16.mxu0 %v1555
        %1602 = vmatpush1.bf16.msra.mxu0 %v1554
        %1603 = vmatprep.subr.bf16.mxu0 %v1558
        %1604 = vmatpush1.bf16.msra.mxu0 %v1557
        %1605 = vmatprep.subr.bf16.mxu0 %v1561
        %1606 = vmatpush1.bf16.msra.mxu0 %v1560
        %1607 = vmatprep.subr.bf16.mxu0 %v1564
        %1608 = vmatpush1.bf16.msra.mxu0 %v1563
        %1609 = vmatprep.subr.bf16.mxu0 %v1567
        %1610 = vmatpush1.bf16.msra.mxu0 %v1566
        %1611 = vmatprep.subr.bf16.mxu0 %v1570
        %1612 = vmatpush1.bf16.msra.mxu0 %v1569
        %1613 = vmatprep.subr.bf16.mxu0 %v1573
        %1614 = vmatpush1.bf16.msra.mxu0 %v1572
        %1615 = vmatprep.subr.bf16.mxu0 0
        %1616 = vmatpush1.bf16.msra.mxu0 0
        %1617 = vmatprep.subr.bf16.mxu0 0
        %1618 = vmatpush1.bf16.msra.mxu0 0
        %1619 = vmatprep.subr.bf16.mxu0 0
        %1620 = vmatpush1.bf16.msra.mxu0 0
        %1621 = vmatprep.subr.bf16.mxu0 0
        %1622 = vmatpush1.bf16.msra.mxu0 0
        %1623 = vmatprep.subr.bf16.mxu0 0
        %1624 = vmatpush1.bf16.msra.mxu0 0
        %1625 = vmatprep.subr.bf16.mxu0 0
        %1626 = vmatpush1.bf16.msra.mxu0 0
        %1627 = vmatprep.subr.bf16.mxu0 0
        %1628 = vmatpush1.bf16.msra.mxu0 0
        %1629 = vmatprep.subr.bf16.mxu0 0
        %1630 = vmatpush1.bf16.msra.mxu0 0
        %1631 = vmatprep.mubr.bf16.mxu0 0
        %1632 = vmatmul.mubr.bf16.gmra.mrb[0].mxu0 %v1453
        %v1633 = vpop.f32.mrb[0].mxu0
        %v1634 = vadd.f32 %v1459, %v1633
        %v1635 = vpop.f32.mrb[0].mxu0
        %v1636 = vadd.f32 %v1463, %v1635
        %v1637 = vpop.f32.mrb[0].mxu0
        %v1638 = vadd.f32 %v1459, %v1637
        %v1639 = vpop.f32.mrb[0].mxu0
        %v1640 = vadd.f32 %v1463, %v1639
        %1641 = vdwg.mxu0
        %1642 = vmatprep.subr.bf16.mxu0 0
        %1643 = vmatpush1.bf16.msra.mxu0 %v1553
        %1644 = vmatprep.subr.bf16.mxu0 0
        %1645 = vmatpush1.bf16.msra.mxu0 %v1556
        %1646 = vmatprep.subr.bf16.mxu0 0
        %1647 = vmatpush1.bf16.msra.mxu0 %v1559
        %1648 = vmatprep.subr.bf16.mxu0 0
        %1649 = vmatpush1.bf16.msra.mxu0 %v1562
        %1650 = vmatprep.subr.bf16.mxu0 0
        %1651 = vmatpush1.bf16.msra.mxu0 %v1565
        %1652 = vmatprep.subr.bf16.mxu0 0
        %1653 = vmatpush1.bf16.msra.mxu0 %v1568
        %1654 = vmatprep.subr.bf16.mxu0 0
        %1655 = vmatpush1.bf16.msra.mxu0 %v1571
        %1656 = vmatprep.subr.bf16.mxu0 0
        %1657 = vmatpush1.bf16.msra.mxu0 %v1574
        %1658 = vmatprep.subr.bf16.mxu0 0
        %1659 = vmatpush1.bf16.msra.mxu0 0
        %1660 = vmatprep.subr.bf16.mxu0 0
        %1661 = vmatpush1.bf16.msra.mxu0 0
        %1662 = vmatprep.subr.bf16.mxu0 0
        %1663 = vmatpush1.bf16.msra.mxu0 0
        %1664 = vmatprep.subr.bf16.mxu0 0
        %1665 = vmatpush1.bf16.msra.mxu0 0
        %1666 = vmatprep.subr.bf16.mxu0 0
        %1667 = vmatpush1.bf16.msra.mxu0 0
        %1668 = vmatprep.subr.bf16.mxu0 0
        %1669 = vmatpush1.bf16.msra.mxu0 0
        %1670 = vmatprep.subr.bf16.mxu0 0
        %1671 = vmatpush1.bf16.msra.mxu0 0
        %1672 = vmatprep.subr.bf16.mxu0 0
        %1673 = vmatpush1.bf16.msra.mxu0 0
        %1674 = vmatprep.mubr.bf16.mxu0 0
        %1675 = vmatmul.mubr.bf16.gmra.mrb[0].mxu0 %v1453
        %v1676 = vpop.f32.mrb[0].mxu0
        %v1677 = vadd.f32 %v1467, %v1676
        %v1678 = vpop.f32.mrb[0].mxu0
        %v1679 = vpop.f32.mrb[0].mxu0
        %v1680 = vadd.f32 %v1467, %v1679
        %v1681 = vpop.f32.mrb[0].mxu0
        %1682 = vdwg.mxu0
        %v1683 = vld [vmem:[%s14] sm:$0x7]
        %v1685 = vlaneseq
        %v1686 = vshrl.u32 %v1685, 7
        %v1687 = vsub.s32 0, %v1686
        %v1688 = vrot.slane %v1683, %v1687
        %v1689 = vlaneseq
        %v1690 = vshrl.u32 %v1689, 7
        %v1691 = vsub.s32 1, %v1690
        %v1692 = vrot.slane %v1683, %v1691
        %v1693 = vlaneseq
        %v1694 = vshrl.u32 %v1693, 7
        %v1695 = vsub.s32 2, %v1694
        %v1696 = vrot.slane %v1683, %v1695
        %v1732 = vunpack.c.l.b16 %v1421
        %v1733 = vunpack.c.h.b16 %v1421
        %v1734 = vunpack.c.l.b16 %v1422
        %v1735 = vunpack.c.l.b16 %v1423
        %v1736 = vunpack.c.h.b16 %v1423
        %v1737 = vunpack.c.l.b16 %v1424
        %v1738 = vunpack.c.l.b16 %v1425
        %v1739 = vunpack.c.h.b16 %v1425
        %v1740 = vunpack.c.l.b16 %v1426
        %v1741 = vunpack.c.l.b16 %v1427
        %v1742 = vunpack.c.h.b16 %v1427
        %v1743 = vunpack.c.l.b16 %v1428
        %v1744 = vunpack.c.l.b16 %v1429
        %v1745 = vunpack.c.h.b16 %v1429
        %v1746 = vunpack.c.l.b16 %v1430
        %v1747 = vunpack.c.l.b16 %v1431
        %v1748 = vunpack.c.h.b16 %v1431
        %v1749 = vunpack.c.l.b16 %v1432
        %v1750 = vunpack.c.l.b16 %v1433
        %v1751 = vunpack.c.h.b16 %v1433
        %v1752 = vunpack.c.l.b16 %v1434
        %v1753 = vunpack.c.l.b16 %v1435
        %v1754 = vunpack.c.h.b16 %v1435
        %v1755 = vunpack.c.l.b16 %v1436
        %v1756 = vunpack.c.l.b16 %v1437
        %v1757 = vunpack.c.h.b16 %v1437
        %v1758 = vunpack.c.l.b16 %v1438
        %v1759 = vunpack.c.l.b16 %v1439
        %v1760 = vunpack.c.h.b16 %v1439
        %v1761 = vunpack.c.l.b16 %v1440
        %v1762 = vunpack.c.l.b16 %v1441
        %v1763 = vunpack.c.h.b16 %v1441
        %v1764 = vunpack.c.l.b16 %v1442
        %v1765 = vunpack.c.l.b16 %v1443
        %v1766 = vunpack.c.h.b16 %v1443
        %v1767 = vunpack.c.l.b16 %v1444
        %v1768 = vunpack.c.l.b16 %v1445
        %v1769 = vunpack.c.h.b16 %v1445
        %v1770 = vunpack.c.l.b16 %v1446
        %v1771 = vunpack.c.l.b16 %v1447
        %v1772 = vunpack.c.h.b16 %v1447
        %v1773 = vunpack.c.l.b16 %v1448
        %v1774 = vunpack.c.l.b16 %v1449
        %v1775 = vunpack.c.h.b16 %v1449
        %v1776 = vunpack.c.l.b16 %v1450
        %v1777 = vunpack.c.l.b16 %v1451
        %v1778 = vunpack.c.h.b16 %v1451
        %v1779 = vunpack.c.l.b16 %v1452
        %v1780 = vpack.c.b16 %v1735, %v1732
        %v1781 = vpack.c.b16 %v1736, %v1733
        %v1782 = vpack.c.b16 %v1737, %v1734
        %v1783 = vpack.c.b16 %v1741, %v1738
        %v1784 = vpack.c.b16 %v1742, %v1739
        %v1785 = vpack.c.b16 %v1743, %v1740
        %v1786 = vpack.c.b16 %v1747, %v1744
        %v1787 = vpack.c.b16 %v1748, %v1745
        %v1788 = vpack.c.b16 %v1749, %v1746
        %v1789 = vpack.c.b16 %v1753, %v1750
        %v1790 = vpack.c.b16 %v1754, %v1751
        %v1791 = vpack.c.b16 %v1755, %v1752
        %v1792 = vpack.c.b16 %v1759, %v1756
        %v1793 = vpack.c.b16 %v1760, %v1757
        %v1794 = vpack.c.b16 %v1761, %v1758
        %v1795 = vpack.c.b16 %v1765, %v1762
        %v1796 = vpack.c.b16 %v1766, %v1763
        %v1797 = vpack.c.b16 %v1767, %v1764
        %v1798 = vpack.c.b16 %v1771, %v1768
        %v1799 = vpack.c.b16 %v1772, %v1769
        %v1800 = vpack.c.b16 %v1773, %v1770
        %v1801 = vpack.c.b16 %v1777, %v1774
        %v1802 = vpack.c.b16 %v1778, %v1775
        %v1803 = vpack.c.b16 %v1779, %v1776
        %1828 = vmatprep.subr.bf16.mxu0 %v1781
        %1829 = vmatpush1.bf16.msra.mxu0 %v1780
        %1830 = vmatprep.subr.bf16.mxu0 %v1784
        %1831 = vmatpush1.bf16.msra.mxu0 %v1783
        %1832 = vmatprep.subr.bf16.mxu0 %v1787
        %1833 = vmatpush1.bf16.msra.mxu0 %v1786
        %1834 = vmatprep.subr.bf16.mxu0 %v1790
        %1835 = vmatpush1.bf16.msra.mxu0 %v1789
        %1836 = vmatprep.subr.bf16.mxu0 %v1793
        %1837 = vmatpush1.bf16.msra.mxu0 %v1792
        %1838 = vmatprep.subr.bf16.mxu0 %v1796
        %1839 = vmatpush1.bf16.msra.mxu0 %v1795
        %1840 = vmatprep.subr.bf16.mxu0 %v1799
        %1841 = vmatpush1.bf16.msra.mxu0 %v1798
        %1842 = vmatprep.subr.bf16.mxu0 %v1802
        %1843 = vmatpush1.bf16.msra.mxu0 %v1801
        %1844 = vmatprep.subr.bf16.mxu0 0
        %1845 = vmatpush1.bf16.msra.mxu0 0
        %1846 = vmatprep.subr.bf16.mxu0 0
        %1847 = vmatpush1.bf16.msra.mxu0 0
        %1848 = vmatprep.subr.bf16.mxu0 0
        %1849 = vmatpush1.bf16.msra.mxu0 0
        %1850 = vmatprep.subr.bf16.mxu0 0
        %1851 = vmatpush1.bf16.msra.mxu0 0
        %1852 = vmatprep.subr.bf16.mxu0 0
        %1853 = vmatpush1.bf16.msra.mxu0 0
        %1854 = vmatprep.subr.bf16.mxu0 0
        %1855 = vmatpush1.bf16.msra.mxu0 0
        %1856 = vmatprep.subr.bf16.mxu0 0
        %1857 = vmatpush1.bf16.msra.mxu0 0
        %1858 = vmatprep.subr.bf16.mxu0 0
        %1859 = vmatpush1.bf16.msra.mxu0 0
        %1860 = vmatprep.mubr.bf16.mxu0 0
        %1861 = vmatmul.mubr.bf16.gmra.mrb[0].mxu0 0
        %v1862 = vpop.f32.mrb[0].mxu0
        %v1863 = vadd.f32 %v1688, %v1862
        %v1864 = vpop.f32.mrb[0].mxu0
        %v1865 = vadd.f32 %v1692, %v1864
        %v1866 = vpop.f32.mrb[0].mxu0
        %v1867 = vpop.f32.mrb[0].mxu0
        %1868 = vdwg.mxu0
        %1869 = vmatprep.subr.bf16.mxu0 0
        %1870 = vmatpush1.bf16.msra.mxu0 %v1782
        %1871 = vmatprep.subr.bf16.mxu0 0
        %1872 = vmatpush1.bf16.msra.mxu0 %v1785
        %1873 = vmatprep.subr.bf16.mxu0 0
        %1874 = vmatpush1.bf16.msra.mxu0 %v1788
        %1875 = vmatprep.subr.bf16.mxu0 0
        %1876 = vmatpush1.bf16.msra.mxu0 %v1791
        %1877 = vmatprep.subr.bf16.mxu0 0
        %1878 = vmatpush1.bf16.msra.mxu0 %v1794
        %1879 = vmatprep.subr.bf16.mxu0 0
        %1880 = vmatpush1.bf16.msra.mxu0 %v1797
        %1881 = vmatprep.subr.bf16.mxu0 0
        %1882 = vmatpush1.bf16.msra.mxu0 %v1800
        %1883 = vmatprep.subr.bf16.mxu0 0
        %1884 = vmatpush1.bf16.msra.mxu0 %v1803
        %1885 = vmatprep.subr.bf16.mxu0 0
        %1886 = vmatpush1.bf16.msra.mxu0 0
        %1887 = vmatprep.subr.bf16.mxu0 0
        %1888 = vmatpush1.bf16.msra.mxu0 0
        %1889 = vmatprep.subr.bf16.mxu0 0
        %1890 = vmatpush1.bf16.msra.mxu0 0
        %1891 = vmatprep.subr.bf16.mxu0 0
        %1892 = vmatpush1.bf16.msra.mxu0 0
        %1893 = vmatprep.subr.bf16.mxu0 0
        %1894 = vmatpush1.bf16.msra.mxu0 0
        %1895 = vmatprep.subr.bf16.mxu0 0
        %1896 = vmatpush1.bf16.msra.mxu0 0
        %1897 = vmatprep.subr.bf16.mxu0 0
        %1898 = vmatpush1.bf16.msra.mxu0 0
        %1899 = vmatprep.subr.bf16.mxu0 0
        %1900 = vmatpush1.bf16.msra.mxu0 0
        %1901 = vmatprep.mubr.bf16.mxu0 0
        %1902 = vmatmul.mubr.bf16.gmra.mrb[0].mxu0 0
        %v1903 = vpop.f32.mrb[0].mxu0
        %v1904 = vadd.f32 %v1696, %v1903
        %v1905 = vpop.f32.mrb[0].mxu0
        %v1906 = vpop.f32.mrb[0].mxu0
        %v1907 = vpop.f32.mrb[0].mxu0
        %1908 = vdwg.mxu0
        %v1909 = vadd.f32 %v1634, %v1863
        %v1910 = vxor.u32 %v1909, 2147483648
        %v1911 = vmul.f32 %v1910, 1.442695
        %v1912 = vpow.pop %v1911
        %v1913 = vadd.f32 %v1912, 1.0
        %v1914 = vrcp.pop %v1913
        %v1915 = vmul.f32 1.0, %v1914
        %v1916 = vadd.f32 %v1636, %v1865
        %v1917 = vxor.u32 %v1916, 2147483648
        %v1918 = vmul.f32 %v1917, 1.442695
        %v1919 = vpow.pop %v1918
        %v1920 = vadd.f32 %v1919, 1.0
        %v1921 = vrcp.pop %v1920
        %v1922 = vmul.f32 1.0, %v1921
        %v1923 = vmul.f32 %v1915, %v1904
        %v1924 = vadd.f32 %v1677, %v1923
        %v1925 = vtanh.pop %v1924
        %v1926 = vsub.f32 1.0, %v1922
        %v1927 = vmul.f32 %v1926, %v1925
        %v1928 = vmul.f32 %v1922, 0.0
        %v1929 = vadd.f32 %v1927, %v1928
        %1930 = vst [vmem:[#allocation2] sm:$0xff] %v1929
        %v1931 = vpack.c.bf16 %v1929, %v1929
        %1932 = vmatprep.subr.bf16.mxu0 %v1781
        %1933 = vmatpush1.bf16.msra.mxu0 %v1780
        %1934 = vmatprep.subr.bf16.mxu0 %v1784
        %1935 = vmatpush1.bf16.msra.mxu0 %v1783
        %1936 = vmatprep.subr.bf16.mxu0 %v1787
        %1937 = vmatpush1.bf16.msra.mxu0 %v1786
        %1938 = vmatprep.subr.bf16.mxu0 %v1790
        %1939 = vmatpush1.bf16.msra.mxu0 %v1789
        %1940 = vmatprep.subr.bf16.mxu0 %v1793
        %1941 = vmatpush1.bf16.msra.mxu0 %v1792
        %1942 = vmatprep.subr.bf16.mxu0 %v1796
        %1943 = vmatpush1.bf16.msra.mxu0 %v1795
        %1944 = vmatprep.subr.bf16.mxu0 %v1799
        %1945 = vmatpush1.bf16.msra.mxu0 %v1798
        %1946 = vmatprep.subr.bf16.mxu0 %v1802
        %1947 = vmatpush1.bf16.msra.mxu0 %v1801
        %1948 = vmatprep.subr.bf16.mxu0 0
        %1949 = vmatpush1.bf16.msra.mxu0 0
        %1950 = vmatprep.subr.bf16.mxu0 0
        %1951 = vmatpush1.bf16.msra.mxu0 0
        %1952 = vmatprep.subr.bf16.mxu0 0
        %1953 = vmatpush1.bf16.msra.mxu0 0
        %1954 = vmatprep.subr.bf16.mxu0 0
        %1955 = vmatpush1.bf16.msra.mxu0 0
        %1956 = vmatprep.subr.bf16.mxu0 0
        %1957 = vmatpush1.bf16.msra.mxu0 0
        %1958 = vmatprep.subr.bf16.mxu0 0
        %1959 = vmatpush1.bf16.msra.mxu0 0
        %1960 = vmatprep.subr.bf16.mxu0 0
        %1961 = vmatpush1.bf16.msra.mxu0 0
        %1962 = vmatprep.subr.bf16.mxu0 0
        %1963 = vmatpush1.bf16.msra.mxu0 0
        %1964 = vmatprep.mubr.bf16.mxu0 0
        %1965 = vmatmul.mubr.bf16.gmra.mrb[0].mxu0 %v1931
        %v1966 = vpop.f32.mrb[0].mxu0
        %v1967 = vadd.f32 %v1688, %v1966
        %v1968 = vpop.f32.mrb[0].mxu0
        %v1969 = vadd.f32 %v1692, %v1968
        %v1970 = vpop.f32.mrb[0].mxu0
        %v1971 = vpop.f32.mrb[0].mxu0
        %1972 = vdwg.mxu0
        %1973 = vmatprep.subr.bf16.mxu0 0
        %1974 = vmatpush1.bf16.msra.mxu0 %v1782
        %1975 = vmatprep.subr.bf16.mxu0 0
        %1976 = vmatpush1.bf16.msra.mxu0 %v1785
        %1977 = vmatprep.subr.bf16.mxu0 0
        %1978 = vmatpush1.bf16.msra.mxu0 %v1788
        %1979 = vmatprep.subr.bf16.mxu0 0
        %1980 = vmatpush1.bf16.msra.mxu0 %v1791
        %1981 = vmatprep.subr.bf16.mxu0 0
        %1982 = vmatpush1.bf16.msra.mxu0 %v1794
        %1983 = vmatprep.subr.bf16.mxu0 0
        %1984 = vmatpush1.bf16.msra.mxu0 %v1797
        %1985 = vmatprep.subr.bf16.mxu0 0
        %1986 = vmatpush1.bf16.msra.mxu0 %v1800
        %1987 = vmatprep.subr.bf16.mxu0 0
        %1988 = vmatpush1.bf16.msra.mxu0 %v1803
        %1989 = vmatprep.subr.bf16.mxu0 0
        %1990 = vmatpush1.bf16.msra.mxu0 0
        %1991 = vmatprep.subr.bf16.mxu0 0
        %1992 = vmatpush1.bf16.msra.mxu0 0
        %1993 = vmatprep.subr.bf16.mxu0 0
        %1994 = vmatpush1.bf16.msra.mxu0 0
        %1995 = vmatprep.subr.bf16.mxu0 0
        %1996 = vmatpush1.bf16.msra.mxu0 0
        %1997 = vmatprep.subr.bf16.mxu0 0
        %1998 = vmatpush1.bf16.msra.mxu0 0
        %1999 = vmatprep.subr.bf16.mxu0 0
        %2000 = vmatpush1.bf16.msra.mxu0 0
        %2001 = vmatprep.subr.bf16.mxu0 0
        %2002 = vmatpush1.bf16.msra.mxu0 0
        %2003 = vmatprep.subr.bf16.mxu0 0
        %2004 = vmatpush1.bf16.msra.mxu0 0
        %2005 = vmatprep.mubr.bf16.mxu0 0
        %2006 = vmatmul.mubr.bf16.gmra.mrb[0].mxu0 %v1931
        %v2007 = vpop.f32.mrb[0].mxu0
        %v2008 = vadd.f32 %v1696, %v2007
        %v2009 = vpop.f32.mrb[0].mxu0
        %v2010 = vpop.f32.mrb[0].mxu0
        %v2011 = vpop.f32.mrb[0].mxu0
        %2012 = vdwg.mxu0
        %v2013 = vadd.f32 %v1638, %v1967
        %v2014 = vxor.u32 %v2013, 2147483648
        %v2015 = vmul.f32 %v2014, 1.442695
        %v2016 = vpow.pop %v2015
        %v2017 = vadd.f32 %v2016, 1.0
        %v2018 = vrcp.pop %v2017
        %v2019 = vmul.f32 1.0, %v2018
        %v2020 = vadd.f32 %v1640, %v1969
        %v2021 = vxor.u32 %v2020, 2147483648
        %v2022 = vmul.f32 %v2021, 1.442695
        %v2023 = vpow.pop %v2022
        %v2024 = vadd.f32 %v2023, 1.0
        %v2025 = vrcp.pop %v2024
        %v2026 = vmul.f32 1.0, %v2025
        %v2027 = vmul.f32 %v2019, %v2008
        %v2028 = vadd.f32 %v1680, %v2027
        %v2029 = vtanh.pop %v2028
        %v2030 = vsub.f32 1.0, %v2026
        %v2031 = vmul.f32 %v2030, %v2029
        %v2032 = vmul.f32 %v2026, %v1929
        %v2033 = vadd.f32 %v2031, %v2032
        %2034 = vst [vmem:[#allocation2 + $0x8] sm:$0xff] %v2033
        %v2035 = vld [vmem:[%s15] sm:$0xf]
        %v2036 = vld [vmem:[%s15 + $0x4] sm:$0xf]
        %v2037 = vld [vmem:[%s15 + $0x8] sm:$0xf]
        %v2038 = vld [vmem:[%s15 + $0xc] sm:$0xf]
        %v2039 = vld [vmem:[%s15 + $0x10] sm:$0xf]
        %v2040 = vld [vmem:[%s15 + $0x14] sm:$0xf]
        %v2041 = vld [vmem:[%s15 + $0x18] sm:$0xf]
        %v2042 = vld [vmem:[%s15 + $0x1c] sm:$0xf]
        %v2043 = vld [vmem:[%s15 + $0x20] sm:$0xf]
        %v2044 = vld [vmem:[%s15 + $0x24] sm:$0xf]
        %v2045 = vld [vmem:[%s15 + $0x28] sm:$0xf]
        %v2046 = vld [vmem:[%s15 + $0x2c] sm:$0xf]
        %v2047 = vld [vmem:[%s15 + $0x30] sm:$0xf]
        %v2048 = vld [vmem:[%s15 + $0x34] sm:$0xf]
        %v2049 = vld [vmem:[%s15 + $0x38] sm:$0xf]
        %v2050 = vld [vmem:[%s15 + $0x3c] sm:$0xf]
        %v2051 = vpack.c.bf16 %v2033, %v2033
        %v2052 = vld [vmem:[%s16] sm:$0x1]
        %v2054 = vlaneseq
        %v2055 = vshrl.u32 %v2054, 7
        %v2056 = vsub.s32 0, %v2055
        %v2057 = vrot.slane %v2052, %v2056
        %v2075 = vunpack.c.l.b16 %v2035
        %v2076 = vunpack.c.l.b16 %v2036
        %v2077 = vunpack.c.l.b16 %v2037
        %v2078 = vunpack.c.l.b16 %v2038
        %v2079 = vunpack.c.l.b16 %v2039
        %v2080 = vunpack.c.l.b16 %v2040
        %v2081 = vunpack.c.l.b16 %v2041
        %v2082 = vunpack.c.l.b16 %v2042
        %v2083 = vunpack.c.l.b16 %v2043
        %v2084 = vunpack.c.l.b16 %v2044
        %v2085 = vunpack.c.l.b16 %v2045
        %v2086 = vunpack.c.l.b16 %v2046
        %v2087 = vunpack.c.l.b16 %v2047
        %v2088 = vunpack.c.l.b16 %v2048
        %v2089 = vunpack.c.l.b16 %v2049
        %v2090 = vunpack.c.l.b16 %v2050
        %v2091 = vpack.c.b16 %v2076, %v2075
        %v2092 = vpack.c.b16 %v2078, %v2077
        %v2093 = vpack.c.b16 %v2080, %v2079
        %v2094 = vpack.c.b16 %v2082, %v2081
        %v2095 = vpack.c.b16 %v2084, %v2083
        %v2096 = vpack.c.b16 %v2086, %v2085
        %v2097 = vpack.c.b16 %v2088, %v2087
        %v2098 = vpack.c.b16 %v2090, %v2089
        %2107 = vmatprep.subr.bf16.mxu0 0
        %2108 = vmatpush1.bf16.msra.mxu0 %v2091
        %2109 = vmatprep.subr.bf16.mxu0 0
        %2110 = vmatpush1.bf16.msra.mxu0 %v2092
        %2111 = vmatprep.subr.bf16.mxu0 0
        %2112 = vmatpush1.bf16.msra.mxu0 %v2093
        %2113 = vmatprep.subr.bf16.mxu0 0
        %2114 = vmatpush1.bf16.msra.mxu0 %v2094
        %2115 = vmatprep.subr.bf16.mxu0 0
        %2116 = vmatpush1.bf16.msra.mxu0 %v2095
        %2117 = vmatprep.subr.bf16.mxu0 0
        %2118 = vmatpush1.bf16.msra.mxu0 %v2096
        %2119 = vmatprep.subr.bf16.mxu0 0
        %2120 = vmatpush1.bf16.msra.mxu0 %v2097
        %2121 = vmatprep.subr.bf16.mxu0 0
        %2122 = vmatpush1.bf16.msra.mxu0 %v2098
        %2123 = vmatprep.subr.bf16.mxu0 0
        %2124 = vmatpush1.bf16.msra.mxu0 0
        %2125 = vmatprep.subr.bf16.mxu0 0
        %2126 = vmatpush1.bf16.msra.mxu0 0
        %2127 = vmatprep.subr.bf16.mxu0 0
        %2128 = vmatpush1.bf16.msra.mxu0 0
        %2129 = vmatprep.subr.bf16.mxu0 0
        %2130 = vmatpush1.bf16.msra.mxu0 0
        %2131 = vmatprep.subr.bf16.mxu0 0
        %2132 = vmatpush1.bf16.msra.mxu0 0
        %2133 = vmatprep.subr.bf16.mxu0 0
        %2134 = vmatpush1.bf16.msra.mxu0 0
        %2135 = vmatprep.subr.bf16.mxu0 0
        %2136 = vmatpush1.bf16.msra.mxu0 0
        %2137 = vmatprep.subr.bf16.mxu0 0
        %2138 = vmatpush1.bf16.msra.mxu0 0
        %2139 = vmatprep.mubr.bf16.mxu0 0
        %2140 = vmatmul.mubr.bf16.gmra.mrb[0].mxu0 %v2051
        %v2141 = vpop.f32.mrb[0].mxu0
        %v2142 = vadd.f32 %v2057, %v2141
        %v2143 = vpop.f32.mrb[0].mxu0
        %v2144 = vpop.f32.mrb[0].mxu0
        %v2145 = vpop.f32.mrb[0].mxu0
        %2146 = vdwg.mxu0
        %s2147 = scalar_lea.vmem %s15, 64
        %v2148 = vld [vmem:[%s2147] sm:$0xf]
        %v2149 = vld [vmem:[%s2147 + $0x4] sm:$0xf]
        %v2150 = vld [vmem:[%s2147 + $0x8] sm:$0xf]
        %v2151 = vld [vmem:[%s2147 + $0xc] sm:$0xf]
        %v2152 = vld [vmem:[%s2147 + $0x10] sm:$0xf]
        %v2153 = vld [vmem:[%s2147 + $0x14] sm:$0xf]
        %v2154 = vld [vmem:[%s2147 + $0x18] sm:$0xf]
        %v2155 = vld [vmem:[%s2147 + $0x1c] sm:$0xf]
        %v2156 = vld [vmem:[%s2147 + $0x20] sm:$0xf]
        %v2157 = vld [vmem:[%s2147 + $0x24] sm:$0xf]
        %v2158 = vld [vmem:[%s2147 + $0x28] sm:$0xf]
        %v2159 = vld [vmem:[%s2147 + $0x2c] sm:$0xf]
        %v2160 = vld [vmem:[%s2147 + $0x30] sm:$0xf]
        %v2161 = vld [vmem:[%s2147 + $0x34] sm:$0xf]
        %v2162 = vld [vmem:[%s2147 + $0x38] sm:$0xf]
        %v2163 = vld [vmem:[%s2147 + $0x3c] sm:$0xf]
        %s2164 = scalar_lea.vmem %s16, 1
        %v2165 = vld [vmem:[%s2164] sm:$0x1]
        %v2167 = vlaneseq
        %v2168 = vshrl.u32 %v2167, 7
        %v2169 = vsub.s32 0, %v2168
        %v2170 = vrot.slane %v2165, %v2169
        %v2188 = vunpack.c.l.b16 %v2148
        %v2189 = vunpack.c.l.b16 %v2149
        %v2190 = vunpack.c.l.b16 %v2150
        %v2191 = vunpack.c.l.b16 %v2151
        %v2192 = vunpack.c.l.b16 %v2152
        %v2193 = vunpack.c.l.b16 %v2153
        %v2194 = vunpack.c.l.b16 %v2154
        %v2195 = vunpack.c.l.b16 %v2155
        %v2196 = vunpack.c.l.b16 %v2156
        %v2197 = vunpack.c.l.b16 %v2157
        %v2198 = vunpack.c.l.b16 %v2158
        %v2199 = vunpack.c.l.b16 %v2159
        %v2200 = vunpack.c.l.b16 %v2160
        %v2201 = vunpack.c.l.b16 %v2161
        %v2202 = vunpack.c.l.b16 %v2162
        %v2203 = vunpack.c.l.b16 %v2163
        %v2204 = vpack.c.b16 %v2189, %v2188
        %v2205 = vpack.c.b16 %v2191, %v2190
        %v2206 = vpack.c.b16 %v2193, %v2192
        %v2207 = vpack.c.b16 %v2195, %v2194
        %v2208 = vpack.c.b16 %v2197, %v2196
        %v2209 = vpack.c.b16 %v2199, %v2198
        %v2210 = vpack.c.b16 %v2201, %v2200
        %v2211 = vpack.c.b16 %v2203, %v2202
        %2220 = vmatprep.subr.bf16.mxu0 0
        %2221 = vmatpush1.bf16.msra.mxu0 %v2204
        %2222 = vmatprep.subr.bf16.mxu0 0
        %2223 = vmatpush1.bf16.msra.mxu0 %v2205
        %2224 = vmatprep.subr.bf16.mxu0 0
        %2225 = vmatpush1.bf16.msra.mxu0 %v2206
        %2226 = vmatprep.subr.bf16.mxu0 0
        %2227 = vmatpush1.bf16.msra.mxu0 %v2207
        %2228 = vmatprep.subr.bf16.mxu0 0
        %2229 = vmatpush1.bf16.msra.mxu0 %v2208
        %2230 = vmatprep.subr.bf16.mxu0 0
        %2231 = vmatpush1.bf16.msra.mxu0 %v2209
        %2232 = vmatprep.subr.bf16.mxu0 0
        %2233 = vmatpush1.bf16.msra.mxu0 %v2210
        %2234 = vmatprep.subr.bf16.mxu0 0
        %2235 = vmatpush1.bf16.msra.mxu0 %v2211
        %2236 = vmatprep.subr.bf16.mxu0 0
        %2237 = vmatpush1.bf16.msra.mxu0 0
        %2238 = vmatprep.subr.bf16.mxu0 0
        %2239 = vmatpush1.bf16.msra.mxu0 0
        %2240 = vmatprep.subr.bf16.mxu0 0
        %2241 = vmatpush1.bf16.msra.mxu0 0
        %2242 = vmatprep.subr.bf16.mxu0 0
        %2243 = vmatpush1.bf16.msra.mxu0 0
        %2244 = vmatprep.subr.bf16.mxu0 0
        %2245 = vmatpush1.bf16.msra.mxu0 0
        %2246 = vmatprep.subr.bf16.mxu0 0
        %2247 = vmatpush1.bf16.msra.mxu0 0
        %2248 = vmatprep.subr.bf16.mxu0 0
        %2249 = vmatpush1.bf16.msra.mxu0 0
        %2250 = vmatprep.subr.bf16.mxu0 0
        %2251 = vmatpush1.bf16.msra.mxu0 0
        %2252 = vmatprep.mubr.bf16.mxu0 0
        %2253 = vmatmul.mubr.bf16.gmra.mrb[0].mxu0 %v2051
        %v2254 = vpop.f32.mrb[0].mxu0
        %v2255 = vadd.f32 %v2170, %v2254
        %v2256 = vpop.f32.mrb[0].mxu0
        %v2257 = vpop.f32.mrb[0].mxu0
        %v2258 = vpop.f32.mrb[0].mxu0
        %2259 = vdwg.mxu0
        %v2260 = vadd.f32 %v2255, 1.0
        %v2261 = vmul.f32 %v2142, %v2142
        %v2262 = vsub.f32 %v2260, %v2261
        %v2263 = vmul.f32 %v2255, 1.442695
        %v2264 = vpow.pop %v2263
        %v2265 = vsub.f32 %v2262, %v2264
        %2266 = vadd.xlane.f32.xlu0 %v2265
        %v2267 = vpop.xlane.xlu0 %2266
        %v2268 = vmul.f32 %v2267, -0.5
        %s2269 = scalar_lea.vmem %s15, 128
        %v2270 = vld [vmem:[%s2269] sm:$0xf]
        %v2271 = vld [vmem:[%s2269 + $0x4] sm:$0xf]
        %v2272 = vld [vmem:[%s2269 + $0x8] sm:$0xf]
        %v2273 = vld [vmem:[%s2269 + $0xc] sm:$0xf]
        %v2274 = vld [vmem:[%s2269 + $0x10] sm:$0xf]
        %v2275 = vld [vmem:[%s2269 + $0x14] sm:$0xf]
        %v2276 = vld [vmem:[%s2269 + $0x18] sm:$0xf]
        %v2277 = vld [vmem:[%s2269 + $0x1c] sm:$0xf]
        %v2278 = vld [vmem:[%s2269 + $0x20] sm:$0xf]
        %v2279 = vld [vmem:[%s2269 + $0x24] sm:$0xf]
        %v2280 = vld [vmem:[%s2269 + $0x28] sm:$0xf]
        %v2281 = vld [vmem:[%s2269 + $0x2c] sm:$0xf]
        %v2282 = vld [vmem:[%s2269 + $0x30] sm:$0xf]
        %v2283 = vld [vmem:[%s2269 + $0x34] sm:$0xf]
        %v2284 = vld [vmem:[%s2269 + $0x38] sm:$0xf]
        %v2285 = vld [vmem:[%s2269 + $0x3c] sm:$0xf]
        %v2286 = vpack.c.bf16 %v2142, %v2142
        %s2287 = scalar_lea.vmem %s16, 2
        %v2288 = vld [vmem:[%s2287] sm:$0x1]
        %v2290 = vlaneseq
        %v2291 = vshrl.u32 %v2290, 7
        %v2292 = vsub.s32 0, %v2291
        %v2293 = vrot.slane %v2288, %v2292
        %v2311 = vunpack.c.l.b16 %v2270
        %v2312 = vunpack.c.l.b16 %v2271
        %v2313 = vunpack.c.l.b16 %v2272
        %v2314 = vunpack.c.l.b16 %v2273
        %v2315 = vunpack.c.l.b16 %v2274
        %v2316 = vunpack.c.l.b16 %v2275
        %v2317 = vunpack.c.l.b16 %v2276
        %v2318 = vunpack.c.l.b16 %v2277
        %v2319 = vunpack.c.l.b16 %v2278
        %v2320 = vunpack.c.l.b16 %v2279
        %v2321 = vunpack.c.l.b16 %v2280
        %v2322 = vunpack.c.l.b16 %v2281
        %v2323 = vunpack.c.l.b16 %v2282
        %v2324 = vunpack.c.l.b16 %v2283
        %v2325 = vunpack.c.l.b16 %v2284
        %v2326 = vunpack.c.l.b16 %v2285
        %v2327 = vpack.c.b16 %v2312, %v2311
        %v2328 = vpack.c.b16 %v2314, %v2313
        %v2329 = vpack.c.b16 %v2316, %v2315
        %v2330 = vpack.c.b16 %v2318, %v2317
        %v2331 = vpack.c.b16 %v2320, %v2319
        %v2332 = vpack.c.b16 %v2322, %v2321
        %v2333 = vpack.c.b16 %v2324, %v2323
        %v2334 = vpack.c.b16 %v2326, %v2325
        %2343 = vmatprep.subr.bf16.mxu0 0
        %2344 = vmatpush1.bf16.msra.mxu0 %v2327
        %2345 = vmatprep.subr.bf16.mxu0 0
        %2346 = vmatpush1.bf16.msra.mxu0 %v2328
        %2347 = vmatprep.subr.bf16.mxu0 0
        %2348 = vmatpush1.bf16.msra.mxu0 %v2329
        %2349 = vmatprep.subr.bf16.mxu0 0
        %2350 = vmatpush1.bf16.msra.mxu0 %v2330
        %2351 = vmatprep.subr.bf16.mxu0 0
        %2352 = vmatpush1.bf16.msra.mxu0 %v2331
        %2353 = vmatprep.subr.bf16.mxu0 0
        %2354 = vmatpush1.bf16.msra.mxu0 %v2332
        %2355 = vmatprep.subr.bf16.mxu0 0
        %2356 = vmatpush1.bf16.msra.mxu0 %v2333
        %2357 = vmatprep.subr.bf16.mxu0 0
        %2358 = vmatpush1.bf16.msra.mxu0 %v2334
        %2359 = vmatprep.subr.bf16.mxu0 0
        %2360 = vmatpush1.bf16.msra.mxu0 0
        %2361 = vmatprep.subr.bf16.mxu0 0
        %2362 = vmatpush1.bf16.msra.mxu0 0
        %2363 = vmatprep.subr.bf16.mxu0 0
        %2364 = vmatpush1.bf16.msra.mxu0 0
        %2365 = vmatprep.subr.bf16.mxu0 0
        %2366 = vmatpush1.bf16.msra.mxu0 0
        %2367 = vmatprep.subr.bf16.mxu0 0
        %2368 = vmatpush1.bf16.msra.mxu0 0
        %2369 = vmatprep.subr.bf16.mxu0 0
        %2370 = vmatpush1.bf16.msra.mxu0 0
        %2371 = vmatprep.subr.bf16.mxu0 0
        %2372 = vmatpush1.bf16.msra.mxu0 0
        %2373 = vmatprep.subr.bf16.mxu0 0
        %2374 = vmatpush1.bf16.msra.mxu0 0
        %2375 = vmatprep.mubr.bf16.mxu0 0
        %2376 = vmatmul.mubr.bf16.gmra.mrb[0].mxu0 %v2286
        %v2377 = vpop.f32.mrb[0].mxu0
        %v2378 = vadd.f32 %v2293, %v2377
        %v2379 = vpop.f32.mrb[0].mxu0
        %v2380 = vpop.f32.mrb[0].mxu0
        %v2381 = vpop.f32.mrb[0].mxu0
        %2382 = vdwg.mxu0
        %v2383 = vld [vmem:[%s8] sm:$0xff]
        %v2384 = vld [vmem:[%s8 + $0x8] sm:$0xff]
        %v2385 = vld [vmem:[%s8 + $0x10] sm:$0xff]
        %v2386 = vld [vmem:[%s8 + $0x18] sm:$0xff]
        %v2387 = vld [vmem:[%s8 + $0x20] sm:$0xff]
        %v2388 = vld [vmem:[%s8 + $0x28] sm:$0xff]
        %v2389 = vld [vmem:[%s8 + $0x30] sm:$0xff]
        %v2390 = vld [vmem:[%s8 + $0x38] sm:$0xff]
        %s2391 = scalar_lea.vmem %s11, 192
        %v2392 = vld [vmem:[%s2391] sm:$0xff]
        %v2393 = vld [vmem:[%s2391 + $0x8] sm:$0xf]
        %v2394 = vld [vmem:[%s2391 + $0xc] sm:$0xff]
        %v2395 = vld [vmem:[%s2391 + $0x14] sm:$0xf]
        %v2396 = vld [vmem:[%s2391 + $0x18] sm:$0xff]
        %v2397 = vld [vmem:[%s2391 + $0x20] sm:$0xf]
        %v2398 = vld [vmem:[%s2391 + $0x24] sm:$0xff]
        %v2399 = vld [vmem:[%s2391 + $0x2c] sm:$0xf]
        %v2400 = vld [vmem:[%s2391 + $0x30] sm:$0xff]
        %v2401 = vld [vmem:[%s2391 + $0x38] sm:$0xf]
        %v2402 = vld [vmem:[%s2391 + $0x3c] sm:$0xff]
        %v2403 = vld [vmem:[%s2391 + $0x44] sm:$0xf]
        %v2404 = vld [vmem:[%s2391 + $0x48] sm:$0xff]
        %v2405 = vld [vmem:[%s2391 + $0x50] sm:$0xf]
        %v2406 = vld [vmem:[%s2391 + $0x54] sm:$0xff]
        %v2407 = vld [vmem:[%s2391 + $0x5c] sm:$0xf]
        %v2408 = vld [vmem:[%s2391 + $0x60] sm:$0xff]
        %v2409 = vld [vmem:[%s2391 + $0x68] sm:$0xf]
        %v2410 = vld [vmem:[%s2391 + $0x6c] sm:$0xff]
        %v2411 = vld [vmem:[%s2391 + $0x74] sm:$0xf]
        %v2412 = vld [vmem:[%s2391 + $0x78] sm:$0xff]
        %v2413 = vld [vmem:[%s2391 + $0x80] sm:$0xf]
        %v2414 = vld [vmem:[%s2391 + $0x84] sm:$0xff]
        %v2415 = vld [vmem:[%s2391 + $0x8c] sm:$0xf]
        %v2416 = vld [vmem:[%s2391 + $0x90] sm:$0xff]
        %v2417 = vld [vmem:[%s2391 + $0x98] sm:$0xf]
        %v2418 = vld [vmem:[%s2391 + $0x9c] sm:$0xff]
        %v2419 = vld [vmem:[%s2391 + $0xa4] sm:$0xf]
        %v2420 = vld [vmem:[%s2391 + $0xa8] sm:$0xff]
        %v2421 = vld [vmem:[%s2391 + $0xb0] sm:$0xf]
        %v2422 = vld [vmem:[%s2391 + $0xb4] sm:$0xff]
        %v2423 = vld [vmem:[%s2391 + $0xbc] sm:$0xf]
        %s2424 = scalar_lea.vmem %s12, 192
        %v2425 = vld [vmem:[%s2424] sm:$0xff]
        %v2426 = vld [vmem:[%s2424 + $0x8] sm:$0xf]
        %v2427 = vld [vmem:[%s2424 + $0xc] sm:$0xff]
        %v2428 = vld [vmem:[%s2424 + $0x14] sm:$0xf]
        %v2429 = vld [vmem:[%s2424 + $0x18] sm:$0xff]
        %v2430 = vld [vmem:[%s2424 + $0x20] sm:$0xf]
        %v2431 = vld [vmem:[%s2424 + $0x24] sm:$0xff]
        %v2432 = vld [vmem:[%s2424 + $0x2c] sm:$0xf]
        %v2433 = vld [vmem:[%s2424 + $0x30] sm:$0xff]
        %v2434 = vld [vmem:[%s2424 + $0x38] sm:$0xf]
        %v2435 = vld [vmem:[%s2424 + $0x3c] sm:$0xff]
        %v2436 = vld [vmem:[%s2424 + $0x44] sm:$0xf]
        %v2437 = vld [vmem:[%s2424 + $0x48] sm:$0xff]
        %v2438 = vld [vmem:[%s2424 + $0x50] sm:$0xf]
        %v2439 = vld [vmem:[%s2424 + $0x54] sm:$0xff]
        %v2440 = vld [vmem:[%s2424 + $0x5c] sm:$0xf]
        %v2441 = vld [vmem:[%s2424 + $0x60] sm:$0xff]
        %v2442 = vld [vmem:[%s2424 + $0x68] sm:$0xf]
        %v2443 = vld [vmem:[%s2424 + $0x6c] sm:$0xff]
        %v2444 = vld [vmem:[%s2424 + $0x74] sm:$0xf]
        %v2445 = vld [vmem:[%s2424 + $0x78] sm:$0xff]
        %v2446 = vld [vmem:[%s2424 + $0x80] sm:$0xf]
        %v2447 = vld [vmem:[%s2424 + $0x84] sm:$0xff]
        %v2448 = vld [vmem:[%s2424 + $0x8c] sm:$0xf]
        %v2449 = vld [vmem:[%s2424 + $0x90] sm:$0xff]
        %v2450 = vld [vmem:[%s2424 + $0x98] sm:$0xf]
        %v2451 = vld [vmem:[%s2424 + $0x9c] sm:$0xff]
        %v2452 = vld [vmem:[%s2424 + $0xa4] sm:$0xf]
        %v2453 = vld [vmem:[%s2424 + $0xa8] sm:$0xff]
        %v2454 = vld [vmem:[%s2424 + $0xb0] sm:$0xf]
        %v2455 = vld [vmem:[%s2424 + $0xb4] sm:$0xff]
        %v2456 = vld [vmem:[%s2424 + $0xbc] sm:$0xf]
        %v2457 = vpack.c.bf16 %v2384, %v2383
        %v2458 = vpack.c.bf16 %v2386, %v2385
        %v2459 = vpack.c.bf16 %v2388, %v2387
        %v2460 = vpack.c.bf16 %v2390, %v2389
        %s2461 = scalar_lea.vmem %s13, 3
        %v2462 = vld [vmem:[%s2461] sm:$0x7]
        %v2464 = vlaneseq
        %v2465 = vshrl.u32 %v2464, 7
        %v2466 = vsub.s32 0, %v2465
        %v2467 = vrot.slane %v2462, %v2466
        %v2468 = vlaneseq
        %v2469 = vshrl.u32 %v2468, 7
        %v2470 = vsub.s32 1, %v2469
        %v2471 = vrot.slane %v2462, %v2470
        %v2472 = vlaneseq
        %v2473 = vshrl.u32 %v2472, 7
        %v2474 = vsub.s32 2, %v2473
        %v2475 = vrot.slane %v2462, %v2474
        %v2511 = vunpack.c.l.b16 %v2392
        %v2512 = vunpack.c.h.b16 %v2392
        %v2513 = vunpack.c.l.b16 %v2393
        %v2514 = vunpack.c.l.b16 %v2394
        %v2515 = vunpack.c.h.b16 %v2394
        %v2516 = vunpack.c.l.b16 %v2395
        %v2517 = vunpack.c.l.b16 %v2396
        %v2518 = vunpack.c.h.b16 %v2396
        %v2519 = vunpack.c.l.b16 %v2397
        %v2520 = vunpack.c.l.b16 %v2398
        %v2521 = vunpack.c.h.b16 %v2398
        %v2522 = vunpack.c.l.b16 %v2399
        %v2523 = vunpack.c.l.b16 %v2400
        %v2524 = vunpack.c.h.b16 %v2400
        %v2525 = vunpack.c.l.b16 %v2401
        %v2526 = vunpack.c.l.b16 %v2402
        %v2527 = vunpack.c.h.b16 %v2402
        %v2528 = vunpack.c.l.b16 %v2403
        %v2529 = vunpack.c.l.b16 %v2404
        %v2530 = vunpack.c.h.b16 %v2404
        %v2531 = vunpack.c.l.b16 %v2405
        %v2532 = vunpack.c.l.b16 %v2406
        %v2533 = vunpack.c.h.b16 %v2406
        %v2534 = vunpack.c.l.b16 %v2407
        %v2535 = vunpack.c.l.b16 %v2408
        %v2536 = vunpack.c.h.b16 %v2408
        %v2537 = vunpack.c.l.b16 %v2409
        %v2538 = vunpack.c.l.b16 %v2410
        %v2539 = vunpack.c.h.b16 %v2410
        %v2540 = vunpack.c.l.b16 %v2411
        %v2541 = vunpack.c.l.b16 %v2412
        %v2542 = vunpack.c.h.b16 %v2412
        %v2543 = vunpack.c.l.b16 %v2413
        %v2544 = vunpack.c.l.b16 %v2414
        %v2545 = vunpack.c.h.b16 %v2414
        %v2546 = vunpack.c.l.b16 %v2415
        %v2547 = vunpack.c.l.b16 %v2416
        %v2548 = vunpack.c.h.b16 %v2416
        %v2549 = vunpack.c.l.b16 %v2417
        %v2550 = vunpack.c.l.b16 %v2418
        %v2551 = vunpack.c.h.b16 %v2418
        %v2552 = vunpack.c.l.b16 %v2419
        %v2553 = vunpack.c.l.b16 %v2420
        %v2554 = vunpack.c.h.b16 %v2420
        %v2555 = vunpack.c.l.b16 %v2421
        %v2556 = vunpack.c.l.b16 %v2422
        %v2557 = vunpack.c.h.b16 %v2422
        %v2558 = vunpack.c.l.b16 %v2423
        %v2559 = vpack.c.b16 %v2514, %v2511
        %v2560 = vpack.c.b16 %v2515, %v2512
        %v2561 = vpack.c.b16 %v2516, %v2513
        %v2562 = vpack.c.b16 %v2520, %v2517
        %v2563 = vpack.c.b16 %v2521, %v2518
        %v2564 = vpack.c.b16 %v2522, %v2519
        %v2565 = vpack.c.b16 %v2526, %v2523
        %v2566 = vpack.c.b16 %v2527, %v2524
        %v2567 = vpack.c.b16 %v2528, %v2525
        %v2568 = vpack.c.b16 %v2532, %v2529
        %v2569 = vpack.c.b16 %v2533, %v2530
        %v2570 = vpack.c.b16 %v2534, %v2531
        %v2571 = vpack.c.b16 %v2538, %v2535
        %v2572 = vpack.c.b16 %v2539, %v2536
        %v2573 = vpack.c.b16 %v2540, %v2537
        %v2574 = vpack.c.b16 %v2544, %v2541
        %v2575 = vpack.c.b16 %v2545, %v2542
        %v2576 = vpack.c.b16 %v2546, %v2543
        %v2577 = vpack.c.b16 %v2550, %v2547
        %v2578 = vpack.c.b16 %v2551, %v2548
        %v2579 = vpack.c.b16 %v2552, %v2549
        %v2580 = vpack.c.b16 %v2556, %v2553
        %v2581 = vpack.c.b16 %v2557, %v2554
        %v2582 = vpack.c.b16 %v2558, %v2555
        %2607 = vmatprep.subr.bf16.mxu0 %v2560
        %2608 = vmatpush1.bf16.msra.mxu0 %v2559
        %2609 = vmatprep.subr.bf16.mxu0 %v2563
        %2610 = vmatpush1.bf16.msra.mxu0 %v2562
        %2611 = vmatprep.subr.bf16.mxu0 %v2566
        %2612 = vmatpush1.bf16.msra.mxu0 %v2565
        %2613 = vmatprep.subr.bf16.mxu0 %v2569
        %2614 = vmatpush1.bf16.msra.mxu0 %v2568
        %2615 = vmatprep.subr.bf16.mxu0 %v2572
        %2616 = vmatpush1.bf16.msra.mxu0 %v2571
        %2617 = vmatprep.subr.bf16.mxu0 %v2575
        %2618 = vmatpush1.bf16.msra.mxu0 %v2574
        %2619 = vmatprep.subr.bf16.mxu0 %v2578
        %2620 = vmatpush1.bf16.msra.mxu0 %v2577
        %2621 = vmatprep.subr.bf16.mxu0 %v2581
        %2622 = vmatpush1.bf16.msra.mxu0 %v2580
        %2623 = vmatprep.subr.bf16.mxu0 0
        %2624 = vmatpush1.bf16.msra.mxu0 0
        %2625 = vmatprep.subr.bf16.mxu0 0
        %2626 = vmatpush1.bf16.msra.mxu0 0
        %2627 = vmatprep.subr.bf16.mxu0 0
        %2628 = vmatpush1.bf16.msra.mxu0 0
        %2629 = vmatprep.subr.bf16.mxu0 0
        %2630 = vmatpush1.bf16.msra.mxu0 0
        %2631 = vmatprep.subr.bf16.mxu0 0
        %2632 = vmatpush1.bf16.msra.mxu0 0
        %2633 = vmatprep.subr.bf16.mxu0 0
        %2634 = vmatpush1.bf16.msra.mxu0 0
        %2635 = vmatprep.subr.bf16.mxu0 0
        %2636 = vmatpush1.bf16.msra.mxu0 0
        %2637 = vmatprep.subr.bf16.mxu0 0
        %2638 = vmatpush1.bf16.msra.mxu0 0
        %2639 = vmatprep.mubr.bf16.mxu0 0
        %2640 = vmatmul.mubr.bf16.gmra.mrb[0].mxu0 %v2457
        %v2641 = vpop.f32.mrb[0].mxu0
        %v2642 = vadd.f32 %v2467, %v2641
        %v2643 = vpop.f32.mrb[0].mxu0
        %v2644 = vadd.f32 %v2471, %v2643
        %v2645 = vpop.f32.mrb[0].mxu0
        %v2646 = vadd.f32 %v2467, %v2645
        %v2647 = vpop.f32.mrb[0].mxu0
        %v2648 = vadd.f32 %v2471, %v2647
        %2649 = vmatprep.mubr.bf16.mxu0 0
        %2650 = vmatmul.mubr.bf16.gmra.mrb[0].mxu0 %v2458
        %v2651 = vpop.f32.mrb[0].mxu0
        %v2652 = vadd.f32 %v2467, %v2651
        %v2653 = vpop.f32.mrb[0].mxu0
        %v2654 = vadd.f32 %v2471, %v2653
        %v2655 = vpop.f32.mrb[0].mxu0
        %v2656 = vadd.f32 %v2467, %v2655
        %v2657 = vpop.f32.mrb[0].mxu0
        %v2658 = vadd.f32 %v2471, %v2657
        %2659 = vmatprep.mubr.bf16.mxu0 0
        %2660 = vmatmul.mubr.bf16.gmra.mrb[0].mxu0 %v2459
        %v2661 = vpop.f32.mrb[0].mxu0
        %v2662 = vadd.f32 %v2467, %v2661
        %v2663 = vpop.f32.mrb[0].mxu0
        %v2664 = vadd.f32 %v2471, %v2663
        %v2665 = vpop.f32.mrb[0].mxu0
        %v2666 = vadd.f32 %v2467, %v2665
        %v2667 = vpop.f32.mrb[0].mxu0
        %v2668 = vadd.f32 %v2471, %v2667
        %2669 = vmatprep.mubr.bf16.mxu0 0
        %2670 = vmatmul.mubr.bf16.gmra.mrb[0].mxu0 %v2460
        %v2671 = vpop.f32.mrb[0].mxu0
        %v2672 = vadd.f32 %v2467, %v2671
        %v2673 = vpop.f32.mrb[0].mxu0
        %v2674 = vadd.f32 %v2471, %v2673
        %v2675 = vpop.f32.mrb[0].mxu0
        %v2676 = vadd.f32 %v2467, %v2675
        %v2677 = vpop.f32.mrb[0].mxu0
        %v2678 = vadd.f32 %v2471, %v2677
        %2679 = vdwg.mxu0
        %2680 = vmatprep.subr.bf16.mxu0 0
        %2681 = vmatpush1.bf16.msra.mxu0 %v2561
        %2682 = vmatprep.subr.bf16.mxu0 0
        %2683 = vmatpush1.bf16.msra.mxu0 %v2564
        %2684 = vmatprep.subr.bf16.mxu0 0
        %2685 = vmatpush1.bf16.msra.mxu0 %v2567
        %2686 = vmatprep.subr.bf16.mxu0 0
        %2687 = vmatpush1.bf16.msra.mxu0 %v2570
        %2688 = vmatprep.subr.bf16.mxu0 0
        %2689 = vmatpush1.bf16.msra.mxu0 %v2573
        %2690 = vmatprep.subr.bf16.mxu0 0
        %2691 = vmatpush1.bf16.msra.mxu0 %v2576
        %2692 = vmatprep.subr.bf16.mxu0 0
        %2693 = vmatpush1.bf16.msra.mxu0 %v2579
        %2694 = vmatprep.subr.bf16.mxu0 0
        %2695 = vmatpush1.bf16.msra.mxu0 %v2582
        %2696 = vmatprep.subr.bf16.mxu0 0
        %2697 = vmatpush1.bf16.msra.mxu0 0
        %2698 = vmatprep.subr.bf16.mxu0 0
        %2699 = vmatpush1.bf16.msra.mxu0 0
        %2700 = vmatprep.subr.bf16.mxu0 0
        %2701 = vmatpush1.bf16.msra.mxu0 0
        %2702 = vmatprep.subr.bf16.mxu0 0
        %2703 = vmatpush1.bf16.msra.mxu0 0
        %2704 = vmatprep.subr.bf16.mxu0 0
        %2705 = vmatpush1.bf16.msra.mxu0 0
        %2706 = vmatprep.subr.bf16.mxu0 0
        %2707 = vmatpush1.bf16.msra.mxu0 0
        %2708 = vmatprep.subr.bf16.mxu0 0
        %2709 = vmatpush1.bf16.msra.mxu0 0
        %2710 = vmatprep.subr.bf16.mxu0 0
        %2711 = vmatpush1.bf16.msra.mxu0 0
        %2712 = vmatprep.mubr.bf16.mxu0 0
        %2713 = vmatmul.mubr.bf16.gmra.mrb[0].mxu0 %v2457
        %v2714 = vpop.f32.mrb[0].mxu0
        %v2715 = vadd.f32 %v2475, %v2714
        %v2716 = vpop.f32.mrb[0].mxu0
        %v2717 = vpop.f32.mrb[0].mxu0
        %v2718 = vadd.f32 %v2475, %v2717
        %v2719 = vpop.f32.mrb[0].mxu0
        %2720 = vmatprep.mubr.bf16.mxu0 0
        %2721 = vmatmul.mubr.bf16.gmra.mrb[0].mxu0 %v2458
        %v2722 = vpop.f32.mrb[0].mxu0
        %v2723 = vadd.f32 %v2475, %v2722
        %v2724 = vpop.f32.mrb[0].mxu0
        %v2725 = vpop.f32.mrb[0].mxu0
        %v2726 = vadd.f32 %v2475, %v2725
        %v2727 = vpop.f32.mrb[0].mxu0
        %2728 = vmatprep.mubr.bf16.mxu0 0
        %2729 = vmatmul.mubr.bf16.gmra.mrb[0].mxu0 %v2459
        %v2730 = vpop.f32.mrb[0].mxu0
        %v2731 = vadd.f32 %v2475, %v2730
        %v2732 = vpop.f32.mrb[0].mxu0
        %v2733 = vpop.f32.mrb[0].mxu0
        %v2734 = vadd.f32 %v2475, %v2733
        %v2735 = vpop.f32.mrb[0].mxu0
        %2736 = vmatprep.mubr.bf16.mxu0 0
        %2737 = vmatmul.mubr.bf16.gmra.mrb[0].mxu0 %v2460
        %v2738 = vpop.f32.mrb[0].mxu0
        %v2739 = vadd.f32 %v2475, %v2738
        %v2740 = vpop.f32.mrb[0].mxu0
        %v2741 = vpop.f32.mrb[0].mxu0
        %v2742 = vadd.f32 %v2475, %v2741
        %v2743 = vpop.f32.mrb[0].mxu0
        %2744 = vdwg.mxu0
        %s2745 = scalar_lea.vmem %s14, 3
        %v2746 = vld [vmem:[%s2745] sm:$0x7]
        %v2748 = vlaneseq
        %v2749 = vshrl.u32 %v2748, 7
        %v2750 = vsub.s32 0, %v2749
        %v2751 = vrot.slane %v2746, %v2750
        %v2752 = vlaneseq
        %v2753 = vshrl.u32 %v2752, 7
        %v2754 = vsub.s32 1, %v2753
        %v2755 = vrot.slane %v2746, %v2754
        %v2756 = vlaneseq
        %v2757 = vshrl.u32 %v2756, 7
        %v2758 = vsub.s32 2, %v2757
        %v2759 = vrot.slane %v2746, %v2758
        %v2763 = vpack.c.bf16 %v2378, %v2378
        %v2796 = vunpack.c.l.b16 %v2425
        %v2797 = vunpack.c.h.b16 %v2425
        %v2798 = vunpack.c.l.b16 %v2426
        %v2799 = vunpack.c.l.b16 %v2427
        %v2800 = vunpack.c.h.b16 %v2427
        %v2801 = vunpack.c.l.b16 %v2428
        %v2802 = vunpack.c.l.b16 %v2429
        %v2803 = vunpack.c.h.b16 %v2429
        %v2804 = vunpack.c.l.b16 %v2430
        %v2805 = vunpack.c.l.b16 %v2431
        %v2806 = vunpack.c.h.b16 %v2431
        %v2807 = vunpack.c.l.b16 %v2432
        %v2808 = vunpack.c.l.b16 %v2433
        %v2809 = vunpack.c.h.b16 %v2433
        %v2810 = vunpack.c.l.b16 %v2434
        %v2811 = vunpack.c.l.b16 %v2435
        %v2812 = vunpack.c.h.b16 %v2435
        %v2813 = vunpack.c.l.b16 %v2436
        %v2814 = vunpack.c.l.b16 %v2437
        %v2815 = vunpack.c.h.b16 %v2437
        %v2816 = vunpack.c.l.b16 %v2438
        %v2817 = vunpack.c.l.b16 %v2439
        %v2818 = vunpack.c.h.b16 %v2439
        %v2819 = vunpack.c.l.b16 %v2440
        %v2820 = vunpack.c.l.b16 %v2441
        %v2821 = vunpack.c.h.b16 %v2441
        %v2822 = vunpack.c.l.b16 %v2442
        %v2823 = vunpack.c.l.b16 %v2443
        %v2824 = vunpack.c.h.b16 %v2443
        %v2825 = vunpack.c.l.b16 %v2444
        %v2826 = vunpack.c.l.b16 %v2445
        %v2827 = vunpack.c.h.b16 %v2445
        %v2828 = vunpack.c.l.b16 %v2446
        %v2829 = vunpack.c.l.b16 %v2447
        %v2830 = vunpack.c.h.b16 %v2447
        %v2831 = vunpack.c.l.b16 %v2448
        %v2832 = vunpack.c.l.b16 %v2449
        %v2833 = vunpack.c.h.b16 %v2449
        %v2834 = vunpack.c.l.b16 %v2450
        %v2835 = vunpack.c.l.b16 %v2451
        %v2836 = vunpack.c.h.b16 %v2451
        %v2837 = vunpack.c.l.b16 %v2452
        %v2838 = vunpack.c.l.b16 %v2453
        %v2839 = vunpack.c.h.b16 %v2453
        %v2840 = vunpack.c.l.b16 %v2454
        %v2841 = vunpack.c.l.b16 %v2455
        %v2842 = vunpack.c.h.b16 %v2455
        %v2843 = vunpack.c.l.b16 %v2456
        %v2844 = vpack.c.b16 %v2799, %v2796
        %v2845 = vpack.c.b16 %v2800, %v2797
        %v2846 = vpack.c.b16 %v2801, %v2798
        %v2847 = vpack.c.b16 %v2805, %v2802
        %v2848 = vpack.c.b16 %v2806, %v2803
        %v2849 = vpack.c.b16 %v2807, %v2804
        %v2850 = vpack.c.b16 %v2811, %v2808
        %v2851 = vpack.c.b16 %v2812, %v2809
        %v2852 = vpack.c.b16 %v2813, %v2810
        %v2853 = vpack.c.b16 %v2817, %v2814
        %v2854 = vpack.c.b16 %v2818, %v2815
        %v2855 = vpack.c.b16 %v2819, %v2816
        %v2856 = vpack.c.b16 %v2823, %v2820
        %v2857 = vpack.c.b16 %v2824, %v2821
        %v2858 = vpack.c.b16 %v2825, %v2822
        %v2859 = vpack.c.b16 %v2829, %v2826
        %v2860 = vpack.c.b16 %v2830, %v2827
        %v2861 = vpack.c.b16 %v2831, %v2828
        %v2862 = vpack.c.b16 %v2835, %v2832
        %v2863 = vpack.c.b16 %v2836, %v2833
        %v2864 = vpack.c.b16 %v2837, %v2834
        %v2865 = vpack.c.b16 %v2841, %v2838
        %v2866 = vpack.c.b16 %v2842, %v2839
        %v2867 = vpack.c.b16 %v2843, %v2840
        %2892 = vmatprep.subr.bf16.mxu0 %v2845
        %2893 = vmatpush1.bf16.msra.mxu0 %v2844
        %2894 = vmatprep.subr.bf16.mxu0 %v2848
        %2895 = vmatpush1.bf16.msra.mxu0 %v2847
        %2896 = vmatprep.subr.bf16.mxu0 %v2851
        %2897 = vmatpush1.bf16.msra.mxu0 %v2850
        %2898 = vmatprep.subr.bf16.mxu0 %v2854
        %2899 = vmatpush1.bf16.msra.mxu0 %v2853
        %2900 = vmatprep.subr.bf16.mxu0 %v2857
        %2901 = vmatpush1.bf16.msra.mxu0 %v2856
        %2902 = vmatprep.subr.bf16.mxu0 %v2860
        %2903 = vmatpush1.bf16.msra.mxu0 %v2859
        %2904 = vmatprep.subr.bf16.mxu0 %v2863
        %2905 = vmatpush1.bf16.msra.mxu0 %v2862
        %2906 = vmatprep.subr.bf16.mxu0 %v2866
        %2907 = vmatpush1.bf16.msra.mxu0 %v2865
        %2908 = vmatprep.subr.bf16.mxu0 0
        %2909 = vmatpush1.bf16.msra.mxu0 0
        %2910 = vmatprep.subr.bf16.mxu0 0
        %2911 = vmatpush1.bf16.msra.mxu0 0
        %2912 = vmatprep.subr.bf16.mxu0 0
        %2913 = vmatpush1.bf16.msra.mxu0 0
        %2914 = vmatprep.subr.bf16.mxu0 0
        %2915 = vmatpush1.bf16.msra.mxu0 0
        %2916 = vmatprep.subr.bf16.mxu0 0
        %2917 = vmatpush1.bf16.msra.mxu0 0
        %2918 = vmatprep.subr.bf16.mxu0 0
        %2919 = vmatpush1.bf16.msra.mxu0 0
        %2920 = vmatprep.subr.bf16.mxu0 0
        %2921 = vmatpush1.bf16.msra.mxu0 0
        %2922 = vmatprep.subr.bf16.mxu0 0
        %2923 = vmatpush1.bf16.msra.mxu0 0
        %2924 = vmatprep.mubr.bf16.mxu0 0
        %2925 = vmatmul.mubr.bf16.gmra.mrb[0].mxu0 %v2763
        %v2926 = vpop.f32.mrb[0].mxu0
        %v2927 = vadd.f32 %v2751, %v2926
        %v2928 = vpop.f32.mrb[0].mxu0
        %v2929 = vadd.f32 %v2755, %v2928
        %v2930 = vpop.f32.mrb[0].mxu0
        %v2931 = vpop.f32.mrb[0].mxu0
        %2932 = vdwg.mxu0
        %2933 = vmatprep.subr.bf16.mxu0 0
        %2934 = vmatpush1.bf16.msra.mxu0 %v2846
        %2935 = vmatprep.subr.bf16.mxu0 0
        %2936 = vmatpush1.bf16.msra.mxu0 %v2849
        %2937 = vmatprep.subr.bf16.mxu0 0
        %2938 = vmatpush1.bf16.msra.mxu0 %v2852
        %2939 = vmatprep.subr.bf16.mxu0 0
        %2940 = vmatpush1.bf16.msra.mxu0 %v2855
        %2941 = vmatprep.subr.bf16.mxu0 0
        %2942 = vmatpush1.bf16.msra.mxu0 %v2858
        %2943 = vmatprep.subr.bf16.mxu0 0
        %2944 = vmatpush1.bf16.msra.mxu0 %v2861
        %2945 = vmatprep.subr.bf16.mxu0 0
        %2946 = vmatpush1.bf16.msra.mxu0 %v2864
        %2947 = vmatprep.subr.bf16.mxu0 0
        %2948 = vmatpush1.bf16.msra.mxu0 %v2867
        %2949 = vmatprep.subr.bf16.mxu0 0
        %2950 = vmatpush1.bf16.msra.mxu0 0
        %2951 = vmatprep.subr.bf16.mxu0 0
        %2952 = vmatpush1.bf16.msra.mxu0 0
        %2953 = vmatprep.subr.bf16.mxu0 0
        %2954 = vmatpush1.bf16.msra.mxu0 0
        %2955 = vmatprep.subr.bf16.mxu0 0
        %2956 = vmatpush1.bf16.msra.mxu0 0
        %2957 = vmatprep.subr.bf16.mxu0 0
        %2958 = vmatpush1.bf16.msra.mxu0 0
        %2959 = vmatprep.subr.bf16.mxu0 0
        %2960 = vmatpush1.bf16.msra.mxu0 0
        %2961 = vmatprep.subr.bf16.mxu0 0
        %2962 = vmatpush1.bf16.msra.mxu0 0
        %2963 = vmatprep.subr.bf16.mxu0 0
        %2964 = vmatpush1.bf16.msra.mxu0 0
        %2965 = vmatprep.mubr.bf16.mxu0 0
        %2966 = vmatmul.mubr.bf16.gmra.mrb[0].mxu0 %v2763
        %v2967 = vpop.f32.mrb[0].mxu0
        %v2968 = vadd.f32 %v2759, %v2967
        %v2969 = vpop.f32.mrb[0].mxu0
        %v2970 = vpop.f32.mrb[0].mxu0
        %v2971 = vpop.f32.mrb[0].mxu0
        %2972 = vdwg.mxu0
        %v2973 = vadd.f32 %v2642, %v2927
        %v2974 = vxor.u32 %v2973, 2147483648
        %v2975 = vmul.f32 %v2974, 1.442695
        %v2976 = vpow.pop %v2975
        %v2977 = vadd.f32 %v2976, 1.0
        %v2978 = vrcp.pop %v2977
        %v2979 = vmul.f32 1.0, %v2978
        %v2980 = vadd.f32 %v2644, %v2929
        %v2981 = vxor.u32 %v2980, 2147483648
        %v2982 = vmul.f32 %v2981, 1.442695
        %v2983 = vpow.pop %v2982
        %v2984 = vadd.f32 %v2983, 1.0
        %v2985 = vrcp.pop %v2984
        %v2986 = vmul.f32 1.0, %v2985
        %v2987 = vmul.f32 %v2979, %v2968
        %v2988 = vadd.f32 %v2715, %v2987
        %v2989 = vtanh.pop %v2988
        %v2990 = vsub.f32 1.0, %v2986
        %v2991 = vmul.f32 %v2990, %v2989
        %v2992 = vmul.f32 %v2986, %v2378
        %v2993 = vadd.f32 %v2991, %v2992
        %2994 = vst [vmem:[#allocation3] sm:$0xff] %v2993
        %v2995 = vpack.c.bf16 %v2993, %v2993
        %2996 = vmatprep.subr.bf16.mxu0 %v2845
        %2997 = vmatpush1.bf16.msra.mxu0 %v2844
        %2998 = vmatprep.subr.bf16.mxu0 %v2848
        %2999 = vmatpush1.bf16.msra.mxu0 %v2847
        %3000 = vmatprep.subr.bf16.mxu0 %v2851
        %3001 = vmatpush1.bf16.msra.mxu0 %v2850
        %3002 = vmatprep.subr.bf16.mxu0 %v2854
        %3003 = vmatpush1.bf16.msra.mxu0 %v2853
        %3004 = vmatprep.subr.bf16.mxu0 %v2857
        %3005 = vmatpush1.bf16.msra.mxu0 %v2856
        %3006 = vmatprep.subr.bf16.mxu0 %v2860
        %3007 = vmatpush1.bf16.msra.mxu0 %v2859
        %3008 = vmatprep.subr.bf16.mxu0 %v2863
        %3009 = vmatpush1.bf16.msra.mxu0 %v2862
        %3010 = vmatprep.subr.bf16.mxu0 %v2866
        %3011 = vmatpush1.bf16.msra.mxu0 %v2865
        %3012 = vmatprep.subr.bf16.mxu0 0
        %3013 = vmatpush1.bf16.msra.mxu0 0
        %3014 = vmatprep.subr.bf16.mxu0 0
        %3015 = vmatpush1.bf16.msra.mxu0 0
        %3016 = vmatprep.subr.bf16.mxu0 0
        %3017 = vmatpush1.bf16.msra.mxu0 0
        %3018 = vmatprep.subr.bf16.mxu0 0
        %3019 = vmatpush1.bf16.msra.mxu0 0
        %3020 = vmatprep.subr.bf16.mxu0 0
        %3021 = vmatpush1.bf16.msra.mxu0 0
        %3022 = vmatprep.subr.bf16.mxu0 0
        %3023 = vmatpush1.bf16.msra.mxu0 0
        %3024 = vmatprep.subr.bf16.mxu0 0
        %3025 = vmatpush1.bf16.msra.mxu0 0
        %3026 = vmatprep.subr.bf16.mxu0 0
        %3027 = vmatpush1.bf16.msra.mxu0 0
        %3028 = vmatprep.mubr.bf16.mxu0 0
        %3029 = vmatmul.mubr.bf16.gmra.mrb[0].mxu0 %v2995
        %v3030 = vpop.f32.mrb[0].mxu0
        %v3031 = vadd.f32 %v2751, %v3030
        %v3032 = vpop.f32.mrb[0].mxu0
        %v3033 = vadd.f32 %v2755, %v3032
        %v3034 = vpop.f32.mrb[0].mxu0
        %v3035 = vpop.f32.mrb[0].mxu0
        %3036 = vdwg.mxu0
        %3037 = vmatprep.subr.bf16.mxu0 0
        %3038 = vmatpush1.bf16.msra.mxu0 %v2846
        %3039 = vmatprep.subr.bf16.mxu0 0
        %3040 = vmatpush1.bf16.msra.mxu0 %v2849
        %3041 = vmatprep.subr.bf16.mxu0 0
        %3042 = vmatpush1.bf16.msra.mxu0 %v2852
        %3043 = vmatprep.subr.bf16.mxu0 0
        %3044 = vmatpush1.bf16.msra.mxu0 %v2855
        %3045 = vmatprep.subr.bf16.mxu0 0
        %3046 = vmatpush1.bf16.msra.mxu0 %v2858
        %3047 = vmatprep.subr.bf16.mxu0 0
        %3048 = vmatpush1.bf16.msra.mxu0 %v2861
        %3049 = vmatprep.subr.bf16.mxu0 0
        %3050 = vmatpush1.bf16.msra.mxu0 %v2864
        %3051 = vmatprep.subr.bf16.mxu0 0
        %3052 = vmatpush1.bf16.msra.mxu0 %v2867
        %3053 = vmatprep.subr.bf16.mxu0 0
        %3054 = vmatpush1.bf16.msra.mxu0 0
        %3055 = vmatprep.subr.bf16.mxu0 0
        %3056 = vmatpush1.bf16.msra.mxu0 0
        %3057 = vmatprep.subr.bf16.mxu0 0
        %3058 = vmatpush1.bf16.msra.mxu0 0
        %3059 = vmatprep.subr.bf16.mxu0 0
        %3060 = vmatpush1.bf16.msra.mxu0 0
        %3061 = vmatprep.subr.bf16.mxu0 0
        %3062 = vmatpush1.bf16.msra.mxu0 0
        %3063 = vmatprep.subr.bf16.mxu0 0
        %3064 = vmatpush1.bf16.msra.mxu0 0
        %3065 = vmatprep.subr.bf16.mxu0 0
        %3066 = vmatpush1.bf16.msra.mxu0 0
        %3067 = vmatprep.subr.bf16.mxu0 0
        %3068 = vmatpush1.bf16.msra.mxu0 0
        %3069 = vmatprep.mubr.bf16.mxu0 0
        %3070 = vmatmul.mubr.bf16.gmra.mrb[0].mxu0 %v2995
        %v3071 = vpop.f32.mrb[0].mxu0
        %v3072 = vadd.f32 %v2759, %v3071
        %v3073 = vpop.f32.mrb[0].mxu0
        %v3074 = vpop.f32.mrb[0].mxu0
        %v3075 = vpop.f32.mrb[0].mxu0
        %3076 = vdwg.mxu0
        %v3077 = vadd.f32 %v2646, %v3031
        %v3078 = vxor.u32 %v3077, 2147483648
        %v3079 = vmul.f32 %v3078, 1.442695
        %v3080 = vpow.pop %v3079
        %v3081 = vadd.f32 %v3080, 1.0
        %v3082 = vrcp.pop %v3081
        %v3083 = vmul.f32 1.0, %v3082
        %v3084 = vadd.f32 %v2648, %v3033
        %v3085 = vxor.u32 %v3084, 2147483648
        %v3086 = vmul.f32 %v3085, 1.442695
        %v3087 = vpow.pop %v3086
        %v3088 = vadd.f32 %v3087, 1.0
        %v3089 = vrcp.pop %v3088
        %v3090 = vmul.f32 1.0, %v3089
        %v3091 = vmul.f32 %v3083, %v3072
        %v3092 = vadd.f32 %v2718, %v3091
        %v3093 = vtanh.pop %v3092
        %v3094 = vsub.f32 1.0, %v3090
        %v3095 = vmul.f32 %v3094, %v3093
        %v3096 = vmul.f32 %v3090, %v2993
        %v3097 = vadd.f32 %v3095, %v3096
        %3098 = vst [vmem:[#allocation3 + $0x8] sm:$0xff] %v3097
        %v3099 = vpack.c.bf16 %v3097, %v3097
        %3100 = vmatprep.subr.bf16.mxu0 %v2845
        %3101 = vmatpush1.bf16.msra.mxu0 %v2844
        %3102 = vmatprep.subr.bf16.mxu0 %v2848
        %3103 = vmatpush1.bf16.msra.mxu0 %v2847
        %3104 = vmatprep.subr.bf16.mxu0 %v2851
        %3105 = vmatpush1.bf16.msra.mxu0 %v2850
        %3106 = vmatprep.subr.bf16.mxu0 %v2854
        %3107 = vmatpush1.bf16.msra.mxu0 %v2853
        %3108 = vmatprep.subr.bf16.mxu0 %v2857
        %3109 = vmatpush1.bf16.msra.mxu0 %v2856
        %3110 = vmatprep.subr.bf16.mxu0 %v2860
        %3111 = vmatpush1.bf16.msra.mxu0 %v2859
        %3112 = vmatprep.subr.bf16.mxu0 %v2863
        %3113 = vmatpush1.bf16.msra.mxu0 %v2862
        %3114 = vmatprep.subr.bf16.mxu0 %v2866
        %3115 = vmatpush1.bf16.msra.mxu0 %v2865
        %3116 = vmatprep.subr.bf16.mxu0 0
        %3117 = vmatpush1.bf16.msra.mxu0 0
        %3118 = vmatprep.subr.bf16.mxu0 0
        %3119 = vmatpush1.bf16.msra.mxu0 0
        %3120 = vmatprep.subr.bf16.mxu0 0
        %3121 = vmatpush1.bf16.msra.mxu0 0
        %3122 = vmatprep.subr.bf16.mxu0 0
        %3123 = vmatpush1.bf16.msra.mxu0 0
        %3124 = vmatprep.subr.bf16.mxu0 0
        %3125 = vmatpush1.bf16.msra.mxu0 0
        %3126 = vmatprep.subr.bf16.mxu0 0
        %3127 = vmatpush1.bf16.msra.mxu0 0
        %3128 = vmatprep.subr.bf16.mxu0 0
        %3129 = vmatpush1.bf16.msra.mxu0 0
        %3130 = vmatprep.subr.bf16.mxu0 0
        %3131 = vmatpush1.bf16.msra.mxu0 0
        %3132 = vmatprep.mubr.bf16.mxu0 0
        %3133 = vmatmul.mubr.bf16.gmra.mrb[0].mxu0 %v3099
        %v3134 = vpop.f32.mrb[0].mxu0
        %v3135 = vadd.f32 %v2751, %v3134
        %v3136 = vpop.f32.mrb[0].mxu0
        %v3137 = vadd.f32 %v2755, %v3136
        %v3138 = vpop.f32.mrb[0].mxu0
        %v3139 = vpop.f32.mrb[0].mxu0
        %3140 = vdwg.mxu0
        %3141 = vmatprep.subr.bf16.mxu0 0
        %3142 = vmatpush1.bf16.msra.mxu0 %v2846
        %3143 = vmatprep.subr.bf16.mxu0 0
        %3144 = vmatpush1.bf16.msra.mxu0 %v2849
        %3145 = vmatprep.subr.bf16.mxu0 0
        %3146 = vmatpush1.bf16.msra.mxu0 %v2852
        %3147 = vmatprep.subr.bf16.mxu0 0
        %3148 = vmatpush1.bf16.msra.mxu0 %v2855
        %3149 = vmatprep.subr.bf16.mxu0 0
        %3150 = vmatpush1.bf16.msra.mxu0 %v2858
        %3151 = vmatprep.subr.bf16.mxu0 0
        %3152 = vmatpush1.bf16.msra.mxu0 %v2861
        %3153 = vmatprep.subr.bf16.mxu0 0
        %3154 = vmatpush1.bf16.msra.mxu0 %v2864
        %3155 = vmatprep.subr.bf16.mxu0 0
        %3156 = vmatpush1.bf16.msra.mxu0 %v2867
        %3157 = vmatprep.subr.bf16.mxu0 0
        %3158 = vmatpush1.bf16.msra.mxu0 0
        %3159 = vmatprep.subr.bf16.mxu0 0
        %3160 = vmatpush1.bf16.msra.mxu0 0
        %3161 = vmatprep.subr.bf16.mxu0 0
        %3162 = vmatpush1.bf16.msra.mxu0 0
        %3163 = vmatprep.subr.bf16.mxu0 0
        %3164 = vmatpush1.bf16.msra.mxu0 0
        %3165 = vmatprep.subr.bf16.mxu0 0
        %3166 = vmatpush1.bf16.msra.mxu0 0
        %3167 = vmatprep.subr.bf16.mxu0 0
        %3168 = vmatpush1.bf16.msra.mxu0 0
        %3169 = vmatprep.subr.bf16.mxu0 0
        %3170 = vmatpush1.bf16.msra.mxu0 0
        %3171 = vmatprep.subr.bf16.mxu0 0
        %3172 = vmatpush1.bf16.msra.mxu0 0
        %3173 = vmatprep.mubr.bf16.mxu0 0
        %3174 = vmatmul.mubr.bf16.gmra.mrb[0].mxu0 %v3099
        %v3175 = vpop.f32.mrb[0].mxu0
        %v3176 = vadd.f32 %v2759, %v3175
        %v3177 = vpop.f32.mrb[0].mxu0
        %v3178 = vpop.f32.mrb[0].mxu0
        %v3179 = vpop.f32.mrb[0].mxu0
        %3180 = vdwg.mxu0
        %v3181 = vadd.f32 %v2652, %v3135
        %v3182 = vxor.u32 %v3181, 2147483648
        %v3183 = vmul.f32 %v3182, 1.442695
        %v3184 = vpow.pop %v3183
        %v3185 = vadd.f32 %v3184, 1.0
        %v3186 = vrcp.pop %v3185
        %v3187 = vmul.f32 1.0, %v3186
        %v3188 = vadd.f32 %v2654, %v3137
        %v3189 = vxor.u32 %v3188, 2147483648
        %v3190 = vmul.f32 %v3189, 1.442695
        %v3191 = vpow.pop %v3190
        %v3192 = vadd.f32 %v3191, 1.0
        %v3193 = vrcp.pop %v3192
        %v3194 = vmul.f32 1.0, %v3193
        %v3195 = vmul.f32 %v3187, %v3176
        %v3196 = vadd.f32 %v2723, %v3195
        %v3197 = vtanh.pop %v3196
        %v3198 = vsub.f32 1.0, %v3194
        %v3199 = vmul.f32 %v3198, %v3197
        %v3200 = vmul.f32 %v3194, %v3097
        %v3201 = vadd.f32 %v3199, %v3200
        %3202 = vst [vmem:[#allocation3 + $0x10] sm:$0xff] %v3201
        %v3203 = vpack.c.bf16 %v3201, %v3201
        %3204 = vmatprep.subr.bf16.mxu0 %v2845
        %3205 = vmatpush1.bf16.msra.mxu0 %v2844
        %3206 = vmatprep.subr.bf16.mxu0 %v2848
        %3207 = vmatpush1.bf16.msra.mxu0 %v2847
        %3208 = vmatprep.subr.bf16.mxu0 %v2851
        %3209 = vmatpush1.bf16.msra.mxu0 %v2850
        %3210 = vmatprep.subr.bf16.mxu0 %v2854
        %3211 = vmatpush1.bf16.msra.mxu0 %v2853
        %3212 = vmatprep.subr.bf16.mxu0 %v2857
        %3213 = vmatpush1.bf16.msra.mxu0 %v2856
        %3214 = vmatprep.subr.bf16.mxu0 %v2860
        %3215 = vmatpush1.bf16.msra.mxu0 %v2859
        %3216 = vmatprep.subr.bf16.mxu0 %v2863
        %3217 = vmatpush1.bf16.msra.mxu0 %v2862
        %3218 = vmatprep.subr.bf16.mxu0 %v2866
        %3219 = vmatpush1.bf16.msra.mxu0 %v2865
        %3220 = vmatprep.subr.bf16.mxu0 0
        %3221 = vmatpush1.bf16.msra.mxu0 0
        %3222 = vmatprep.subr.bf16.mxu0 0
        %3223 = vmatpush1.bf16.msra.mxu0 0
        %3224 = vmatprep.subr.bf16.mxu0 0
        %3225 = vmatpush1.bf16.msra.mxu0 0
        %3226 = vmatprep.subr.bf16.mxu0 0
        %3227 = vmatpush1.bf16.msra.mxu0 0
        %3228 = vmatprep.subr.bf16.mxu0 0
        %3229 = vmatpush1.bf16.msra.mxu0 0
        %3230 = vmatprep.subr.bf16.mxu0 0
        %3231 = vmatpush1.bf16.msra.mxu0 0
        %3232 = vmatprep.subr.bf16.mxu0 0
        %3233 = vmatpush1.bf16.msra.mxu0 0
        %3234 = vmatprep.subr.bf16.mxu0 0
        %3235 = vmatpush1.bf16.msra.mxu0 0
        %3236 = vmatprep.mubr.bf16.mxu0 0
        %3237 = vmatmul.mubr.bf16.gmra.mrb[0].mxu0 %v3203
        %v3238 = vpop.f32.mrb[0].mxu0
        %v3239 = vadd.f32 %v2751, %v3238
        %v3240 = vpop.f32.mrb[0].mxu0
        %v3241 = vadd.f32 %v2755, %v3240
        %v3242 = vpop.f32.mrb[0].mxu0
        %v3243 = vpop.f32.mrb[0].mxu0
        %3244 = vdwg.mxu0
        %3245 = vmatprep.subr.bf16.mxu0 0
        %3246 = vmatpush1.bf16.msra.mxu0 %v2846
        %3247 = vmatprep.subr.bf16.mxu0 0
        %3248 = vmatpush1.bf16.msra.mxu0 %v2849
        %3249 = vmatprep.subr.bf16.mxu0 0
        %3250 = vmatpush1.bf16.msra.mxu0 %v2852
        %3251 = vmatprep.subr.bf16.mxu0 0
        %3252 = vmatpush1.bf16.msra.mxu0 %v2855
        %3253 = vmatprep.subr.bf16.mxu0 0
        %3254 = vmatpush1.bf16.msra.mxu0 %v2858
        %3255 = vmatprep.subr.bf16.mxu0 0
        %3256 = vmatpush1.bf16.msra.mxu0 %v2861
        %3257 = vmatprep.subr.bf16.mxu0 0
        %3258 = vmatpush1.bf16.msra.mxu0 %v2864
        %3259 = vmatprep.subr.bf16.mxu0 0
        %3260 = vmatpush1.bf16.msra.mxu0 %v2867
        %3261 = vmatprep.subr.bf16.mxu0 0
        %3262 = vmatpush1.bf16.msra.mxu0 0
        %3263 = vmatprep.subr.bf16.mxu0 0
        %3264 = vmatpush1.bf16.msra.mxu0 0
        %3265 = vmatprep.subr.bf16.mxu0 0
        %3266 = vmatpush1.bf16.msra.mxu0 0
        %3267 = vmatprep.subr.bf16.mxu0 0
        %3268 = vmatpush1.bf16.msra.mxu0 0
        %3269 = vmatprep.subr.bf16.mxu0 0
        %3270 = vmatpush1.bf16.msra.mxu0 0
        %3271 = vmatprep.subr.bf16.mxu0 0
        %3272 = vmatpush1.bf16.msra.mxu0 0
        %3273 = vmatprep.subr.bf16.mxu0 0
        %3274 = vmatpush1.bf16.msra.mxu0 0
        %3275 = vmatprep.subr.bf16.mxu0 0
        %3276 = vmatpush1.bf16.msra.mxu0 0
        %3277 = vmatprep.mubr.bf16.mxu0 0
        %3278 = vmatmul.mubr.bf16.gmra.mrb[0].mxu0 %v3203
        %v3279 = vpop.f32.mrb[0].mxu0
        %v3280 = vadd.f32 %v2759, %v3279
        %v3281 = vpop.f32.mrb[0].mxu0
        %v3282 = vpop.f32.mrb[0].mxu0
        %v3283 = vpop.f32.mrb[0].mxu0
        %3284 = vdwg.mxu0
        %v3285 = vadd.f32 %v2656, %v3239
        %v3286 = vxor.u32 %v3285, 2147483648
        %v3287 = vmul.f32 %v3286, 1.442695
        %v3288 = vpow.pop %v3287
        %v3289 = vadd.f32 %v3288, 1.0
        %v3290 = vrcp.pop %v3289
        %v3291 = vmul.f32 1.0, %v3290
        %v3292 = vadd.f32 %v2658, %v3241
        %v3293 = vxor.u32 %v3292, 2147483648
        %v3294 = vmul.f32 %v3293, 1.442695
        %v3295 = vpow.pop %v3294
        %v3296 = vadd.f32 %v3295, 1.0
        %v3297 = vrcp.pop %v3296
        %v3298 = vmul.f32 1.0, %v3297
        %v3299 = vmul.f32 %v3291, %v3280
        %v3300 = vadd.f32 %v2726, %v3299
        %v3301 = vtanh.pop %v3300
        %v3302 = vsub.f32 1.0, %v3298
        %v3303 = vmul.f32 %v3302, %v3301
        %v3304 = vmul.f32 %v3298, %v3201
        %v3305 = vadd.f32 %v3303, %v3304
        %3306 = vst [vmem:[#allocation3 + $0x18] sm:$0xff] %v3305
        %v3307 = vpack.c.bf16 %v3305, %v3305
        %3308 = vmatprep.subr.bf16.mxu0 %v2845
        %3309 = vmatpush1.bf16.msra.mxu0 %v2844
        %3310 = vmatprep.subr.bf16.mxu0 %v2848
        %3311 = vmatpush1.bf16.msra.mxu0 %v2847
        %3312 = vmatprep.subr.bf16.mxu0 %v2851
        %3313 = vmatpush1.bf16.msra.mxu0 %v2850
        %3314 = vmatprep.subr.bf16.mxu0 %v2854
        %3315 = vmatpush1.bf16.msra.mxu0 %v2853
        %3316 = vmatprep.subr.bf16.mxu0 %v2857
        %3317 = vmatpush1.bf16.msra.mxu0 %v2856
        %3318 = vmatprep.subr.bf16.mxu0 %v2860
        %3319 = vmatpush1.bf16.msra.mxu0 %v2859
        %3320 = vmatprep.subr.bf16.mxu0 %v2863
        %3321 = vmatpush1.bf16.msra.mxu0 %v2862
        %3322 = vmatprep.subr.bf16.mxu0 %v2866
        %3323 = vmatpush1.bf16.msra.mxu0 %v2865
        %3324 = vmatprep.subr.bf16.mxu0 0
        %3325 = vmatpush1.bf16.msra.mxu0 0
        %3326 = vmatprep.subr.bf16.mxu0 0
        %3327 = vmatpush1.bf16.msra.mxu0 0
        %3328 = vmatprep.subr.bf16.mxu0 0
        %3329 = vmatpush1.bf16.msra.mxu0 0
        %3330 = vmatprep.subr.bf16.mxu0 0
        %3331 = vmatpush1.bf16.msra.mxu0 0
        %3332 = vmatprep.subr.bf16.mxu0 0
        %3333 = vmatpush1.bf16.msra.mxu0 0
        %3334 = vmatprep.subr.bf16.mxu0 0
        %3335 = vmatpush1.bf16.msra.mxu0 0
        %3336 = vmatprep.subr.bf16.mxu0 0
        %3337 = vmatpush1.bf16.msra.mxu0 0
        %3338 = vmatprep.subr.bf16.mxu0 0
        %3339 = vmatpush1.bf16.msra.mxu0 0
        %3340 = vmatprep.mubr.bf16.mxu0 0
        %3341 = vmatmul.mubr.bf16.gmra.mrb[0].mxu0 %v3307
        %v3342 = vpop.f32.mrb[0].mxu0
        %v3343 = vadd.f32 %v2751, %v3342
        %v3344 = vpop.f32.mrb[0].mxu0
        %v3345 = vadd.f32 %v2755, %v3344
        %v3346 = vpop.f32.mrb[0].mxu0
        %v3347 = vpop.f32.mrb[0].mxu0
        %3348 = vdwg.mxu0
        %3349 = vmatprep.subr.bf16.mxu0 0
        %3350 = vmatpush1.bf16.msra.mxu0 %v2846
        %3351 = vmatprep.subr.bf16.mxu0 0
        %3352 = vmatpush1.bf16.msra.mxu0 %v2849
        %3353 = vmatprep.subr.bf16.mxu0 0
        %3354 = vmatpush1.bf16.msra.mxu0 %v2852
        %3355 = vmatprep.subr.bf16.mxu0 0
        %3356 = vmatpush1.bf16.msra.mxu0 %v2855
        %3357 = vmatprep.subr.bf16.mxu0 0
        %3358 = vmatpush1.bf16.msra.mxu0 %v2858
        %3359 = vmatprep.subr.bf16.mxu0 0
        %3360 = vmatpush1.bf16.msra.mxu0 %v2861
        %3361 = vmatprep.subr.bf16.mxu0 0
        %3362 = vmatpush1.bf16.msra.mxu0 %v2864
        %3363 = vmatprep.subr.bf16.mxu0 0
        %3364 = vmatpush1.bf16.msra.mxu0 %v2867
        %3365 = vmatprep.subr.bf16.mxu0 0
        %3366 = vmatpush1.bf16.msra.mxu0 0
        %3367 = vmatprep.subr.bf16.mxu0 0
        %3368 = vmatpush1.bf16.msra.mxu0 0
        %3369 = vmatprep.subr.bf16.mxu0 0
        %3370 = vmatpush1.bf16.msra.mxu0 0
        %3371 = vmatprep.subr.bf16.mxu0 0
        %3372 = vmatpush1.bf16.msra.mxu0 0
        %3373 = vmatprep.subr.bf16.mxu0 0
        %3374 = vmatpush1.bf16.msra.mxu0 0
        %3375 = vmatprep.subr.bf16.mxu0 0
        %3376 = vmatpush1.bf16.msra.mxu0 0
        %3377 = vmatprep.subr.bf16.mxu0 0
        %3378 = vmatpush1.bf16.msra.mxu0 0
        %3379 = vmatprep.subr.bf16.mxu0 0
        %3380 = vmatpush1.bf16.msra.mxu0 0
        %3381 = vmatprep.mubr.bf16.mxu0 0
        %3382 = vmatmul.mubr.bf16.gmra.mrb[0].mxu0 %v3307
        %v3383 = vpop.f32.mrb[0].mxu0
        %v3384 = vadd.f32 %v2759, %v3383
        %v3385 = vpop.f32.mrb[0].mxu0
        %v3386 = vpop.f32.mrb[0].mxu0
        %v3387 = vpop.f32.mrb[0].mxu0
        %3388 = vdwg.mxu0
        %v3389 = vadd.f32 %v2662, %v3343
        %v3390 = vxor.u32 %v3389, 2147483648
        %v3391 = vmul.f32 %v3390, 1.442695
        %v3392 = vpow.pop %v3391
        %v3393 = vadd.f32 %v3392, 1.0
        %v3394 = vrcp.pop %v3393
        %v3395 = vmul.f32 1.0, %v3394
        %v3396 = vadd.f32 %v2664, %v3345
        %v3397 = vxor.u32 %v3396, 2147483648
        %v3398 = vmul.f32 %v3397, 1.442695
        %v3399 = vpow.pop %v3398
        %v3400 = vadd.f32 %v3399, 1.0
        %v3401 = vrcp.pop %v3400
        %v3402 = vmul.f32 1.0, %v3401
        %v3403 = vmul.f32 %v3395, %v3384
        %v3404 = vadd.f32 %v2731, %v3403
        %v3405 = vtanh.pop %v3404
        %v3406 = vsub.f32 1.0, %v3402
        %v3407 = vmul.f32 %v3406, %v3405
        %v3408 = vmul.f32 %v3402, %v3305
        %v3409 = vadd.f32 %v3407, %v3408
        %3410 = vst [vmem:[#allocation3 + $0x20] sm:$0xff] %v3409
        %v3411 = vpack.c.bf16 %v3409, %v3409
        %3412 = vmatprep.subr.bf16.mxu0 %v2845
        %3413 = vmatpush1.bf16.msra.mxu0 %v2844
        %3414 = vmatprep.subr.bf16.mxu0 %v2848
        %3415 = vmatpush1.bf16.msra.mxu0 %v2847
        %3416 = vmatprep.subr.bf16.mxu0 %v2851
        %3417 = vmatpush1.bf16.msra.mxu0 %v2850
        %3418 = vmatprep.subr.bf16.mxu0 %v2854
        %3419 = vmatpush1.bf16.msra.mxu0 %v2853
        %3420 = vmatprep.subr.bf16.mxu0 %v2857
        %3421 = vmatpush1.bf16.msra.mxu0 %v2856
        %3422 = vmatprep.subr.bf16.mxu0 %v2860
        %3423 = vmatpush1.bf16.msra.mxu0 %v2859
        %3424 = vmatprep.subr.bf16.mxu0 %v2863
        %3425 = vmatpush1.bf16.msra.mxu0 %v2862
        %3426 = vmatprep.subr.bf16.mxu0 %v2866
        %3427 = vmatpush1.bf16.msra.mxu0 %v2865
        %3428 = vmatprep.subr.bf16.mxu0 0
        %3429 = vmatpush1.bf16.msra.mxu0 0
        %3430 = vmatprep.subr.bf16.mxu0 0
        %3431 = vmatpush1.bf16.msra.mxu0 0
        %3432 = vmatprep.subr.bf16.mxu0 0
        %3433 = vmatpush1.bf16.msra.mxu0 0
        %3434 = vmatprep.subr.bf16.mxu0 0
        %3435 = vmatpush1.bf16.msra.mxu0 0
        %3436 = vmatprep.subr.bf16.mxu0 0
        %3437 = vmatpush1.bf16.msra.mxu0 0
        %3438 = vmatprep.subr.bf16.mxu0 0
        %3439 = vmatpush1.bf16.msra.mxu0 0
        %3440 = vmatprep.subr.bf16.mxu0 0
        %3441 = vmatpush1.bf16.msra.mxu0 0
        %3442 = vmatprep.subr.bf16.mxu0 0
        %3443 = vmatpush1.bf16.msra.mxu0 0
        %3444 = vmatprep.mubr.bf16.mxu0 0
        %3445 = vmatmul.mubr.bf16.gmra.mrb[0].mxu0 %v3411
        %v3446 = vpop.f32.mrb[0].mxu0
        %v3447 = vadd.f32 %v2751, %v3446
        %v3448 = vpop.f32.mrb[0].mxu0
        %v3449 = vadd.f32 %v2755, %v3448
        %v3450 = vpop.f32.mrb[0].mxu0
        %v3451 = vpop.f32.mrb[0].mxu0
        %3452 = vdwg.mxu0
        %3453 = vmatprep.subr.bf16.mxu0 0
        %3454 = vmatpush1.bf16.msra.mxu0 %v2846
        %3455 = vmatprep.subr.bf16.mxu0 0
        %3456 = vmatpush1.bf16.msra.mxu0 %v2849
        %3457 = vmatprep.subr.bf16.mxu0 0
        %3458 = vmatpush1.bf16.msra.mxu0 %v2852
        %3459 = vmatprep.subr.bf16.mxu0 0
        %3460 = vmatpush1.bf16.msra.mxu0 %v2855
        %3461 = vmatprep.subr.bf16.mxu0 0
        %3462 = vmatpush1.bf16.msra.mxu0 %v2858
        %3463 = vmatprep.subr.bf16.mxu0 0
        %3464 = vmatpush1.bf16.msra.mxu0 %v2861
        %3465 = vmatprep.subr.bf16.mxu0 0
        %3466 = vmatpush1.bf16.msra.mxu0 %v2864
        %3467 = vmatprep.subr.bf16.mxu0 0
        %3468 = vmatpush1.bf16.msra.mxu0 %v2867
        %3469 = vmatprep.subr.bf16.mxu0 0
        %3470 = vmatpush1.bf16.msra.mxu0 0
        %3471 = vmatprep.subr.bf16.mxu0 0
        %3472 = vmatpush1.bf16.msra.mxu0 0
        %3473 = vmatprep.subr.bf16.mxu0 0
        %3474 = vmatpush1.bf16.msra.mxu0 0
        %3475 = vmatprep.subr.bf16.mxu0 0
        %3476 = vmatpush1.bf16.msra.mxu0 0
        %3477 = vmatprep.subr.bf16.mxu0 0
        %3478 = vmatpush1.bf16.msra.mxu0 0
        %3479 = vmatprep.subr.bf16.mxu0 0
        %3480 = vmatpush1.bf16.msra.mxu0 0
        %3481 = vmatprep.subr.bf16.mxu0 0
        %3482 = vmatpush1.bf16.msra.mxu0 0
        %3483 = vmatprep.subr.bf16.mxu0 0
        %3484 = vmatpush1.bf16.msra.mxu0 0
        %3485 = vmatprep.mubr.bf16.mxu0 0
        %3486 = vmatmul.mubr.bf16.gmra.mrb[0].mxu0 %v3411
        %v3487 = vpop.f32.mrb[0].mxu0
        %v3488 = vadd.f32 %v2759, %v3487
        %v3489 = vpop.f32.mrb[0].mxu0
        %v3490 = vpop.f32.mrb[0].mxu0
        %v3491 = vpop.f32.mrb[0].mxu0
        %3492 = vdwg.mxu0
        %v3493 = vadd.f32 %v2666, %v3447
        %v3494 = vxor.u32 %v3493, 2147483648
        %v3495 = vmul.f32 %v3494, 1.442695
        %v3496 = vpow.pop %v3495
        %v3497 = vadd.f32 %v3496, 1.0
        %v3498 = vrcp.pop %v3497
        %v3499 = vmul.f32 1.0, %v3498
        %v3500 = vadd.f32 %v2668, %v3449
        %v3501 = vxor.u32 %v3500, 2147483648
        %v3502 = vmul.f32 %v3501, 1.442695
        %v3503 = vpow.pop %v3502
        %v3504 = vadd.f32 %v3503, 1.0
        %v3505 = vrcp.pop %v3504
        %v3506 = vmul.f32 1.0, %v3505
        %v3507 = vmul.f32 %v3499, %v3488
        %v3508 = vadd.f32 %v2734, %v3507
        %v3509 = vtanh.pop %v3508
        %v3510 = vsub.f32 1.0, %v3506
        %v3511 = vmul.f32 %v3510, %v3509
        %v3512 = vmul.f32 %v3506, %v3409
        %v3513 = vadd.f32 %v3511, %v3512
        %3514 = vst [vmem:[#allocation3 + $0x28] sm:$0xff] %v3513
        %v3515 = vpack.c.bf16 %v3513, %v3513
        %3516 = vmatprep.subr.bf16.mxu0 %v2845
        %3517 = vmatpush1.bf16.msra.mxu0 %v2844
        %3518 = vmatprep.subr.bf16.mxu0 %v2848
        %3519 = vmatpush1.bf16.msra.mxu0 %v2847
        %3520 = vmatprep.subr.bf16.mxu0 %v2851
        %3521 = vmatpush1.bf16.msra.mxu0 %v2850
        %3522 = vmatprep.subr.bf16.mxu0 %v2854
        %3523 = vmatpush1.bf16.msra.mxu0 %v2853
        %3524 = vmatprep.subr.bf16.mxu0 %v2857
        %3525 = vmatpush1.bf16.msra.mxu0 %v2856
        %3526 = vmatprep.subr.bf16.mxu0 %v2860
        %3527 = vmatpush1.bf16.msra.mxu0 %v2859
        %3528 = vmatprep.subr.bf16.mxu0 %v2863
        %3529 = vmatpush1.bf16.msra.mxu0 %v2862
        %3530 = vmatprep.subr.bf16.mxu0 %v2866
        %3531 = vmatpush1.bf16.msra.mxu0 %v2865
        %3532 = vmatprep.subr.bf16.mxu0 0
        %3533 = vmatpush1.bf16.msra.mxu0 0
        %3534 = vmatprep.subr.bf16.mxu0 0
        %3535 = vmatpush1.bf16.msra.mxu0 0
        %3536 = vmatprep.subr.bf16.mxu0 0
        %3537 = vmatpush1.bf16.msra.mxu0 0
        %3538 = vmatprep.subr.bf16.mxu0 0
        %3539 = vmatpush1.bf16.msra.mxu0 0
        %3540 = vmatprep.subr.bf16.mxu0 0
        %3541 = vmatpush1.bf16.msra.mxu0 0
        %3542 = vmatprep.subr.bf16.mxu0 0
        %3543 = vmatpush1.bf16.msra.mxu0 0
        %3544 = vmatprep.subr.bf16.mxu0 0
        %3545 = vmatpush1.bf16.msra.mxu0 0
        %3546 = vmatprep.subr.bf16.mxu0 0
        %3547 = vmatpush1.bf16.msra.mxu0 0
        %3548 = vmatprep.mubr.bf16.mxu0 0
        %3549 = vmatmul.mubr.bf16.gmra.mrb[0].mxu0 %v3515
        %v3550 = vpop.f32.mrb[0].mxu0
        %v3551 = vadd.f32 %v2751, %v3550
        %v3552 = vpop.f32.mrb[0].mxu0
        %v3553 = vadd.f32 %v2755, %v3552
        %v3554 = vpop.f32.mrb[0].mxu0
        %v3555 = vpop.f32.mrb[0].mxu0
        %3556 = vdwg.mxu0
        %3557 = vmatprep.subr.bf16.mxu0 0
        %3558 = vmatpush1.bf16.msra.mxu0 %v2846
        %3559 = vmatprep.subr.bf16.mxu0 0
        %3560 = vmatpush1.bf16.msra.mxu0 %v2849
        %3561 = vmatprep.subr.bf16.mxu0 0
        %3562 = vmatpush1.bf16.msra.mxu0 %v2852
        %3563 = vmatprep.subr.bf16.mxu0 0
        %3564 = vmatpush1.bf16.msra.mxu0 %v2855
        %3565 = vmatprep.subr.bf16.mxu0 0
        %3566 = vmatpush1.bf16.msra.mxu0 %v2858
        %3567 = vmatprep.subr.bf16.mxu0 0
        %3568 = vmatpush1.bf16.msra.mxu0 %v2861
        %3569 = vmatprep.subr.bf16.mxu0 0
        %3570 = vmatpush1.bf16.msra.mxu0 %v2864
        %3571 = vmatprep.subr.bf16.mxu0 0
        %3572 = vmatpush1.bf16.msra.mxu0 %v2867
        %3573 = vmatprep.subr.bf16.mxu0 0
        %3574 = vmatpush1.bf16.msra.mxu0 0
        %3575 = vmatprep.subr.bf16.mxu0 0
        %3576 = vmatpush1.bf16.msra.mxu0 0
        %3577 = vmatprep.subr.bf16.mxu0 0
        %3578 = vmatpush1.bf16.msra.mxu0 0
        %3579 = vmatprep.subr.bf16.mxu0 0
        %3580 = vmatpush1.bf16.msra.mxu0 0
        %3581 = vmatprep.subr.bf16.mxu0 0
        %3582 = vmatpush1.bf16.msra.mxu0 0
        %3583 = vmatprep.subr.bf16.mxu0 0
        %3584 = vmatpush1.bf16.msra.mxu0 0
        %3585 = vmatprep.subr.bf16.mxu0 0
        %3586 = vmatpush1.bf16.msra.mxu0 0
        %3587 = vmatprep.subr.bf16.mxu0 0
        %3588 = vmatpush1.bf16.msra.mxu0 0
        %3589 = vmatprep.mubr.bf16.mxu0 0
        %3590 = vmatmul.mubr.bf16.gmra.mrb[0].mxu0 %v3515
        %v3591 = vpop.f32.mrb[0].mxu0
        %v3592 = vadd.f32 %v2759, %v3591
        %v3593 = vpop.f32.mrb[0].mxu0
        %v3594 = vpop.f32.mrb[0].mxu0
        %v3595 = vpop.f32.mrb[0].mxu0
        %3596 = vdwg.mxu0
        %v3597 = vadd.f32 %v2672, %v3551
        %v3598 = vxor.u32 %v3597, 2147483648
        %v3599 = vmul.f32 %v3598, 1.442695
        %v3600 = vpow.pop %v3599
        %v3601 = vadd.f32 %v3600, 1.0
        %v3602 = vrcp.pop %v3601
        %v3603 = vmul.f32 1.0, %v3602
        %v3604 = vadd.f32 %v2674, %v3553
        %v3605 = vxor.u32 %v3604, 2147483648
        %v3606 = vmul.f32 %v3605, 1.442695
        %v3607 = vpow.pop %v3606
        %v3608 = vadd.f32 %v3607, 1.0
        %v3609 = vrcp.pop %v3608
        %v3610 = vmul.f32 1.0, %v3609
        %v3611 = vmul.f32 %v3603, %v3592
        %v3612 = vadd.f32 %v2739, %v3611
        %v3613 = vtanh.pop %v3612
        %v3614 = vsub.f32 1.0, %v3610
        %v3615 = vmul.f32 %v3614, %v3613
        %v3616 = vmul.f32 %v3610, %v3513
        %v3617 = vadd.f32 %v3615, %v3616
        %3618 = vst [vmem:[#allocation3 + $0x30] sm:$0xff] %v3617
        %v3619 = vpack.c.bf16 %v3617, %v3617
        %3620 = vmatprep.subr.bf16.mxu0 %v2845
        %3621 = vmatpush1.bf16.msra.mxu0 %v2844
        %3622 = vmatprep.subr.bf16.mxu0 %v2848
        %3623 = vmatpush1.bf16.msra.mxu0 %v2847
        %3624 = vmatprep.subr.bf16.mxu0 %v2851
        %3625 = vmatpush1.bf16.msra.mxu0 %v2850
        %3626 = vmatprep.subr.bf16.mxu0 %v2854
        %3627 = vmatpush1.bf16.msra.mxu0 %v2853
        %3628 = vmatprep.subr.bf16.mxu0 %v2857
        %3629 = vmatpush1.bf16.msra.mxu0 %v2856
        %3630 = vmatprep.subr.bf16.mxu0 %v2860
        %3631 = vmatpush1.bf16.msra.mxu0 %v2859
        %3632 = vmatprep.subr.bf16.mxu0 %v2863
        %3633 = vmatpush1.bf16.msra.mxu0 %v2862
        %3634 = vmatprep.subr.bf16.mxu0 %v2866
        %3635 = vmatpush1.bf16.msra.mxu0 %v2865
        %3636 = vmatprep.subr.bf16.mxu0 0
        %3637 = vmatpush1.bf16.msra.mxu0 0
        %3638 = vmatprep.subr.bf16.mxu0 0
        %3639 = vmatpush1.bf16.msra.mxu0 0
        %3640 = vmatprep.subr.bf16.mxu0 0
        %3641 = vmatpush1.bf16.msra.mxu0 0
        %3642 = vmatprep.subr.bf16.mxu0 0
        %3643 = vmatpush1.bf16.msra.mxu0 0
        %3644 = vmatprep.subr.bf16.mxu0 0
        %3645 = vmatpush1.bf16.msra.mxu0 0
        %3646 = vmatprep.subr.bf16.mxu0 0
        %3647 = vmatpush1.bf16.msra.mxu0 0
        %3648 = vmatprep.subr.bf16.mxu0 0
        %3649 = vmatpush1.bf16.msra.mxu0 0
        %3650 = vmatprep.subr.bf16.mxu0 0
        %3651 = vmatpush1.bf16.msra.mxu0 0
        %3652 = vmatprep.mubr.bf16.mxu0 0
        %3653 = vmatmul.mubr.bf16.gmra.mrb[0].mxu0 %v3619
        %v3654 = vpop.f32.mrb[0].mxu0
        %v3655 = vadd.f32 %v2751, %v3654
        %v3656 = vpop.f32.mrb[0].mxu0
        %v3657 = vadd.f32 %v2755, %v3656
        %v3658 = vpop.f32.mrb[0].mxu0
        %v3659 = vpop.f32.mrb[0].mxu0
        %3660 = vdwg.mxu0
        %3661 = vmatprep.subr.bf16.mxu0 0
        %3662 = vmatpush1.bf16.msra.mxu0 %v2846
        %3663 = vmatprep.subr.bf16.mxu0 0
        %3664 = vmatpush1.bf16.msra.mxu0 %v2849
        %3665 = vmatprep.subr.bf16.mxu0 0
        %3666 = vmatpush1.bf16.msra.mxu0 %v2852
        %3667 = vmatprep.subr.bf16.mxu0 0
        %3668 = vmatpush1.bf16.msra.mxu0 %v2855
        %3669 = vmatprep.subr.bf16.mxu0 0
        %3670 = vmatpush1.bf16.msra.mxu0 %v2858
        %3671 = vmatprep.subr.bf16.mxu0 0
        %3672 = vmatpush1.bf16.msra.mxu0 %v2861
        %3673 = vmatprep.subr.bf16.mxu0 0
        %3674 = vmatpush1.bf16.msra.mxu0 %v2864
        %3675 = vmatprep.subr.bf16.mxu0 0
        %3676 = vmatpush1.bf16.msra.mxu0 %v2867
        %3677 = vmatprep.subr.bf16.mxu0 0
        %3678 = vmatpush1.bf16.msra.mxu0 0
        %3679 = vmatprep.subr.bf16.mxu0 0
        %3680 = vmatpush1.bf16.msra.mxu0 0
        %3681 = vmatprep.subr.bf16.mxu0 0
        %3682 = vmatpush1.bf16.msra.mxu0 0
        %3683 = vmatprep.subr.bf16.mxu0 0
        %3684 = vmatpush1.bf16.msra.mxu0 0
        %3685 = vmatprep.subr.bf16.mxu0 0
        %3686 = vmatpush1.bf16.msra.mxu0 0
        %3687 = vmatprep.subr.bf16.mxu0 0
        %3688 = vmatpush1.bf16.msra.mxu0 0
        %3689 = vmatprep.subr.bf16.mxu0 0
        %3690 = vmatpush1.bf16.msra.mxu0 0
        %3691 = vmatprep.subr.bf16.mxu0 0
        %3692 = vmatpush1.bf16.msra.mxu0 0
        %3693 = vmatprep.mubr.bf16.mxu0 0
        %3694 = vmatmul.mubr.bf16.gmra.mrb[0].mxu0 %v3619
        %v3695 = vpop.f32.mrb[0].mxu0
        %v3696 = vadd.f32 %v2759, %v3695
        %v3697 = vpop.f32.mrb[0].mxu0
        %v3698 = vpop.f32.mrb[0].mxu0
        %v3699 = vpop.f32.mrb[0].mxu0
        %3700 = vdwg.mxu0
        %v3701 = vadd.f32 %v2676, %v3655
        %v3702 = vxor.u32 %v3701, 2147483648
        %v3703 = vmul.f32 %v3702, 1.442695
        %v3704 = vpow.pop %v3703
        %v3705 = vadd.f32 %v3704, 1.0
        %v3706 = vrcp.pop %v3705
        %v3707 = vmul.f32 1.0, %v3706
        %v3708 = vadd.f32 %v2678, %v3657
        %v3709 = vxor.u32 %v3708, 2147483648
        %v3710 = vmul.f32 %v3709, 1.442695
        %v3711 = vpow.pop %v3710
        %v3712 = vadd.f32 %v3711, 1.0
        %v3713 = vrcp.pop %v3712
        %v3714 = vmul.f32 1.0, %v3713
        %v3715 = vmul.f32 %v3707, %v3696
        %v3716 = vadd.f32 %v2742, %v3715
        %v3717 = vtanh.pop %v3716
        %v3718 = vsub.f32 1.0, %v3714
        %v3719 = vmul.f32 %v3718, %v3717
        %v3720 = vmul.f32 %v3714, %v3617
        %v3721 = vadd.f32 %v3719, %v3720
        %3722 = vst [vmem:[#allocation3 + $0x38] sm:$0xff] %v3721
        %s3723 = scalar_lea.vmem %s11, 384
        %v3724 = vld [vmem:[%s3723] sm:$0xff]
        %v3725 = vld [vmem:[%s3723 + $0x8] sm:$0xf]
        %v3726 = vld [vmem:[%s3723 + $0xc] sm:$0xff]
        %v3727 = vld [vmem:[%s3723 + $0x14] sm:$0xf]
        %v3728 = vld [vmem:[%s3723 + $0x18] sm:$0xff]
        %v3729 = vld [vmem:[%s3723 + $0x20] sm:$0xf]
        %v3730 = vld [vmem:[%s3723 + $0x24] sm:$0xff]
        %v3731 = vld [vmem:[%s3723 + $0x2c] sm:$0xf]
        %v3732 = vld [vmem:[%s3723 + $0x30] sm:$0xff]
        %v3733 = vld [vmem:[%s3723 + $0x38] sm:$0xf]
        %v3734 = vld [vmem:[%s3723 + $0x3c] sm:$0xff]
        %v3735 = vld [vmem:[%s3723 + $0x44] sm:$0xf]
        %v3736 = vld [vmem:[%s3723 + $0x48] sm:$0xff]
        %v3737 = vld [vmem:[%s3723 + $0x50] sm:$0xf]
        %v3738 = vld [vmem:[%s3723 + $0x54] sm:$0xff]
        %v3739 = vld [vmem:[%s3723 + $0x5c] sm:$0xf]
        %v3740 = vld [vmem:[%s3723 + $0x60] sm:$0xff]
        %v3741 = vld [vmem:[%s3723 + $0x68] sm:$0xf]
        %v3742 = vld [vmem:[%s3723 + $0x6c] sm:$0xff]
        %v3743 = vld [vmem:[%s3723 + $0x74] sm:$0xf]
        %v3744 = vld [vmem:[%s3723 + $0x78] sm:$0xff]
        %v3745 = vld [vmem:[%s3723 + $0x80] sm:$0xf]
        %v3746 = vld [vmem:[%s3723 + $0x84] sm:$0xff]
        %v3747 = vld [vmem:[%s3723 + $0x8c] sm:$0xf]
        %v3748 = vld [vmem:[%s3723 + $0x90] sm:$0xff]
        %v3749 = vld [vmem:[%s3723 + $0x98] sm:$0xf]
        %v3750 = vld [vmem:[%s3723 + $0x9c] sm:$0xff]
        %v3751 = vld [vmem:[%s3723 + $0xa4] sm:$0xf]
        %v3752 = vld [vmem:[%s3723 + $0xa8] sm:$0xff]
        %v3753 = vld [vmem:[%s3723 + $0xb0] sm:$0xf]
        %v3754 = vld [vmem:[%s3723 + $0xb4] sm:$0xff]
        %v3755 = vld [vmem:[%s3723 + $0xbc] sm:$0xf]
        %s3756 = scalar_lea.vmem %s12, 384
        %v3757 = vld [vmem:[%s3756] sm:$0xff]
        %v3758 = vld [vmem:[%s3756 + $0x8] sm:$0xf]
        %v3759 = vld [vmem:[%s3756 + $0xc] sm:$0xff]
        %v3760 = vld [vmem:[%s3756 + $0x14] sm:$0xf]
        %v3761 = vld [vmem:[%s3756 + $0x18] sm:$0xff]
        %v3762 = vld [vmem:[%s3756 + $0x20] sm:$0xf]
        %v3763 = vld [vmem:[%s3756 + $0x24] sm:$0xff]
        %v3764 = vld [vmem:[%s3756 + $0x2c] sm:$0xf]
        %v3765 = vld [vmem:[%s3756 + $0x30] sm:$0xff]
        %v3766 = vld [vmem:[%s3756 + $0x38] sm:$0xf]
        %v3767 = vld [vmem:[%s3756 + $0x3c] sm:$0xff]
        %v3768 = vld [vmem:[%s3756 + $0x44] sm:$0xf]
        %v3769 = vld [vmem:[%s3756 + $0x48] sm:$0xff]
        %v3770 = vld [vmem:[%s3756 + $0x50] sm:$0xf]
        %v3771 = vld [vmem:[%s3756 + $0x54] sm:$0xff]
        %v3772 = vld [vmem:[%s3756 + $0x5c] sm:$0xf]
        %v3773 = vld [vmem:[%s3756 + $0x60] sm:$0xff]
        %v3774 = vld [vmem:[%s3756 + $0x68] sm:$0xf]
        %v3775 = vld [vmem:[%s3756 + $0x6c] sm:$0xff]
        %v3776 = vld [vmem:[%s3756 + $0x74] sm:$0xf]
        %v3777 = vld [vmem:[%s3756 + $0x78] sm:$0xff]
        %v3778 = vld [vmem:[%s3756 + $0x80] sm:$0xf]
        %v3779 = vld [vmem:[%s3756 + $0x84] sm:$0xff]
        %v3780 = vld [vmem:[%s3756 + $0x8c] sm:$0xf]
        %v3781 = vld [vmem:[%s3756 + $0x90] sm:$0xff]
        %v3782 = vld [vmem:[%s3756 + $0x98] sm:$0xf]
        %v3783 = vld [vmem:[%s3756 + $0x9c] sm:$0xff]
        %v3784 = vld [vmem:[%s3756 + $0xa4] sm:$0xf]
        %v3785 = vld [vmem:[%s3756 + $0xa8] sm:$0xff]
        %v3786 = vld [vmem:[%s3756 + $0xb0] sm:$0xf]
        %v3787 = vld [vmem:[%s3756 + $0xb4] sm:$0xff]
        %v3788 = vld [vmem:[%s3756 + $0xbc] sm:$0xf]
        %s3789 = scalar_lea.vmem %s13, 6
        %v3790 = vld [vmem:[%s3789] sm:$0x7]
        %v3792 = vlaneseq
        %v3793 = vshrl.u32 %v3792, 7
        %v3794 = vsub.s32 0, %v3793
        %v3795 = vrot.slane %v3790, %v3794
        %v3796 = vlaneseq
        %v3797 = vshrl.u32 %v3796, 7
        %v3798 = vsub.s32 1, %v3797
        %v3799 = vrot.slane %v3790, %v3798
        %v3800 = vlaneseq
        %v3801 = vshrl.u32 %v3800, 7
        %v3802 = vsub.s32 2, %v3801
        %v3803 = vrot.slane %v3790, %v3802
        %v3839 = vunpack.c.l.b16 %v3724
        %v3840 = vunpack.c.h.b16 %v3724
        %v3841 = vunpack.c.l.b16 %v3725
        %v3842 = vunpack.c.l.b16 %v3726
        %v3843 = vunpack.c.h.b16 %v3726
        %v3844 = vunpack.c.l.b16 %v3727
        %v3845 = vunpack.c.l.b16 %v3728
        %v3846 = vunpack.c.h.b16 %v3728
        %v3847 = vunpack.c.l.b16 %v3729
        %v3848 = vunpack.c.l.b16 %v3730
        %v3849 = vunpack.c.h.b16 %v3730
        %v3850 = vunpack.c.l.b16 %v3731
        %v3851 = vunpack.c.l.b16 %v3732
        %v3852 = vunpack.c.h.b16 %v3732
        %v3853 = vunpack.c.l.b16 %v3733
        %v3854 = vunpack.c.l.b16 %v3734
        %v3855 = vunpack.c.h.b16 %v3734
        %v3856 = vunpack.c.l.b16 %v3735
        %v3857 = vunpack.c.l.b16 %v3736
        %v3858 = vunpack.c.h.b16 %v3736
        %v3859 = vunpack.c.l.b16 %v3737
        %v3860 = vunpack.c.l.b16 %v3738
        %v3861 = vunpack.c.h.b16 %v3738
        %v3862 = vunpack.c.l.b16 %v3739
        %v3863 = vunpack.c.l.b16 %v3740
        %v3864 = vunpack.c.h.b16 %v3740
        %v3865 = vunpack.c.l.b16 %v3741
        %v3866 = vunpack.c.l.b16 %v3742
        %v3867 = vunpack.c.h.b16 %v3742
        %v3868 = vunpack.c.l.b16 %v3743
        %v3869 = vunpack.c.l.b16 %v3744
        %v3870 = vunpack.c.h.b16 %v3744
        %v3871 = vunpack.c.l.b16 %v3745
        %v3872 = vunpack.c.l.b16 %v3746
        %v3873 = vunpack.c.h.b16 %v3746
        %v3874 = vunpack.c.l.b16 %v3747
        %v3875 = vunpack.c.l.b16 %v3748
        %v3876 = vunpack.c.h.b16 %v3748
        %v3877 = vunpack.c.l.b16 %v3749
        %v3878 = vunpack.c.l.b16 %v3750
        %v3879 = vunpack.c.h.b16 %v3750
        %v3880 = vunpack.c.l.b16 %v3751
        %v3881 = vunpack.c.l.b16 %v3752
        %v3882 = vunpack.c.h.b16 %v3752
        %v3883 = vunpack.c.l.b16 %v3753
        %v3884 = vunpack.c.l.b16 %v3754
        %v3885 = vunpack.c.h.b16 %v3754
        %v3886 = vunpack.c.l.b16 %v3755
        %v3887 = vpack.c.b16 %v3842, %v3839
        %v3888 = vpack.c.b16 %v3843, %v3840
        %v3889 = vpack.c.b16 %v3844, %v3841
        %v3890 = vpack.c.b16 %v3848, %v3845
        %v3891 = vpack.c.b16 %v3849, %v3846
        %v3892 = vpack.c.b16 %v3850, %v3847
        %v3893 = vpack.c.b16 %v3854, %v3851
        %v3894 = vpack.c.b16 %v3855, %v3852
        %v3895 = vpack.c.b16 %v3856, %v3853
        %v3896 = vpack.c.b16 %v3860, %v3857
        %v3897 = vpack.c.b16 %v3861, %v3858
        %v3898 = vpack.c.b16 %v3862, %v3859
        %v3899 = vpack.c.b16 %v3866, %v3863
        %v3900 = vpack.c.b16 %v3867, %v3864
        %v3901 = vpack.c.b16 %v3868, %v3865
        %v3902 = vpack.c.b16 %v3872, %v3869
        %v3903 = vpack.c.b16 %v3873, %v3870
        %v3904 = vpack.c.b16 %v3874, %v3871
        %v3905 = vpack.c.b16 %v3878, %v3875
        %v3906 = vpack.c.b16 %v3879, %v3876
        %v3907 = vpack.c.b16 %v3880, %v3877
        %v3908 = vpack.c.b16 %v3884, %v3881
        %v3909 = vpack.c.b16 %v3885, %v3882
        %v3910 = vpack.c.b16 %v3886, %v3883
        %3935 = vmatprep.subr.bf16.mxu0 %v3888
        %3936 = vmatpush1.bf16.msra.mxu0 %v3887
        %3937 = vmatprep.subr.bf16.mxu0 %v3891
        %3938 = vmatpush1.bf16.msra.mxu0 %v3890
        %3939 = vmatprep.subr.bf16.mxu0 %v3894
        %3940 = vmatpush1.bf16.msra.mxu0 %v3893
        %3941 = vmatprep.subr.bf16.mxu0 %v3897
        %3942 = vmatpush1.bf16.msra.mxu0 %v3896
        %3943 = vmatprep.subr.bf16.mxu0 %v3900
        %3944 = vmatpush1.bf16.msra.mxu0 %v3899
        %3945 = vmatprep.subr.bf16.mxu0 %v3903
        %3946 = vmatpush1.bf16.msra.mxu0 %v3902
        %3947 = vmatprep.subr.bf16.mxu0 %v3906
        %3948 = vmatpush1.bf16.msra.mxu0 %v3905
        %3949 = vmatprep.subr.bf16.mxu0 %v3909
        %3950 = vmatpush1.bf16.msra.mxu0 %v3908
        %3951 = vmatprep.subr.bf16.mxu0 0
        %3952 = vmatpush1.bf16.msra.mxu0 0
        %3953 = vmatprep.subr.bf16.mxu0 0
        %3954 = vmatpush1.bf16.msra.mxu0 0
        %3955 = vmatprep.subr.bf16.mxu0 0
        %3956 = vmatpush1.bf16.msra.mxu0 0
        %3957 = vmatprep.subr.bf16.mxu0 0
        %3958 = vmatpush1.bf16.msra.mxu0 0
        %3959 = vmatprep.subr.bf16.mxu0 0
        %3960 = vmatpush1.bf16.msra.mxu0 0
        %3961 = vmatprep.subr.bf16.mxu0 0
        %3962 = vmatpush1.bf16.msra.mxu0 0
        %3963 = vmatprep.subr.bf16.mxu0 0
        %3964 = vmatpush1.bf16.msra.mxu0 0
        %3965 = vmatprep.subr.bf16.mxu0 0
        %3966 = vmatpush1.bf16.msra.mxu0 0
        %3967 = vmatprep.mubr.bf16.mxu0 0
        %3968 = vmatmul.mubr.bf16.gmra.mrb[0].mxu0 %v1453
        %v3969 = vpop.f32.mrb[0].mxu0
        %v3970 = vadd.f32 %v3795, %v3969
        %v3971 = vpop.f32.mrb[0].mxu0
        %v3972 = vadd.f32 %v3799, %v3971
        %v3973 = vpop.f32.mrb[0].mxu0
        %v3974 = vadd.f32 %v3795, %v3973
        %v3975 = vpop.f32.mrb[0].mxu0
        %v3976 = vadd.f32 %v3799, %v3975
        %3977 = vdwg.mxu0
        %3978 = vmatprep.subr.bf16.mxu0 0
        %3979 = vmatpush1.bf16.msra.mxu0 %v3889
        %3980 = vmatprep.subr.bf16.mxu0 0
        %3981 = vmatpush1.bf16.msra.mxu0 %v3892
        %3982 = vmatprep.subr.bf16.mxu0 0
        %3983 = vmatpush1.bf16.msra.mxu0 %v3895
        %3984 = vmatprep.subr.bf16.mxu0 0
        %3985 = vmatpush1.bf16.msra.mxu0 %v3898
        %3986 = vmatprep.subr.bf16.mxu0 0
        %3987 = vmatpush1.bf16.msra.mxu0 %v3901
        %3988 = vmatprep.subr.bf16.mxu0 0
        %3989 = vmatpush1.bf16.msra.mxu0 %v3904
        %3990 = vmatprep.subr.bf16.mxu0 0
        %3991 = vmatpush1.bf16.msra.mxu0 %v3907
        %3992 = vmatprep.subr.bf16.mxu0 0
        %3993 = vmatpush1.bf16.msra.mxu0 %v3910
        %3994 = vmatprep.subr.bf16.mxu0 0
        %3995 = vmatpush1.bf16.msra.mxu0 0
        %3996 = vmatprep.subr.bf16.mxu0 0
        %3997 = vmatpush1.bf16.msra.mxu0 0
        %3998 = vmatprep.subr.bf16.mxu0 0
        %3999 = vmatpush1.bf16.msra.mxu0 0
        %4000 = vmatprep.subr.bf16.mxu0 0
        %4001 = vmatpush1.bf16.msra.mxu0 0
        %4002 = vmatprep.subr.bf16.mxu0 0
        %4003 = vmatpush1.bf16.msra.mxu0 0
        %4004 = vmatprep.subr.bf16.mxu0 0
        %4005 = vmatpush1.bf16.msra.mxu0 0
        %4006 = vmatprep.subr.bf16.mxu0 0
        %4007 = vmatpush1.bf16.msra.mxu0 0
        %4008 = vmatprep.subr.bf16.mxu0 0
        %4009 = vmatpush1.bf16.msra.mxu0 0
        %4010 = vmatprep.mubr.bf16.mxu0 0
        %4011 = vmatmul.mubr.bf16.gmra.mrb[0].mxu0 %v1453
        %v4012 = vpop.f32.mrb[0].mxu0
        %v4013 = vadd.f32 %v3803, %v4012
        %v4014 = vpop.f32.mrb[0].mxu0
        %v4015 = vpop.f32.mrb[0].mxu0
        %v4016 = vadd.f32 %v3803, %v4015
        %v4017 = vpop.f32.mrb[0].mxu0
        %4018 = vdwg.mxu0
        %s4019 = scalar_lea.vmem %s14, 6
        %v4020 = vld [vmem:[%s4019] sm:$0x7]
        %v4022 = vlaneseq
        %v4023 = vshrl.u32 %v4022, 7
        %v4024 = vsub.s32 0, %v4023
        %v4025 = vrot.slane %v4020, %v4024
        %v4026 = vlaneseq
        %v4027 = vshrl.u32 %v4026, 7
        %v4028 = vsub.s32 1, %v4027
        %v4029 = vrot.slane %v4020, %v4028
        %v4030 = vlaneseq
        %v4031 = vshrl.u32 %v4030, 7
        %v4032 = vsub.s32 2, %v4031
        %v4033 = vrot.slane %v4020, %v4032
        %v4069 = vunpack.c.l.b16 %v3757
        %v4070 = vunpack.c.h.b16 %v3757
        %v4071 = vunpack.c.l.b16 %v3758
        %v4072 = vunpack.c.l.b16 %v3759
        %v4073 = vunpack.c.h.b16 %v3759
        %v4074 = vunpack.c.l.b16 %v3760
        %v4075 = vunpack.c.l.b16 %v3761
        %v4076 = vunpack.c.h.b16 %v3761
        %v4077 = vunpack.c.l.b16 %v3762
        %v4078 = vunpack.c.l.b16 %v3763
        %v4079 = vunpack.c.h.b16 %v3763
        %v4080 = vunpack.c.l.b16 %v3764
        %v4081 = vunpack.c.l.b16 %v3765
        %v4082 = vunpack.c.h.b16 %v3765
        %v4083 = vunpack.c.l.b16 %v3766
        %v4084 = vunpack.c.l.b16 %v3767
        %v4085 = vunpack.c.h.b16 %v3767
        %v4086 = vunpack.c.l.b16 %v3768
        %v4087 = vunpack.c.l.b16 %v3769
        %v4088 = vunpack.c.h.b16 %v3769
        %v4089 = vunpack.c.l.b16 %v3770
        %v4090 = vunpack.c.l.b16 %v3771
        %v4091 = vunpack.c.h.b16 %v3771
        %v4092 = vunpack.c.l.b16 %v3772
        %v4093 = vunpack.c.l.b16 %v3773
        %v4094 = vunpack.c.h.b16 %v3773
        %v4095 = vunpack.c.l.b16 %v3774
        %v4096 = vunpack.c.l.b16 %v3775
        %v4097 = vunpack.c.h.b16 %v3775
        %v4098 = vunpack.c.l.b16 %v3776
        %v4099 = vunpack.c.l.b16 %v3777
        %v4100 = vunpack.c.h.b16 %v3777
        %v4101 = vunpack.c.l.b16 %v3778
        %v4102 = vunpack.c.l.b16 %v3779
        %v4103 = vunpack.c.h.b16 %v3779
        %v4104 = vunpack.c.l.b16 %v3780
        %v4105 = vunpack.c.l.b16 %v3781
        %v4106 = vunpack.c.h.b16 %v3781
        %v4107 = vunpack.c.l.b16 %v3782
        %v4108 = vunpack.c.l.b16 %v3783
        %v4109 = vunpack.c.h.b16 %v3783
        %v4110 = vunpack.c.l.b16 %v3784
        %v4111 = vunpack.c.l.b16 %v3785
        %v4112 = vunpack.c.h.b16 %v3785
        %v4113 = vunpack.c.l.b16 %v3786
        %v4114 = vunpack.c.l.b16 %v3787
        %v4115 = vunpack.c.h.b16 %v3787
        %v4116 = vunpack.c.l.b16 %v3788
        %v4117 = vpack.c.b16 %v4072, %v4069
        %v4118 = vpack.c.b16 %v4073, %v4070
        %v4119 = vpack.c.b16 %v4074, %v4071
        %v4120 = vpack.c.b16 %v4078, %v4075
        %v4121 = vpack.c.b16 %v4079, %v4076
        %v4122 = vpack.c.b16 %v4080, %v4077
        %v4123 = vpack.c.b16 %v4084, %v4081
        %v4124 = vpack.c.b16 %v4085, %v4082
        %v4125 = vpack.c.b16 %v4086, %v4083
        %v4126 = vpack.c.b16 %v4090, %v4087
        %v4127 = vpack.c.b16 %v4091, %v4088
        %v4128 = vpack.c.b16 %v4092, %v4089
        %v4129 = vpack.c.b16 %v4096, %v4093
        %v4130 = vpack.c.b16 %v4097, %v4094
        %v4131 = vpack.c.b16 %v4098, %v4095
        %v4132 = vpack.c.b16 %v4102, %v4099
        %v4133 = vpack.c.b16 %v4103, %v4100
        %v4134 = vpack.c.b16 %v4104, %v4101
        %v4135 = vpack.c.b16 %v4108, %v4105
        %v4136 = vpack.c.b16 %v4109, %v4106
        %v4137 = vpack.c.b16 %v4110, %v4107
        %v4138 = vpack.c.b16 %v4114, %v4111
        %v4139 = vpack.c.b16 %v4115, %v4112
        %v4140 = vpack.c.b16 %v4116, %v4113
        %4165 = vmatprep.subr.bf16.mxu0 %v4118
        %4166 = vmatpush1.bf16.msra.mxu0 %v4117
        %4167 = vmatprep.subr.bf16.mxu0 %v4121
        %4168 = vmatpush1.bf16.msra.mxu0 %v4120
        %4169 = vmatprep.subr.bf16.mxu0 %v4124
        %4170 = vmatpush1.bf16.msra.mxu0 %v4123
        %4171 = vmatprep.subr.bf16.mxu0 %v4127
        %4172 = vmatpush1.bf16.msra.mxu0 %v4126
        %4173 = vmatprep.subr.bf16.mxu0 %v4130
        %4174 = vmatpush1.bf16.msra.mxu0 %v4129
        %4175 = vmatprep.subr.bf16.mxu0 %v4133
        %4176 = vmatpush1.bf16.msra.mxu0 %v4132
        %4177 = vmatprep.subr.bf16.mxu0 %v4136
        %4178 = vmatpush1.bf16.msra.mxu0 %v4135
        %4179 = vmatprep.subr.bf16.mxu0 %v4139
        %4180 = vmatpush1.bf16.msra.mxu0 %v4138
        %4181 = vmatprep.subr.bf16.mxu0 0
        %4182 = vmatpush1.bf16.msra.mxu0 0
        %4183 = vmatprep.subr.bf16.mxu0 0
        %4184 = vmatpush1.bf16.msra.mxu0 0
        %4185 = vmatprep.subr.bf16.mxu0 0
        %4186 = vmatpush1.bf16.msra.mxu0 0
        %4187 = vmatprep.subr.bf16.mxu0 0
        %4188 = vmatpush1.bf16.msra.mxu0 0
        %4189 = vmatprep.subr.bf16.mxu0 0
        %4190 = vmatpush1.bf16.msra.mxu0 0
        %4191 = vmatprep.subr.bf16.mxu0 0
        %4192 = vmatpush1.bf16.msra.mxu0 0
        %4193 = vmatprep.subr.bf16.mxu0 0
        %4194 = vmatpush1.bf16.msra.mxu0 0
        %4195 = vmatprep.subr.bf16.mxu0 0
        %4196 = vmatpush1.bf16.msra.mxu0 0
        %4197 = vmatprep.mubr.bf16.mxu0 0
        %4198 = vmatmul.mubr.bf16.gmra.mrb[0].mxu0 %v2763
        %v4199 = vpop.f32.mrb[0].mxu0
        %v4200 = vadd.f32 %v4025, %v4199
        %v4201 = vpop.f32.mrb[0].mxu0
        %v4202 = vadd.f32 %v4029, %v4201
        %v4203 = vpop.f32.mrb[0].mxu0
        %v4204 = vpop.f32.mrb[0].mxu0
        %4205 = vdwg.mxu0
        %4206 = vmatprep.subr.bf16.mxu0 0
        %4207 = vmatpush1.bf16.msra.mxu0 %v4119
        %4208 = vmatprep.subr.bf16.mxu0 0
        %4209 = vmatpush1.bf16.msra.mxu0 %v4122
        %4210 = vmatprep.subr.bf16.mxu0 0
        %4211 = vmatpush1.bf16.msra.mxu0 %v4125
        %4212 = vmatprep.subr.bf16.mxu0 0
        %4213 = vmatpush1.bf16.msra.mxu0 %v4128
        %4214 = vmatprep.subr.bf16.mxu0 0
        %4215 = vmatpush1.bf16.msra.mxu0 %v4131
        %4216 = vmatprep.subr.bf16.mxu0 0
        %4217 = vmatpush1.bf16.msra.mxu0 %v4134
        %4218 = vmatprep.subr.bf16.mxu0 0
        %4219 = vmatpush1.bf16.msra.mxu0 %v4137
        %4220 = vmatprep.subr.bf16.mxu0 0
        %4221 = vmatpush1.bf16.msra.mxu0 %v4140
        %4222 = vmatprep.subr.bf16.mxu0 0
        %4223 = vmatpush1.bf16.msra.mxu0 0
        %4224 = vmatprep.subr.bf16.mxu0 0
        %4225 = vmatpush1.bf16.msra.mxu0 0
        %4226 = vmatprep.subr.bf16.mxu0 0
        %4227 = vmatpush1.bf16.msra.mxu0 0
        %4228 = vmatprep.subr.bf16.mxu0 0
        %4229 = vmatpush1.bf16.msra.mxu0 0
        %4230 = vmatprep.subr.bf16.mxu0 0
        %4231 = vmatpush1.bf16.msra.mxu0 0
        %4232 = vmatprep.subr.bf16.mxu0 0
        %4233 = vmatpush1.bf16.msra.mxu0 0
        %4234 = vmatprep.subr.bf16.mxu0 0
        %4235 = vmatpush1.bf16.msra.mxu0 0
        %4236 = vmatprep.subr.bf16.mxu0 0
        %4237 = vmatpush1.bf16.msra.mxu0 0
        %4238 = vmatprep.mubr.bf16.mxu0 0
        %4239 = vmatmul.mubr.bf16.gmra.mrb[0].mxu0 %v2763
        %v4240 = vpop.f32.mrb[0].mxu0
        %v4241 = vadd.f32 %v4033, %v4240
        %v4242 = vpop.f32.mrb[0].mxu0
        %v4243 = vpop.f32.mrb[0].mxu0
        %v4244 = vpop.f32.mrb[0].mxu0
        %4245 = vdwg.mxu0
        %v4246 = vadd.f32 %v3970, %v4200
        %v4247 = vxor.u32 %v4246, 2147483648
        %v4248 = vmul.f32 %v4247, 1.442695
        %v4249 = vpow.pop %v4248
        %v4250 = vadd.f32 %v4249, 1.0
        %v4251 = vrcp.pop %v4250
        %v4252 = vmul.f32 1.0, %v4251
        %v4253 = vadd.f32 %v3972, %v4202
        %v4254 = vxor.u32 %v4253, 2147483648
        %v4255 = vmul.f32 %v4254, 1.442695
        %v4256 = vpow.pop %v4255
        %v4257 = vadd.f32 %v4256, 1.0
        %v4258 = vrcp.pop %v4257
        %v4259 = vmul.f32 1.0, %v4258
        %v4260 = vmul.f32 %v4252, %v4241
        %v4261 = vadd.f32 %v4013, %v4260
        %v4262 = vtanh.pop %v4261
        %v4263 = vsub.f32 1.0, %v4259
        %v4264 = vmul.f32 %v4263, %v4262
        %v4265 = vmul.f32 %v4259, %v2378
        %v4266 = vadd.f32 %v4264, %v4265
        %4267 = vst [vmem:[#allocation4] sm:$0xff] %v4266
        %v4268 = vpack.c.bf16 %v4266, %v4266
        %4269 = vmatprep.subr.bf16.mxu0 %v4118
        %4270 = vmatpush1.bf16.msra.mxu0 %v4117
        %4271 = vmatprep.subr.bf16.mxu0 %v4121
        %4272 = vmatpush1.bf16.msra.mxu0 %v4120
        %4273 = vmatprep.subr.bf16.mxu0 %v4124
        %4274 = vmatpush1.bf16.msra.mxu0 %v4123
        %4275 = vmatprep.subr.bf16.mxu0 %v4127
        %4276 = vmatpush1.bf16.msra.mxu0 %v4126
        %4277 = vmatprep.subr.bf16.mxu0 %v4130
        %4278 = vmatpush1.bf16.msra.mxu0 %v4129
        %4279 = vmatprep.subr.bf16.mxu0 %v4133
        %4280 = vmatpush1.bf16.msra.mxu0 %v4132
        %4281 = vmatprep.subr.bf16.mxu0 %v4136
        %4282 = vmatpush1.bf16.msra.mxu0 %v4135
        %4283 = vmatprep.subr.bf16.mxu0 %v4139
        %4284 = vmatpush1.bf16.msra.mxu0 %v4138
        %4285 = vmatprep.subr.bf16.mxu0 0
        %4286 = vmatpush1.bf16.msra.mxu0 0
        %4287 = vmatprep.subr.bf16.mxu0 0
        %4288 = vmatpush1.bf16.msra.mxu0 0
        %4289 = vmatprep.subr.bf16.mxu0 0
        %4290 = vmatpush1.bf16.msra.mxu0 0
        %4291 = vmatprep.subr.bf16.mxu0 0
        %4292 = vmatpush1.bf16.msra.mxu0 0
        %4293 = vmatprep.subr.bf16.mxu0 0
        %4294 = vmatpush1.bf16.msra.mxu0 0
        %4295 = vmatprep.subr.bf16.mxu0 0
        %4296 = vmatpush1.bf16.msra.mxu0 0
        %4297 = vmatprep.subr.bf16.mxu0 0
        %4298 = vmatpush1.bf16.msra.mxu0 0
        %4299 = vmatprep.subr.bf16.mxu0 0
        %4300 = vmatpush1.bf16.msra.mxu0 0
        %4301 = vmatprep.mubr.bf16.mxu0 0
        %4302 = vmatmul.mubr.bf16.gmra.mrb[0].mxu0 %v4268
        %v4303 = vpop.f32.mrb[0].mxu0
        %v4304 = vadd.f32 %v4025, %v4303
        %v4305 = vpop.f32.mrb[0].mxu0
        %v4306 = vadd.f32 %v4029, %v4305
        %v4307 = vpop.f32.mrb[0].mxu0
        %v4308 = vpop.f32.mrb[0].mxu0
        %4309 = vdwg.mxu0
        %4310 = vmatprep.subr.bf16.mxu0 0
        %4311 = vmatpush1.bf16.msra.mxu0 %v4119
        %4312 = vmatprep.subr.bf16.mxu0 0
        %4313 = vmatpush1.bf16.msra.mxu0 %v4122
        %4314 = vmatprep.subr.bf16.mxu0 0
        %4315 = vmatpush1.bf16.msra.mxu0 %v4125
        %4316 = vmatprep.subr.bf16.mxu0 0
        %4317 = vmatpush1.bf16.msra.mxu0 %v4128
        %4318 = vmatprep.subr.bf16.mxu0 0
        %4319 = vmatpush1.bf16.msra.mxu0 %v4131
        %4320 = vmatprep.subr.bf16.mxu0 0
        %4321 = vmatpush1.bf16.msra.mxu0 %v4134
        %4322 = vmatprep.subr.bf16.mxu0 0
        %4323 = vmatpush1.bf16.msra.mxu0 %v4137
        %4324 = vmatprep.subr.bf16.mxu0 0
        %4325 = vmatpush1.bf16.msra.mxu0 %v4140
        %4326 = vmatprep.subr.bf16.mxu0 0
        %4327 = vmatpush1.bf16.msra.mxu0 0
        %4328 = vmatprep.subr.bf16.mxu0 0
        %4329 = vmatpush1.bf16.msra.mxu0 0
        %4330 = vmatprep.subr.bf16.mxu0 0
        %4331 = vmatpush1.bf16.msra.mxu0 0
        %4332 = vmatprep.subr.bf16.mxu0 0
        %4333 = vmatpush1.bf16.msra.mxu0 0
        %4334 = vmatprep.subr.bf16.mxu0 0
        %4335 = vmatpush1.bf16.msra.mxu0 0
        %4336 = vmatprep.subr.bf16.mxu0 0
        %4337 = vmatpush1.bf16.msra.mxu0 0
        %4338 = vmatprep.subr.bf16.mxu0 0
        %4339 = vmatpush1.bf16.msra.mxu0 0
        %4340 = vmatprep.subr.bf16.mxu0 0
        %4341 = vmatpush1.bf16.msra.mxu0 0
        %4342 = vmatprep.mubr.bf16.mxu0 0
        %4343 = vmatmul.mubr.bf16.gmra.mrb[0].mxu0 %v4268
        %v4344 = vpop.f32.mrb[0].mxu0
        %v4345 = vadd.f32 %v4033, %v4344
        %v4346 = vpop.f32.mrb[0].mxu0
        %v4347 = vpop.f32.mrb[0].mxu0
        %v4348 = vpop.f32.mrb[0].mxu0
        %4349 = vdwg.mxu0
        %v4350 = vadd.f32 %v3974, %v4304
        %v4351 = vxor.u32 %v4350, 2147483648
        %v4352 = vmul.f32 %v4351, 1.442695
        %v4353 = vpow.pop %v4352
        %v4354 = vadd.f32 %v4353, 1.0
        %v4355 = vrcp.pop %v4354
        %v4356 = vmul.f32 1.0, %v4355
        %v4357 = vadd.f32 %v3976, %v4306
        %v4358 = vxor.u32 %v4357, 2147483648
        %v4359 = vmul.f32 %v4358, 1.442695
        %v4360 = vpow.pop %v4359
        %v4361 = vadd.f32 %v4360, 1.0
        %v4362 = vrcp.pop %v4361
        %v4363 = vmul.f32 1.0, %v4362
        %v4364 = vmul.f32 %v4356, %v4345
        %v4365 = vadd.f32 %v4016, %v4364
        %v4366 = vtanh.pop %v4365
        %v4367 = vsub.f32 1.0, %v4363
        %v4368 = vmul.f32 %v4367, %v4366
        %v4369 = vmul.f32 %v4363, %v4266
        %v4370 = vadd.f32 %v4368, %v4369
        %4371 = vst [vmem:[#allocation4 + $0x8] sm:$0xff] %v4370
        %v4372 = vld [vmem:[#allocation3] sm:$0xff]
        %v4373 = vld [vmem:[#allocation3 + $0x8] sm:$0xff]
        %v4374 = vld [vmem:[#allocation3 + $0x10] sm:$0xff]
        %v4375 = vld [vmem:[#allocation3 + $0x18] sm:$0xff]
        %v4376 = vld [vmem:[#allocation3 + $0x20] sm:$0xff]
        %v4377 = vld [vmem:[#allocation3 + $0x28] sm:$0xff]
        %v4378 = vld [vmem:[#allocation3 + $0x30] sm:$0xff]
        %v4379 = vld [vmem:[#allocation3 + $0x38] sm:$0xff]
        %v4380 = vld [vmem:[%s17] sm:$0xf]
        %v4381 = vld [vmem:[%s17 + $0x4] sm:$0xf]
        %v4382 = vld [vmem:[%s17 + $0x8] sm:$0xf]
        %v4383 = vld [vmem:[%s17 + $0xc] sm:$0xf]
        %v4384 = vld [vmem:[%s17 + $0x10] sm:$0xf]
        %v4385 = vld [vmem:[%s17 + $0x14] sm:$0xf]
        %v4386 = vld [vmem:[%s17 + $0x18] sm:$0xf]
        %v4387 = vld [vmem:[%s17 + $0x1c] sm:$0xf]
        %v4388 = vld [vmem:[%s17 + $0x20] sm:$0xf]
        %v4389 = vld [vmem:[%s17 + $0x24] sm:$0xf]
        %v4390 = vld [vmem:[%s17 + $0x28] sm:$0xf]
        %v4391 = vld [vmem:[%s17 + $0x2c] sm:$0xf]
        %v4392 = vld [vmem:[%s17 + $0x30] sm:$0xf]
        %v4393 = vld [vmem:[%s17 + $0x34] sm:$0xf]
        %v4394 = vld [vmem:[%s17 + $0x38] sm:$0xf]
        %v4395 = vld [vmem:[%s17 + $0x3c] sm:$0xf]
        %v4396 = vpack.c.bf16 %v4373, %v4372
        %v4397 = vpack.c.bf16 %v4375, %v4374
        %v4398 = vpack.c.bf16 %v4377, %v4376
        %v4399 = vpack.c.bf16 %v4379, %v4378
        %v4400 = vld [vmem:[%s18] sm:$0x1]
        %v4402 = vlaneseq
        %v4403 = vshrl.u32 %v4402, 7
        %v4404 = vsub.s32 0, %v4403
        %v4405 = vrot.slane %v4400, %v4404
        %v4423 = vunpack.c.l.b16 %v4380
        %v4424 = vunpack.c.l.b16 %v4381
        %v4425 = vunpack.c.l.b16 %v4382
        %v4426 = vunpack.c.l.b16 %v4383
        %v4427 = vunpack.c.l.b16 %v4384
        %v4428 = vunpack.c.l.b16 %v4385
        %v4429 = vunpack.c.l.b16 %v4386
        %v4430 = vunpack.c.l.b16 %v4387
        %v4431 = vunpack.c.l.b16 %v4388
        %v4432 = vunpack.c.l.b16 %v4389
        %v4433 = vunpack.c.l.b16 %v4390
        %v4434 = vunpack.c.l.b16 %v4391
        %v4435 = vunpack.c.l.b16 %v4392
        %v4436 = vunpack.c.l.b16 %v4393
        %v4437 = vunpack.c.l.b16 %v4394
        %v4438 = vunpack.c.l.b16 %v4395
        %v4439 = vpack.c.b16 %v4424, %v4423
        %v4440 = vpack.c.b16 %v4426, %v4425
        %v4441 = vpack.c.b16 %v4428, %v4427
        %v4442 = vpack.c.b16 %v4430, %v4429
        %v4443 = vpack.c.b16 %v4432, %v4431
        %v4444 = vpack.c.b16 %v4434, %v4433
        %v4445 = vpack.c.b16 %v4436, %v4435
        %v4446 = vpack.c.b16 %v4438, %v4437
        %4455 = vmatprep.subr.bf16.mxu0 0
        %4456 = vmatpush1.bf16.msra.mxu0 %v4439
        %4457 = vmatprep.subr.bf16.mxu0 0
        %4458 = vmatpush1.bf16.msra.mxu0 %v4440
        %4459 = vmatprep.subr.bf16.mxu0 0
        %4460 = vmatpush1.bf16.msra.mxu0 %v4441
        %4461 = vmatprep.subr.bf16.mxu0 0
        %4462 = vmatpush1.bf16.msra.mxu0 %v4442
        %4463 = vmatprep.subr.bf16.mxu0 0
        %4464 = vmatpush1.bf16.msra.mxu0 %v4443
        %4465 = vmatprep.subr.bf16.mxu0 0
        %4466 = vmatpush1.bf16.msra.mxu0 %v4444
        %4467 = vmatprep.subr.bf16.mxu0 0
        %4468 = vmatpush1.bf16.msra.mxu0 %v4445
        %4469 = vmatprep.subr.bf16.mxu0 0
        %4470 = vmatpush1.bf16.msra.mxu0 %v4446
        %4471 = vmatprep.subr.bf16.mxu0 0
        %4472 = vmatpush1.bf16.msra.mxu0 0
        %4473 = vmatprep.subr.bf16.mxu0 0
        %4474 = vmatpush1.bf16.msra.mxu0 0
        %4475 = vmatprep.subr.bf16.mxu0 0
        %4476 = vmatpush1.bf16.msra.mxu0 0
        %4477 = vmatprep.subr.bf16.mxu0 0
        %4478 = vmatpush1.bf16.msra.mxu0 0
        %4479 = vmatprep.subr.bf16.mxu0 0
        %4480 = vmatpush1.bf16.msra.mxu0 0
        %4481 = vmatprep.subr.bf16.mxu0 0
        %4482 = vmatpush1.bf16.msra.mxu0 0
        %4483 = vmatprep.subr.bf16.mxu0 0
        %4484 = vmatpush1.bf16.msra.mxu0 0
        %4485 = vmatprep.subr.bf16.mxu0 0
        %4486 = vmatpush1.bf16.msra.mxu0 0
        %4487 = vmatprep.mubr.bf16.mxu0 0
        %4488 = vmatmul.mubr.bf16.gmra.mrb[0].mxu0 %v4396
        %v4489 = vpop.f32.mrb[0].mxu0
        %v4490 = vadd.f32 %v4405, %v4489
        %v4491 = vpop.f32.mrb[0].mxu0
        %v4492 = vpop.f32.mrb[0].mxu0
        %v4493 = vadd.f32 %v4405, %v4492
        %v4494 = vpop.f32.mrb[0].mxu0
        %4495 = vmatprep.mubr.bf16.mxu0 0
        %4496 = vmatmul.mubr.bf16.gmra.mrb[0].mxu0 %v4397
        %v4497 = vpop.f32.mrb[0].mxu0
        %v4498 = vadd.f32 %v4405, %v4497
        %v4499 = vpop.f32.mrb[0].mxu0
        %v4500 = vpop.f32.mrb[0].mxu0
        %v4501 = vadd.f32 %v4405, %v4500
        %v4502 = vpop.f32.mrb[0].mxu0
        %4503 = vmatprep.mubr.bf16.mxu0 0
        %4504 = vmatmul.mubr.bf16.gmra.mrb[0].mxu0 %v4398
        %v4505 = vpop.f32.mrb[0].mxu0
        %v4506 = vadd.f32 %v4405, %v4505
        %v4507 = vpop.f32.mrb[0].mxu0
        %v4508 = vpop.f32.mrb[0].mxu0
        %v4509 = vadd.f32 %v4405, %v4508
        %v4510 = vpop.f32.mrb[0].mxu0
        %4511 = vmatprep.mubr.bf16.mxu0 0
        %4512 = vmatmul.mubr.bf16.gmra.mrb[0].mxu0 %v4399
        %v4513 = vpop.f32.mrb[0].mxu0
        %v4514 = vadd.f32 %v4405, %v4513
        %v4515 = vpop.f32.mrb[0].mxu0
        %v4516 = vpop.f32.mrb[0].mxu0
        %v4517 = vadd.f32 %v4405, %v4516
        %v4518 = vpop.f32.mrb[0].mxu0
        %4519 = vdwg.mxu0
        %v4520 = vld [vmem:[%s9] sm:$0xff]
        %v4521 = vld [vmem:[%s9 + $0x8] sm:$0xff]
        %v4522 = vld [vmem:[%s9 + $0x10] sm:$0xff]
        %v4523 = vld [vmem:[%s9 + $0x18] sm:$0xff]
        %v4524 = vld [vmem:[%s9 + $0x20] sm:$0xff]
        %v4525 = vld [vmem:[%s9 + $0x28] sm:$0xff]
        %v4526 = vld [vmem:[%s9 + $0x30] sm:$0xff]
        %v4527 = vld [vmem:[%s9 + $0x38] sm:$0xff]
        %4528 = vmax.xlane.f32.xlu0 %v4490
        %v4529 = vpop.xlane.xlu0 %4528
        %4530 = vmax.xlane.f32.xlu0 %v4493
        %v4531 = vpop.xlane.xlu0 %4530
        %4532 = vmax.xlane.f32.xlu0 %v4498
        %v4533 = vpop.xlane.xlu0 %4532
        %4534 = vmax.xlane.f32.xlu0 %v4501
        %v4535 = vpop.xlane.xlu0 %4534
        %4536 = vmax.xlane.f32.xlu0 %v4506
        %v4537 = vpop.xlane.xlu0 %4536
        %4538 = vmax.xlane.f32.xlu0 %v4509
        %v4539 = vpop.xlane.xlu0 %4538
        %4540 = vmax.xlane.f32.xlu0 %v4514
        %v4541 = vpop.xlane.xlu0 %4540
        %4542 = vmax.xlane.f32.xlu0 %v4517
        %v4543 = vpop.xlane.xlu0 %4542
        %v4544 = vsub.f32 %v4490, %v4529
        %v4545 = vsub.f32 %v4493, %v4531
        %v4546 = vsub.f32 %v4498, %v4533
        %v4547 = vsub.f32 %v4501, %v4535
        %v4548 = vsub.f32 %v4506, %v4537
        %v4549 = vsub.f32 %v4509, %v4539
        %v4550 = vsub.f32 %v4514, %v4541
        %v4551 = vsub.f32 %v4517, %v4543
        %v4552 = vmul.f32 %v4544, 1.442695
        %v4553 = vpow.pop %v4552
        %v4554 = vmul.f32 %v4545, 1.442695
        %v4555 = vpow.pop %v4554
        %v4556 = vmul.f32 %v4546, 1.442695
        %v4557 = vpow.pop %v4556
        %v4558 = vmul.f32 %v4547, 1.442695
        %v4559 = vpow.pop %v4558
        %v4560 = vmul.f32 %v4548, 1.442695
        %v4561 = vpow.pop %v4560
        %v4562 = vmul.f32 %v4549, 1.442695
        %v4563 = vpow.pop %v4562
        %v4564 = vmul.f32 %v4550, 1.442695
        %v4565 = vpow.pop %v4564
        %v4566 = vmul.f32 %v4551, 1.442695
        %v4567 = vpow.pop %v4566
        %4568 = vadd.xlane.f32.xlu0 %v4553
        %v4569 = vpop.xlane.xlu0 %4568
        %4570 = vadd.xlane.f32.xlu0 %v4555
        %v4571 = vpop.xlane.xlu0 %4570
        %4572 = vadd.xlane.f32.xlu0 %v4557
        %v4573 = vpop.xlane.xlu0 %4572
        %4574 = vadd.xlane.f32.xlu0 %v4559
        %v4575 = vpop.xlane.xlu0 %4574
        %4576 = vadd.xlane.f32.xlu0 %v4561
        %v4577 = vpop.xlane.xlu0 %4576
        %4578 = vadd.xlane.f32.xlu0 %v4563
        %v4579 = vpop.xlane.xlu0 %4578
        %4580 = vadd.xlane.f32.xlu0 %v4565
        %v4581 = vpop.xlane.xlu0 %4580
        %4582 = vadd.xlane.f32.xlu0 %v4567
        %v4583 = vpop.xlane.xlu0 %4582
        %v4584 = vsub.f32 0.0, %v4529
        %v4585 = vsub.f32 0.0, %v4531
        %v4586 = vsub.f32 0.0, %v4533
        %v4587 = vsub.f32 0.0, %v4535
        %v4588 = vsub.f32 0.0, %v4537
        %v4589 = vsub.f32 0.0, %v4539
        %v4590 = vsub.f32 0.0, %v4541
        %v4591 = vsub.f32 0.0, %v4543
        %v4592 = vmul.f32 %v4584, 1.442695
        %v4593 = vpow.pop %v4592
        %v4594 = vmul.f32 %v4585, 1.442695
        %v4595 = vpow.pop %v4594
        %v4596 = vmul.f32 %v4586, 1.442695
        %v4597 = vpow.pop %v4596
        %v4598 = vmul.f32 %v4587, 1.442695
        %v4599 = vpow.pop %v4598
        %v4600 = vmul.f32 %v4588, 1.442695
        %v4601 = vpow.pop %v4600
        %v4602 = vmul.f32 %v4589, 1.442695
        %v4603 = vpow.pop %v4602
        %v4604 = vmul.f32 %v4590, 1.442695
        %v4605 = vpow.pop %v4604
        %v4606 = vmul.f32 %v4591, 1.442695
        %v4607 = vpow.pop %v4606
        %v4608 = vmul.f32 %v4593, 1e-06
        %v4609 = vmul.f32 %v4595, 1e-06
        %v4610 = vmul.f32 %v4597, 1e-06
        %v4611 = vmul.f32 %v4599, 1e-06
        %v4612 = vmul.f32 %v4601, 1e-06
        %v4613 = vmul.f32 %v4603, 1e-06
        %v4614 = vmul.f32 %v4605, 1e-06
        %v4615 = vmul.f32 %v4607, 1e-06
        %v4616 = vadd.f32 %v4569, %v4608
        %v4617 = vadd.f32 %v4571, %v4609
        %v4618 = vadd.f32 %v4573, %v4610
        %v4619 = vadd.f32 %v4575, %v4611
        %v4620 = vadd.f32 %v4577, %v4612
        %v4621 = vadd.f32 %v4579, %v4613
        %v4622 = vadd.f32 %v4581, %v4614
        %v4623 = vadd.f32 %v4583, %v4615
        %v4624 = vlog2.pop %v4616
        %v4625 = vmul.f32 %v4624, 0.6931472
        %v4626 = vlog2.pop %v4617
        %v4627 = vmul.f32 %v4626, 0.6931472
        %v4628 = vlog2.pop %v4618
        %v4629 = vmul.f32 %v4628, 0.6931472
        %v4630 = vlog2.pop %v4619
        %v4631 = vmul.f32 %v4630, 0.6931472
        %v4632 = vlog2.pop %v4620
        %v4633 = vmul.f32 %v4632, 0.6931472
        %v4634 = vlog2.pop %v4621
        %v4635 = vmul.f32 %v4634, 0.6931472
        %v4636 = vlog2.pop %v4622
        %v4637 = vmul.f32 %v4636, 0.6931472
        %v4638 = vlog2.pop %v4623
        %v4639 = vmul.f32 %v4638, 0.6931472
        %v4640 = vadd.f32 %v4529, %v4625
        %v4641 = vadd.f32 %v4531, %v4627
        %v4642 = vadd.f32 %v4533, %v4629
        %v4643 = vadd.f32 %v4535, %v4631
        %v4644 = vadd.f32 %v4537, %v4633
        %v4645 = vadd.f32 %v4539, %v4635
        %v4646 = vadd.f32 %v4541, %v4637
        %v4647 = vadd.f32 %v4543, %v4639
        %4648 = vset.pattern.permute.xlu0 0
        %4649 = vperm.xlu0 %4648, %v4520
        %v4650 = vpop.permute.xlu0 %4649
        %4651 = vset.pattern.permute.xlu0 0
        %4652 = vperm.xlu0 %4651, %v4521
        %v4653 = vpop.permute.xlu0 %4652
        %4654 = vset.pattern.permute.xlu0 0
        %4655 = vperm.xlu0 %4654, %v4522
        %v4656 = vpop.permute.xlu0 %4655
        %4657 = vset.pattern.permute.xlu0 0
        %4658 = vperm.xlu0 %4657, %v4523
        %v4659 = vpop.permute.xlu0 %4658
        %4660 = vset.pattern.permute.xlu0 0
        %4661 = vperm.xlu0 %4660, %v4524
        %v4662 = vpop.permute.xlu0 %4661
        %4663 = vset.pattern.permute.xlu0 0
        %4664 = vperm.xlu0 %4663, %v4525
        %v4665 = vpop.permute.xlu0 %4664
        %4666 = vset.pattern.permute.xlu0 0
        %4667 = vperm.xlu0 %4666, %v4526
        %v4668 = vpop.permute.xlu0 %4667
        %4669 = vset.pattern.permute.xlu0 0
        %4670 = vperm.xlu0 %4669, %v4527
        %v4671 = vpop.permute.xlu0 %4670
        %vm4672 = vcmp.eq.s32.totalorder %v583, %v4650
        %vm4673 = vcmp.eq.s32.totalorder %v583, %v4653
        %vm4674 = vcmp.eq.s32.totalorder %v583, %v4656
        %vm4675 = vcmp.eq.s32.totalorder %v583, %v4659
        %vm4676 = vcmp.eq.s32.totalorder %v583, %v4662
        %vm4677 = vcmp.eq.s32.totalorder %v583, %v4665
        %vm4678 = vcmp.eq.s32.totalorder %v583, %v4668
        %vm4679 = vcmp.eq.s32.totalorder %v583, %v4671
        %v4680 = vsel %vm4672, %v4490, 0.0
        %v4681 = vsel %vm4673, %v4493, 0.0
        %v4682 = vsel %vm4674, %v4498, 0.0
        %v4683 = vsel %vm4675, %v4501, 0.0
        %v4684 = vsel %vm4676, %v4506, 0.0
        %v4685 = vsel %vm4677, %v4509, 0.0
        %v4686 = vsel %vm4678, %v4514, 0.0
        %v4687 = vsel %vm4679, %v4517, 0.0
        %4688 = vadd.xlane.f32.xlu0 %v4680
        %v4689 = vpop.xlane.xlu0 %4688
        %4690 = vadd.xlane.f32.xlu0 %v4681
        %v4691 = vpop.xlane.xlu0 %4690
        %4692 = vadd.xlane.f32.xlu0 %v4682
        %v4693 = vpop.xlane.xlu0 %4692
        %4694 = vadd.xlane.f32.xlu0 %v4683
        %v4695 = vpop.xlane.xlu0 %4694
        %4696 = vadd.xlane.f32.xlu0 %v4684
        %v4697 = vpop.xlane.xlu0 %4696
        %4698 = vadd.xlane.f32.xlu0 %v4685
        %v4699 = vpop.xlane.xlu0 %4698
        %4700 = vadd.xlane.f32.xlu0 %v4686
        %v4701 = vpop.xlane.xlu0 %4700
        %4702 = vadd.xlane.f32.xlu0 %v4687
        %v4703 = vpop.xlane.xlu0 %4702
        %v4704 = vsub.f32 %v4640, %v4689
        %v4705 = vsub.f32 %v4641, %v4691
        %v4706 = vsub.f32 %v4642, %v4693
        %v4707 = vsub.f32 %v4643, %v4695
        %v4708 = vsub.f32 %v4644, %v4697
        %v4709 = vsub.f32 %v4645, %v4699
        %v4710 = vsub.f32 %v4646, %v4701
        %v4711 = vsub.f32 %v4647, %v4703
        %vm4712 = vcmp.eq.s32.totalorder %v4520, 15
        %vm4713 = vcmp.eq.s32.totalorder %v4521, 15
        %vm4714 = vcmp.eq.s32.totalorder %v4522, 15
        %vm4715 = vcmp.eq.s32.totalorder %v4523, 15
        %vm4716 = vcmp.eq.s32.totalorder %v4524, 15
        %vm4717 = vcmp.eq.s32.totalorder %v4525, 15
        %vm4718 = vcmp.eq.s32.totalorder %v4526, 15
        %vm4719 = vcmp.eq.s32.totalorder %v4527, 15
        %v4720 = vsel %vm4712, 0.0, %v4704
        %v4721 = vsel %vm4713, 0.0, %v4705
        %v4722 = vsel %vm4714, 0.0, %v4706
        %v4723 = vsel %vm4715, 0.0, %v4707
        %v4724 = vsel %vm4716, 0.0, %v4708
        %v4725 = vsel %vm4717, 0.0, %v4709
        %v4726 = vsel %vm4718, 0.0, %v4710
        %v4727 = vsel %vm4719, 0.0, %v4711
        %v4728 = vadd.f32 %v4720, %v4721
        %v4729 = vadd.f32 %v4728, %v4722
        %v4730 = vadd.f32 %v4729, %v4723
        %v4731 = vadd.f32 %v4730, %v4724
        %v4732 = vadd.f32 %v4731, %v4725
        %v4733 = vadd.f32 %v4732, %v4726
        %v4734 = vadd.f32 %v4733, %v4727
        %v4735 = vld [vmem:[#allocation4] sm:$0xff]
        %v4736 = vld [vmem:[#allocation4 + $0x8] sm:$0xff]
        %s4737 = scalar_lea.vmem %s17, 64
        %v4738 = vld [vmem:[%s4737] sm:$0xf]
        %v4739 = vld [vmem:[%s4737 + $0x4] sm:$0xf]
        %v4740 = vld [vmem:[%s4737 + $0x8] sm:$0xf]
        %v4741 = vld [vmem:[%s4737 + $0xc] sm:$0xf]
        %v4742 = vld [vmem:[%s4737 + $0x10] sm:$0xf]
        %v4743 = vld [vmem:[%s4737 + $0x14] sm:$0xf]
        %v4744 = vld [vmem:[%s4737 + $0x18] sm:$0xf]
        %v4745 = vld [vmem:[%s4737 + $0x1c] sm:$0xf]
        %v4746 = vld [vmem:[%s4737 + $0x20] sm:$0xf]
        %v4747 = vld [vmem:[%s4737 + $0x24] sm:$0xf]
        %v4748 = vld [vmem:[%s4737 + $0x28] sm:$0xf]
        %v4749 = vld [vmem:[%s4737 + $0x2c] sm:$0xf]
        %v4750 = vld [vmem:[%s4737 + $0x30] sm:$0xf]
        %v4751 = vld [vmem:[%s4737 + $0x34] sm:$0xf]
        %v4752 = vld [vmem:[%s4737 + $0x38] sm:$0xf]
        %v4753 = vld [vmem:[%s4737 + $0x3c] sm:$0xf]
        %v4754 = vpack.c.bf16 %v4736, %v4735
        %s4755 = scalar_lea.vmem %s18, 1
        %v4756 = vld [vmem:[%s4755] sm:$0x1]
        %v4758 = vlaneseq
        %v4759 = vshrl.u32 %v4758, 7
        %v4760 = vsub.s32 0, %v4759
        %v4761 = vrot.slane %v4756, %v4760
        %v4779 = vunpack.c.l.b16 %v4738
        %v4780 = vunpack.c.l.b16 %v4739
        %v4781 = vunpack.c.l.b16 %v4740
        %v4782 = vunpack.c.l.b16 %v4741
        %v4783 = vunpack.c.l.b16 %v4742
        %v4784 = vunpack.c.l.b16 %v4743
        %v4785 = vunpack.c.l.b16 %v4744
        %v4786 = vunpack.c.l.b16 %v4745
        %v4787 = vunpack.c.l.b16 %v4746
        %v4788 = vunpack.c.l.b16 %v4747
        %v4789 = vunpack.c.l.b16 %v4748
        %v4790 = vunpack.c.l.b16 %v4749
        %v4791 = vunpack.c.l.b16 %v4750
        %v4792 = vunpack.c.l.b16 %v4751
        %v4793 = vunpack.c.l.b16 %v4752
        %v4794 = vunpack.c.l.b16 %v4753
        %v4795 = vpack.c.b16 %v4780, %v4779
        %v4796 = vpack.c.b16 %v4782, %v4781
        %v4797 = vpack.c.b16 %v4784, %v4783
        %v4798 = vpack.c.b16 %v4786, %v4785
        %v4799 = vpack.c.b16 %v4788, %v4787
        %v4800 = vpack.c.b16 %v4790, %v4789
        %v4801 = vpack.c.b16 %v4792, %v4791
        %v4802 = vpack.c.b16 %v4794, %v4793
        %4811 = vmatprep.subr.bf16.mxu0 0
        %4812 = vmatpush1.bf16.msra.mxu0 %v4795
        %4813 = vmatprep.subr.bf16.mxu0 0
        %4814 = vmatpush1.bf16.msra.mxu0 %v4796
        %4815 = vmatprep.subr.bf16.mxu0 0
        %4816 = vmatpush1.bf16.msra.mxu0 %v4797
        %4817 = vmatprep.subr.bf16.mxu0 0
        %4818 = vmatpush1.bf16.msra.mxu0 %v4798
        %4819 = vmatprep.subr.bf16.mxu0 0
        %4820 = vmatpush1.bf16.msra.mxu0 %v4799
        %4821 = vmatprep.subr.bf16.mxu0 0
        %4822 = vmatpush1.bf16.msra.mxu0 %v4800
        %4823 = vmatprep.subr.bf16.mxu0 0
        %4824 = vmatpush1.bf16.msra.mxu0 %v4801
        %4825 = vmatprep.subr.bf16.mxu0 0
        %4826 = vmatpush1.bf16.msra.mxu0 %v4802
        %4827 = vmatprep.subr.bf16.mxu0 0
        %4828 = vmatpush1.bf16.msra.mxu0 0
        %4829 = vmatprep.subr.bf16.mxu0 0
        %4830 = vmatpush1.bf16.msra.mxu0 0
        %4831 = vmatprep.subr.bf16.mxu0 0
        %4832 = vmatpush1.bf16.msra.mxu0 0
        %4833 = vmatprep.subr.bf16.mxu0 0
        %4834 = vmatpush1.bf16.msra.mxu0 0
        %4835 = vmatprep.subr.bf16.mxu0 0
        %4836 = vmatpush1.bf16.msra.mxu0 0
        %4837 = vmatprep.subr.bf16.mxu0 0
        %4838 = vmatpush1.bf16.msra.mxu0 0
        %4839 = vmatprep.subr.bf16.mxu0 0
        %4840 = vmatpush1.bf16.msra.mxu0 0
        %4841 = vmatprep.subr.bf16.mxu0 0
        %4842 = vmatpush1.bf16.msra.mxu0 0
        %4843 = vmatprep.mubr.bf16.mxu0 0
        %4844 = vmatmul.mubr.bf16.gmra.mrb[0].mxu0 %v4754
        %v4845 = vpop.f32.mrb[0].mxu0
        %v4846 = vadd.f32 %v4761, %v4845
        %v4847 = vpop.f32.mrb[0].mxu0
        %v4848 = vpop.f32.mrb[0].mxu0
        %v4849 = vadd.f32 %v4761, %v4848
        %v4850 = vpop.f32.mrb[0].mxu0
        %4851 = vdwg.mxu0
        %v4852 = vld [vmem:[%s10] sm:$0xff]
        %v4853 = vld [vmem:[%s10 + $0x8] sm:$0xff]
        %4854 = vmax.xlane.f32.xlu0 %v4846
        %v4855 = vpop.xlane.xlu0 %4854
        %4856 = vmax.xlane.f32.xlu0 %v4849
        %v4857 = vpop.xlane.xlu0 %4856
        %v4858 = vsub.f32 %v4846, %v4855
        %v4859 = vsub.f32 %v4849, %v4857
        %v4860 = vmul.f32 %v4858, 1.442695
        %v4861 = vpow.pop %v4860
        %v4862 = vmul.f32 %v4859, 1.442695
        %v4863 = vpow.pop %v4862
        %4864 = vadd.xlane.f32.xlu0 %v4861
        %v4865 = vpop.xlane.xlu0 %4864
        %4866 = vadd.xlane.f32.xlu0 %v4863
        %v4867 = vpop.xlane.xlu0 %4866
        %v4868 = vsub.f32 0.0, %v4855
        %v4869 = vsub.f32 0.0, %v4857
        %v4870 = vmul.f32 %v4868, 1.442695
        %v4871 = vpow.pop %v4870
        %v4872 = vmul.f32 %v4869, 1.442695
        %v4873 = vpow.pop %v4872
        %v4874 = vmul.f32 %v4871, 1e-06
        %v4875 = vmul.f32 %v4873, 1e-06
        %v4876 = vadd.f32 %v4865, %v4874
        %v4877 = vadd.f32 %v4867, %v4875
        %v4878 = vlog2.pop %v4876
        %v4879 = vmul.f32 %v4878, 0.6931472
        %v4880 = vlog2.pop %v4877
        %v4881 = vmul.f32 %v4880, 0.6931472
        %v4882 = vadd.f32 %v4855, %v4879
        %v4883 = vadd.f32 %v4857, %v4881
        %4884 = vset.pattern.permute.xlu0 0
        %4885 = vperm.xlu0 %4884, %v4852
        %v4886 = vpop.permute.xlu0 %4885
        %4887 = vset.pattern.permute.xlu0 0
        %4888 = vperm.xlu0 %4887, %v4853
        %v4889 = vpop.permute.xlu0 %4888
        %vm4890 = vcmp.eq.s32.totalorder %v583, %v4886
        %vm4891 = vcmp.eq.s32.totalorder %v583, %v4889
        %v4892 = vsel %vm4890, %v4846, 0.0
        %v4893 = vsel %vm4891, %v4849, 0.0
        %4894 = vadd.xlane.f32.xlu0 %v4892
        %v4895 = vpop.xlane.xlu0 %4894
        %4896 = vadd.xlane.f32.xlu0 %v4893
        %v4897 = vpop.xlane.xlu0 %4896
        %v4898 = vsub.f32 %v4882, %v4895
        %v4899 = vsub.f32 %v4883, %v4897
        %vm4900 = vcmp.eq.s32.totalorder %v4852, 15
        %vm4901 = vcmp.eq.s32.totalorder %v4853, 15
        %v4902 = vsel %vm4900, 0.0, %v4898
        %v4903 = vsel %vm4901, 0.0, %v4899
        %v4904 = vmul.f32 %v4902, 0.1
        %v4905 = vmul.f32 %v4903, 0.1
        %v4906 = vadd.f32 %v4904, %v4905
        %v4907 = vlaneseq
        %v4908 = vshrl.u32 %v4907, 7
        %vm4909 = vcmp.lt.s32.totalorder %v4908, 2
        %v4910 = vsel %vm4909, %v4906, 0.0
        %vm4911 = vcmask 7168
        %v4912 = vsel %vm4911, %v4910, 0.0
        %v4913 = vrot.slane %v4912, 4
        %v4914 = vadd.f32 %v4912, %v4913
        %v4915 = vrot.slane %v4914, 2
        %v4916 = vadd.f32 %v4914, %v4915
        %v4917 = vrot.slane %v4916, 1
        %v4918 = vadd.f32 %v4916, %v4917
        %v4919 = vmul.f32 %v4918, 0.25
        %vm4920 = vcmp.eq.s32.totalorder %v583, 0
        %4922 = vset.pattern.permute.xlu0 0
        %4923 = vperm.xlu0 %4922, %v4734
        %v4924 = vpop.permute.xlu0 %4923
        %v4926 = vsel %vm4920, %v4924, 0.0
        %vm4927 = vcmp.eq.s32.totalorder %v583, 1
        %v4928 = vsel %vm4927, %v2268, 0.0
        %v4929 = vadd.f32 %v4926, %v4928
        %vm4930 = vcmp.eq.s32.totalorder %v583, 2
        %4932 = vset.pattern.permute.xlu0 0
        %4933 = vperm.xlu0 %4932, %v4919
        %v4934 = vpop.permute.xlu0 %4933
        %v4936 = vsel %vm4930, %v4934, 0.0
        %v4937 = vadd.f32 %v4929, %v4936
        %4938 = vst [vmem:[%s580] sm:$0xff] %v4937
      $region104: #{model_forward.1} parent=95 // pred_fallthru
        _
      %p4939 = scmp.lt.s32.totalorder %s30, 1
      %s4940 = scalar_select %p4939, %s30, 1
      %s4941 = smul.addr %s4940, 8
      %s4942 = scalar_lea.vmem %s19, %s4941
      // Predicated region
      $region105: #{model_forward.1} parent=95 // pred_check
        %p4943 = pneg %p447
      $region106: #{model_forward.1} parent=95 // pred_check_branch
        %4945 = sbr.rel (%p4943) target = $region108
      $region107: #{model_forward.1} parent=95 // pred_region
        _
      $region108: #{model_forward.1} parent=95 // pred_fallthru
        _
    $region96: #{model_forward.1} parent=5 // pred_fallthru
      _
    %p4946 = scmp.le.s32.totalorder 2, %s25
    // Predicated region
    $region109: #{model_forward.1} parent=5 // pred_check
      %p4947 = pneg %p4946
    $region110: #{model_forward.1} parent=5 // pred_check_branch
      %4949 = sbr.rel (%p4947) target = $region112
    $region111: #{model_forward.1} parent=5 // pred_region
      %s4950 = ssub.s32 %s25, 2
      // Predicated region
      $region113: #{model_forward.1} parent=111 // pred_check
        %p4951 = pneg %p453
      $region114: #{model_forward.1} parent=111 // pred_check_branch
        %4953 = sbr.rel (%p4951) target = $region116
      $region115: #{model_forward.1} parent=111 // pred_region
        %p4954 = scmp.lt.s32.totalorder %s31, 1
        %s4955 = scalar_select %p4954, %s31, 1
        %s4956 = smul.addr %s4955, 8
        %s4957 = scalar_lea.vmem %s19, %s4956
      $region116: #{model_forward.1} parent=111 // pred_fallthru
        _
    $region112: #{model_forward.1} parent=5 // pred_fallthru
      _
  $region6: #{model_forward.1} parent=0 // loop_footer
    %s29 = sadd.s32 1, %s25
  $region7: #{model_forward.1} parent=0 // loop_footer_branch
    %24 = sbr.rel target = $region3
  $region8: #{model_forward.1} parent=0 // loop_exit
    _

</llo_original>
